<compile_context>
chip_gen: v7x
topology: tpu7x:2x2x1
jax: 0.10.0
libtpu: 0.0.40
codegen_flags: <defaults>
</compile_context>

<pallas_src>
import functools

import jax
import jax.numpy as jnp
from jax.experimental import pallas as pl
from jax.experimental.pallas import tpu as pltpu

# ----------------------------- model dims (small, synthetic) -----------------
BATCH = 2
SEQ = 16
HIDDEN = 128            # embed_dim
INTERMEDIATE = 256
NUM_HEADS = 4
HEAD_DIM = HIDDEN // NUM_HEADS
LN_EPS = 1e-6


def _layer_norm(h, w, b):
    # Biased variance (torch LayerNorm).  E[x^2] - mu^2 form: the two cross-lane
    # reductions are independent, so the XLU can issue them back-to-back.
    mu = jnp.mean(h, axis=-1, keepdims=True)
    ms = jnp.mean(h * h, axis=-1, keepdims=True)
    var = ms - mu * mu
    return (h - mu) * jax.lax.rsqrt(var + LN_EPS) * w + b


def encoder_layer_kernel(x_ref,
                         ln1_w_ref, ln1_b_ref,
                         wqkv_ref, bqkv_ref,
                         wo_ref, bo_ref,
                         ln2_w_ref, ln2_b_ref,
                         w1_ref, b1_ref, w2_ref, b2_ref,
                         o_ref, *, num_heads):
    bb, s, d = x_ref.shape
    dh = d // num_heads
    rows = bb * s

    x = x_ref[...].astype(jnp.float32)                        # (bb, S, D) residual stream, f32

    # ---------------- LayerNorm 1 ----------------
    h = _layer_norm(x, ln1_w_ref[...], ln1_b_ref[...])

    # ---------------- Fused QKV projection (single wide MXU matmul) -----------
    # The head_dim**-0.5 scale is pre-folded into the Q columns of wqkv/bqkv.
    h2d = h.reshape(rows, d).astype(jnp.bfloat16)
    qkv = jnp.dot(h2d, wqkv_ref[...],
                  preferred_element_type=jnp.float32) + bqkv_ref[...]   # (rows, 3D) f32

    # ---------------- Multi-head self attention ----------------
    # Per-head QK^T on the MXU (single-batch-dim einsums, no .T), then ONE
    # softmax over all heads: scores are concatenated along the leading
    # (major) axis so max/exp/sum/reciprocal are each issued once.
    # TODO(synk): at production S, pad S to a multiple of 128 / tile the KV axis
    # flash-style so the scores' lane dim is dense (S=16 here -> masked lanes).
    scores = []
    for hd in range(num_heads):                               # static unroll, H is small
        lo = hd * dh
        q_h = qkv[:, lo:lo + dh].reshape(bb, s, dh).astype(jnp.bfloat16)
        k_h = qkv[:, d + lo:d + lo + dh].reshape(bb, s, dh).astype(jnp.bfloat16)
        scores.append(jnp.einsum('bqd,bkd->bqk', q_h, k_h,
                                 preferred_element_type=jnp.float32))   # (bb, S, S) f32
    s_all = jnp.concatenate(scores, axis=0)                   # (H*bb, S, S), leading-axis concat
    s_all = s_all - jnp.max(s_all, axis=-1, keepdims=True)
    p_all = jnp.exp(s_all)
    # EUP reciprocal: probabilities sum to 1 only approximately (~1e-3 rel).
    p_all = p_all * pl.reciprocal(jnp.sum(p_all, axis=-1, keepdims=True), approx=True)
    p_all = p_all.astype(jnp.bfloat16)

    # Context + out-projection accumulated per head: keeps the attention output
    # lane-dense (full D) without a lane re-interleave of the per-head contexts.
    wo = wo_ref[...]                                          # (D, D) bf16, loaded once
    attn_acc = None
    for hd in range(num_heads):
        lo = hd * dh
        v_h = qkv[:, 2 * d + lo:2 * d + lo + dh].reshape(bb, s, dh).astype(jnp.bfloat16)
        p_h = p_all[hd * bb:(hd + 1) * bb]                    # (bb, S, S), leading-axis slice
        ctx = jnp.einsum('bqk,bkd->bqd', p_h, v_h,
                         preferred_element_type=jnp.float32)              # (bb, S, Dh)
        part = jnp.dot(ctx.reshape(rows, dh).astype(jnp.bfloat16),
                       wo[lo:lo + dh, :],
                       preferred_element_type=jnp.float32)                # (rows, D)
        attn_acc = part if attn_acc is None else attn_acc + part

    attn = attn_acc + bo_ref[...]
    x = x + attn.reshape(bb, s, d)                            # residual 1

    # ---------------- LayerNorm 2 + MLP (gelu-tanh) ----------------
    h = _layer_norm(x, ln2_w_ref[...], ln2_b_ref[...])
    h2d = h.reshape(rows, d).astype(jnp.bfloat16)
    ff = jnp.dot(h2d, w1_ref[...], preferred_element_type=jnp.float32) + b1_ref[...]
    ff = jax.nn.gelu(ff, approximate=True)                    # gelu(approximate='tanh'), f32
    ff = jnp.dot(ff.astype(jnp.bfloat16), w2_ref[...],
                 preferred_element_type=jnp.float32) + b2_ref[...]

    o_ref[...] = (x + ff.reshape(bb, s, d)).astype(o_ref.dtype)   # residual 2


def prepare_params(params, num_heads=NUM_HEADS):
    """One-time weight repacking, hoisted out of the per-call path.

    At real SigLIP dims the per-call concat + f32->bf16 casts cost more HBM
    traffic than the kernel itself; do it once here (or under a jitted caller
    so XLA constant-folds it).  Also folds the attention scale into Q.
    """
    D = params["wq"].shape[0]
    scale = (D // num_heads) ** (-0.5)
    wqkv = jnp.concatenate([params["wq"] * scale, params["wk"], params["wv"]],
                           axis=1).astype(jnp.bfloat16)                 # (D, 3D)
    bqkv = jnp.concatenate([params["bq"] * scale, params["bk"], params["bv"]],
                           axis=1).astype(jnp.float32)                  # (1, 3D)
    return {
        "ln1_w": params["ln1_w"], "ln1_b": params["ln1_b"],
        "wqkv": wqkv, "bqkv": bqkv,
        "wo": params["wo"].astype(jnp.bfloat16), "bo": params["bo"],
        "ln2_w": params["ln2_w"], "ln2_b": params["ln2_b"],
        "w1": params["w1"].astype(jnp.bfloat16), "b1": params["b1"],
        "w2": params["w2"].astype(jnp.bfloat16), "b2": params["b2"],
    }


def siglip_encoder_layer(x, packed, num_heads=NUM_HEADS):
    B, S, D = x.shape
    F = packed["w1"].shape[1]

    # Row tiling over batch chunks (generation agnostic): each grid step handles
    # bb*S rows of the flattened (B*S, D) slab.  bb is chosen so a step has
    # >= TARGET_ROWS rows when possible (fills the 256-wide MXU M dim and lets
    # multi-TC chips shard steps via "parallel"); at toy dims it collapses to
    # grid=(1,) -> the whole slab feeds the MXU in one step, no per-step
    # pipeline overhead.
    TARGET_ROWS = 256
    bb = min(B, max(1, TARGET_ROWS // S))
    while B % bb:
        bb -= 1
    grid = (B // bb,)
    sem = ("parallel",) if grid[0] > 1 else ("arbitrary",)

    args = (x,
            packed["ln1_w"], packed["ln1_b"],
            packed["wqkv"], packed["bqkv"],
            packed["wo"], packed["bo"],
            packed["ln2_w"], packed["ln2_b"],
            packed["w1"], packed["b1"],
            packed["w2"], packed["b2"])

    def build(single_buffer_weights):
        def const_spec(shape):
            index_map = lambda i, _n=len(shape): (0,) * _n
            if single_buffer_weights:
                # Constant-index blocks don't need the pipeliner's default
                # double buffer -> halves resident weight VMEM at real dims.
                return pl.BlockSpec(shape, index_map, pipeline_mode=pl.Buffered(1))
            return pl.BlockSpec(shape, index_map)

        in_specs = [
            pl.BlockSpec((bb, S, D), lambda i: (i, 0, 0)),    # x (row-tiled)
            const_spec((1, D)), const_spec((1, D)),           # ln1 w, b
            const_spec((D, 3 * D)), const_spec((1, 3 * D)),   # fused qkv W, b
            const_spec((D, D)), const_spec((1, D)),           # out_proj W, b
            const_spec((1, D)), const_spec((1, D)),           # ln2 w, b
            const_spec((D, F)), const_spec((1, F)),           # fc1 W, b
            const_spec((F, D)), const_spec((1, D)),           # fc2 W, b
        ]
        out_spec = pl.BlockSpec((bb, S, D), lambda i: (i, 0, 0))

        return pl.pallas_call(
            functools.partial(encoder_layer_kernel, num_heads=num_heads),
            out_shape=jax.ShapeDtypeStruct((B, S, D), x.dtype),
            grid_spec=pltpu.PrefetchScalarGridSpec(
                num_scalar_prefetch=0,
                grid=grid,
                in_specs=in_specs,
                out_specs=out_spec,
            ),
            compiler_params=pltpu.CompilerParams(
                dimension_semantics=sem,
                vmem_limit_bytes=32 * 1024 * 1024,   # safe on v5e/v6e/v7x; tiny usage here
            ),
        )

    try:
        return build(single_buffer_weights=True)(*args)
    except Exception:
        # pl.Buffered(1) not supported by this jax version: fall back to the
        # default double-buffered constant blocks (identical results, a bit
        # more VMEM).
        return build(single_buffer_weights=False)(*args)


# ----------------------------- pure-JAX f32 reference --------------------------
def reference_forward(x, p):
    def ln(h, w, b):
        mu = jnp.mean(h, axis=-1, keepdims=True)
        var = jnp.mean((h - mu) ** 2, axis=-1, keepdims=True)
        return (h - mu) / jnp.sqrt(var + LN_EPS) * w + b

    B, S, D = x.shape
    scale = HEAD_DIM ** (-0.5)
    res = x
    h = ln(x, p["ln1_w"], p["ln1_b"])
    q = h @ p["wq"] + p["bq"]
    k = h @ p["wk"] + p["bk"]
    v = h @ p["wv"] + p["bv"]
    q = q.reshape(B, S, NUM_HEADS, HEAD_DIM).transpose(0, 2, 1, 3)
    k = k.reshape(B, S, NUM_HEADS, HEAD_DIM).transpose(0, 2, 1, 3)
    v = v.reshape(B, S, NUM_HEADS, HEAD_DIM).transpose(0, 2, 1, 3)
    s = jnp.einsum("bhqd,bhkd->bhqk", q, k) * scale
    w = jax.nn.softmax(s.astype(jnp.float32), axis=-1).astype(q.dtype)
    o = jnp.einsum("bhqk,bhkd->bhqd", w, v)
    o = o.transpose(0, 2, 1, 3).reshape(B, S, D)
    o = o @ p["wo"] + p["bo"]
    h = res + o
    res = h
    h2 = ln(h, p["ln2_w"], p["ln2_b"])
    h2 = h2 @ p["w1"] + p["b1"]
    h2 = jax.nn.gelu(h2, approximate=True)
    h2 = h2 @ p["w2"] + p["b2"]
    return res + h2


def make_params(key):
    ks = jax.random.split(key, 8)
    init = lambda k, shape: (jax.random.normal(k, shape, jnp.float32) * 0.02)
    D, F = HIDDEN, INTERMEDIATE
    return {
        "ln1_w": jnp.ones((1, D), jnp.float32),
        "ln1_b": jnp.zeros((1, D), jnp.float32),
        "wq": init(ks[0], (D, D)), "bq": jnp.zeros((1, D), jnp.float32),
        "wk": init(ks[1], (D, D)), "bk": jnp.zeros((1, D), jnp.float32),
        "wv": init(ks[2], (D, D)), "bv": jnp.zeros((1, D), jnp.float32),
        "wo": init(ks[3], (D, D)), "bo": jnp.zeros((1, D), jnp.float32),
        "ln2_w": jnp.ones((1, D), jnp.float32),
        "ln2_b": jnp.zeros((1, D), jnp.float32),
        "w1": init(ks[4], (D, F)), "b1": init(ks[5], (1, F)),
        "w2": init(ks[6], (F, D)), "b2": init(ks[7], (1, D)),
    }


if __name__ == "__main__":
    key = jax.random.PRNGKey(0)
    kx, kp = jax.random.split(key)
    x = jax.random.normal(kx, (BATCH, SEQ, HIDDEN), jnp.float32)
    params = make_params(kp)

    packed = prepare_params(params)            # one-time weight prep, not per call
    out = siglip_encoder_layer(x, packed)
    out = jax.block_until_ready(out)

    ref = reference_forward(x, params)
    assert out.shape == (BATCH, SEQ, HIDDEN)
    # bf16 matmul operands + approx reciprocal in the softmax -> compare vs the
    # f32 reference with a mixed-precision-sized tolerance.
    err = jnp.max(jnp.abs(out - ref))
    assert jnp.allclose(out, ref, rtol=2e-2, atol=2e-2), f"mismatch vs JAX reference (max abs err {err})"

    print("KERNEL_OK")
</pallas_src>

<mosaic_0001>
module attributes {stable_mosaic.version = 11 : i64} {
  func.func @encoder_layer_kernel(%arg0: i32, %arg1: memref<2x16x128xf32, #tpu.memory_space<vmem>>, %arg2: memref<1x128xf32, #tpu.memory_space<vmem>>, %arg3: memref<1x128xf32, #tpu.memory_space<vmem>>, %arg4: memref<128x384xbf16, #tpu.memory_space<vmem>>, %arg5: memref<1x384xf32, #tpu.memory_space<vmem>>, %arg6: memref<128x128xbf16, #tpu.memory_space<vmem>>, %arg7: memref<1x128xf32, #tpu.memory_space<vmem>>, %arg8: memref<1x128xf32, #tpu.memory_space<vmem>>, %arg9: memref<1x128xf32, #tpu.memory_space<vmem>>, %arg10: memref<128x256xbf16, #tpu.memory_space<vmem>>, %arg11: memref<1x256xf32, #tpu.memory_space<vmem>>, %arg12: memref<256x128xbf16, #tpu.memory_space<vmem>>, %arg13: memref<1x128xf32, #tpu.memory_space<vmem>>, %arg14: memref<2x16x128xf32, #tpu.memory_space<vmem>>) attributes {dimension_semantics = [#tpu.dimension_semantics<arbitrary>], iteration_bounds = array<i64: 1>, scalar_prefetch = 0 : i64, scratch_operands = 0 : i64, tpu.core_type = #tpu.core_type<tc>, window_params = [{transform_indices = @transform_0, window_bounds = array<i64: 2, 16, 128>}, {pipeline_mode = #tpu.pipeline_mode<synchronous>, transform_indices = @transform_1, window_bounds = array<i64: 1, 128>}, {pipeline_mode = #tpu.pipeline_mode<synchronous>, transform_indices = @transform_2, window_bounds = array<i64: 1, 128>}, {pipeline_mode = #tpu.pipeline_mode<synchronous>, transform_indices = @transform_3, window_bounds = array<i64: 128, 384>}, {pipeline_mode = #tpu.pipeline_mode<synchronous>, transform_indices = @transform_4, window_bounds = array<i64: 1, 384>}, {pipeline_mode = #tpu.pipeline_mode<synchronous>, transform_indices = @transform_5, window_bounds = array<i64: 128, 128>}, {pipeline_mode = #tpu.pipeline_mode<synchronous>, transform_indices = @transform_6, window_bounds = array<i64: 1, 128>}, {pipeline_mode = #tpu.pipeline_mode<synchronous>, transform_indices = @transform_7, window_bounds = array<i64: 1, 128>}, {pipeline_mode = #tpu.pipeline_mode<synchronous>, transform_indices = @transform_8, window_bounds = array<i64: 1, 128>}, {pipeline_mode = #tpu.pipeline_mode<synchronous>, transform_indices = @transform_9, window_bounds = array<i64: 128, 256>}, {pipeline_mode = #tpu.pipeline_mode<synchronous>, transform_indices = @transform_10, window_bounds = array<i64: 1, 256>}, {pipeline_mode = #tpu.pipeline_mode<synchronous>, transform_indices = @transform_11, window_bounds = array<i64: 256, 128>}, {pipeline_mode = #tpu.pipeline_mode<synchronous>, transform_indices = @transform_12, window_bounds = array<i64: 1, 128>}, {transform_indices = @transform_13, window_bounds = array<i64: 2, 16, 128>}]} {
    %c0 = arith.constant 0 : index
    %c0_0 = arith.constant 0 : index
    %c0_1 = arith.constant 0 : index
    %0 = vector.load %arg1[%c0, %c0_0, %c0_1] : memref<2x16x128xf32, #tpu.memory_space<vmem>>, vector<2x16x128xf32>
    %c0_2 = arith.constant 0 : index
    %c0_3 = arith.constant 0 : index
    %1 = vector.load %arg2[%c0_2, %c0_3] : memref<1x128xf32, #tpu.memory_space<vmem>>, vector<1x128xf32>
    %c0_4 = arith.constant 0 : index
    %c0_5 = arith.constant 0 : index
    %2 = vector.load %arg3[%c0_4, %c0_5] : memref<1x128xf32, #tpu.memory_space<vmem>>, vector<1x128xf32>
    %cst = arith.constant dense<0.000000e+00> : vector<2x16xf32>
    %3 = vector.multi_reduction <add>, %0, %cst [2] : vector<2x16x128xf32> to vector<2x16xf32>
    %4 = vector.shape_cast %3 : vector<2x16xf32> to vector<2x16x1xf32>
    %cst_6 = arith.constant 1.280000e+02 : f32
    %5 = vector.broadcast %cst_6 : f32 to vector<2x16x1xf32>
    %6 = arith.divf %4, %5 : vector<2x16x1xf32>
    %7 = arith.mulf %0, %0 : vector<2x16x128xf32>
    %cst_7 = arith.constant dense<0.000000e+00> : vector<2x16xf32>
    %8 = vector.multi_reduction <add>, %7, %cst_7 [2] : vector<2x16x128xf32> to vector<2x16xf32>
    %9 = vector.shape_cast %8 : vector<2x16xf32> to vector<2x16x1xf32>
    %cst_8 = arith.constant 1.280000e+02 : f32
    %10 = vector.broadcast %cst_8 : f32 to vector<2x16x1xf32>
    %11 = arith.divf %9, %10 : vector<2x16x1xf32>
    %12 = arith.mulf %6, %6 : vector<2x16x1xf32>
    %13 = arith.subf %11, %12 : vector<2x16x1xf32>
    %14 = vector.broadcast %6 : vector<2x16x1xf32> to vector<2x16x128xf32>
    %15 = arith.subf %0, %14 : vector<2x16x128xf32>
    %cst_9 = arith.constant 9.99999997E-7 : f32
    %16 = vector.broadcast %cst_9 : f32 to vector<2x16x1xf32>
    %17 = arith.addf %13, %16 : vector<2x16x1xf32>
    %18 = math.rsqrt %17 : vector<2x16x1xf32>
    %19 = vector.broadcast %18 : vector<2x16x1xf32> to vector<2x16x128xf32>
    %20 = arith.mulf %15, %19 : vector<2x16x128xf32>
    %21 = vector.shape_cast %1 : vector<1x128xf32> to vector<1x1x128xf32>
    %22 = vector.broadcast %21 : vector<1x1x128xf32> to vector<2x16x128xf32>
    %23 = arith.mulf %20, %22 : vector<2x16x128xf32>
    %24 = vector.shape_cast %2 : vector<1x128xf32> to vector<1x1x128xf32>
    %25 = vector.broadcast %24 : vector<1x1x128xf32> to vector<2x16x128xf32>
    %26 = arith.addf %23, %25 : vector<2x16x128xf32>
    %27 = vector.shape_cast %26 : vector<2x16x128xf32> to vector<32x128xf32>
    %28 = arith.truncf %27 : vector<32x128xf32> to vector<32x128xbf16>
    %c0_10 = arith.constant 0 : index
    %c0_11 = arith.constant 0 : index
    %29 = vector.load %arg4[%c0_10, %c0_11] : memref<128x384xbf16, #tpu.memory_space<vmem>>, vector<128x384xbf16>
    %cst_12 = arith.constant dense<0.000000e+00> : vector<32x384xf32>
    %30 = tpu.matmul %28, %29, %cst_12 {dimension_numbers = #tpu.dot_dimension_numbers<[1], [0], [0], [1], [0, 0, 1, 1], [], []>} : vector<32x128xbf16>, vector<128x384xbf16>, vector<32x384xf32> -> vector<32x384xf32>
    %c0_13 = arith.constant 0 : index
    %c0_14 = arith.constant 0 : index
    %31 = vector.load %arg5[%c0_13, %c0_14] : memref<1x384xf32, #tpu.memory_space<vmem>>, vector<1x384xf32>
    %32 = vector.broadcast %31 : vector<1x384xf32> to vector<32x384xf32>
    %33 = arith.addf %30, %32 : vector<32x384xf32>
    %34 = vector.extract_strided_slice %33 {offsets = [0, 0], sizes = [32, 32], strides = [1, 1]} : vector<32x384xf32> to vector<32x32xf32>
    %35 = vector.shape_cast %34 : vector<32x32xf32> to vector<2x16x32xf32>
    %36 = arith.truncf %35 : vector<2x16x32xf32> to vector<2x16x32xbf16>
    %37 = vector.extract_strided_slice %33 {offsets = [0, 128], sizes = [32, 32], strides = [1, 1]} : vector<32x384xf32> to vector<32x32xf32>
    %38 = vector.shape_cast %37 : vector<32x32xf32> to vector<2x16x32xf32>
    %39 = arith.truncf %38 : vector<2x16x32xf32> to vector<2x16x32xbf16>
    "tpu.trace_start"() <{level = 10 : i32, message = "bqd,bkd->bqk"}> : () -> ()
    %cst_15 = arith.constant dense<0.000000e+00> : vector<2x16x16xf32>
    %40 = tpu.matmul %36, %39, %cst_15 {dimension_numbers = #tpu.dot_dimension_numbers<[2], [2], [1], [1], [0, 0, 0, 1, 1, 1], [0], [0]>} : vector<2x16x32xbf16>, vector<2x16x32xbf16>, vector<2x16x16xf32> -> vector<2x16x16xf32>
    "tpu.trace_stop"() : () -> ()
    %41 = vector.extract_strided_slice %33 {offsets = [0, 32], sizes = [32, 32], strides = [1, 1]} : vector<32x384xf32> to vector<32x32xf32>
    %42 = vector.shape_cast %41 : vector<32x32xf32> to vector<2x16x32xf32>
    %43 = arith.truncf %42 : vector<2x16x32xf32> to vector<2x16x32xbf16>
    %44 = vector.extract_strided_slice %33 {offsets = [0, 160], sizes = [32, 32], strides = [1, 1]} : vector<32x384xf32> to vector<32x32xf32>
    %45 = vector.shape_cast %44 : vector<32x32xf32> to vector<2x16x32xf32>
    %46 = arith.truncf %45 : vector<2x16x32xf32> to vector<2x16x32xbf16>
    "tpu.trace_start"() <{level = 10 : i32, message = "bqd,bkd->bqk"}> : () -> ()
    %cst_16 = arith.constant dense<0.000000e+00> : vector<2x16x16xf32>
    %47 = tpu.matmul %43, %46, %cst_16 {dimension_numbers = #tpu.dot_dimension_numbers<[2], [2], [1], [1], [0, 0, 0, 1, 1, 1], [0], [0]>} : vector<2x16x32xbf16>, vector<2x16x32xbf16>, vector<2x16x16xf32> -> vector<2x16x16xf32>
    "tpu.trace_stop"() : () -> ()
    %48 = vector.extract_strided_slice %33 {offsets = [0, 64], sizes = [32, 32], strides = [1, 1]} : vector<32x384xf32> to vector<32x32xf32>
    %49 = vector.shape_cast %48 : vector<32x32xf32> to vector<2x16x32xf32>
    %50 = arith.truncf %49 : vector<2x16x32xf32> to vector<2x16x32xbf16>
    %51 = vector.extract_strided_slice %33 {offsets = [0, 192], sizes = [32, 32], strides = [1, 1]} : vector<32x384xf32> to vector<32x32xf32>
    %52 = vector.shape_cast %51 : vector<32x32xf32> to vector<2x16x32xf32>
    %53 = arith.truncf %52 : vector<2x16x32xf32> to vector<2x16x32xbf16>
    "tpu.trace_start"() <{level = 10 : i32, message = "bqd,bkd->bqk"}> : () -> ()
    %cst_17 = arith.constant dense<0.000000e+00> : vector<2x16x16xf32>
    %54 = tpu.matmul %50, %53, %cst_17 {dimension_numbers = #tpu.dot_dimension_numbers<[2], [2], [1], [1], [0, 0, 0, 1, 1, 1], [0], [0]>} : vector<2x16x32xbf16>, vector<2x16x32xbf16>, vector<2x16x16xf32> -> vector<2x16x16xf32>
    "tpu.trace_stop"() : () -> ()
    %55 = vector.extract_strided_slice %33 {offsets = [0, 96], sizes = [32, 32], strides = [1, 1]} : vector<32x384xf32> to vector<32x32xf32>
    %56 = vector.shape_cast %55 : vector<32x32xf32> to vector<2x16x32xf32>
    %57 = arith.truncf %56 : vector<2x16x32xf32> to vector<2x16x32xbf16>
    %58 = vector.extract_strided_slice %33 {offsets = [0, 224], sizes = [32, 32], strides = [1, 1]} : vector<32x384xf32> to vector<32x32xf32>
    %59 = vector.shape_cast %58 : vector<32x32xf32> to vector<2x16x32xf32>
    %60 = arith.truncf %59 : vector<2x16x32xf32> to vector<2x16x32xbf16>
    "tpu.trace_start"() <{level = 10 : i32, message = "bqd,bkd->bqk"}> : () -> ()
    %cst_18 = arith.constant dense<0.000000e+00> : vector<2x16x16xf32>
    %61 = tpu.matmul %57, %60, %cst_18 {dimension_numbers = #tpu.dot_dimension_numbers<[2], [2], [1], [1], [0, 0, 0, 1, 1, 1], [0], [0]>} : vector<2x16x32xbf16>, vector<2x16x32xbf16>, vector<2x16x16xf32> -> vector<2x16x16xf32>
    "tpu.trace_stop"() : () -> ()
    %62 = tpu.concatenate %40, %47, %54, %61 in 0 : vector<2x16x16xf32>, vector<2x16x16xf32>, vector<2x16x16xf32>, vector<2x16x16xf32> -> vector<8x16x16xf32>
    %cst_19 = arith.constant dense<0xFF800000> : vector<8x16xf32>
    %63 = vector.multi_reduction <maximumf>, %62, %cst_19 [2] : vector<8x16x16xf32> to vector<8x16xf32>
    %64 = vector.shape_cast %63 : vector<8x16xf32> to vector<8x16x1xf32>
    %65 = vector.broadcast %64 : vector<8x16x1xf32> to vector<8x16x16xf32>
    %66 = arith.subf %62, %65 : vector<8x16x16xf32>
    %67 = math.exp %66 : vector<8x16x16xf32>
    %cst_20 = arith.constant dense<0.000000e+00> : vector<8x16xf32>
    %68 = vector.multi_reduction <add>, %67, %cst_20 [2] : vector<8x16x16xf32> to vector<8x16xf32>
    %69 = vector.shape_cast %68 : vector<8x16xf32> to vector<8x16x1xf32>
    %70 = tpu.reciprocal %69 {approx = true} : vector<8x16x1xf32> -> vector<8x16x1xf32>
    %71 = vector.broadcast %70 : vector<8x16x1xf32> to vector<8x16x16xf32>
    %72 = arith.mulf %67, %71 : vector<8x16x16xf32>
    %73 = arith.truncf %72 : vector<8x16x16xf32> to vector<8x16x16xbf16>
    %c0_21 = arith.constant 0 : index
    %c0_22 = arith.constant 0 : index
    %74 = vector.load %arg6[%c0_21, %c0_22] : memref<128x128xbf16, #tpu.memory_space<vmem>>, vector<128x128xbf16>
    %75 = vector.extract_strided_slice %33 {offsets = [0, 256], sizes = [32, 32], strides = [1, 1]} : vector<32x384xf32> to vector<32x32xf32>
    %76 = vector.shape_cast %75 : vector<32x32xf32> to vector<2x16x32xf32>
    %77 = arith.truncf %76 : vector<2x16x32xf32> to vector<2x16x32xbf16>
    %78 = vector.extract_strided_slice %73 {offsets = [0, 0, 0], sizes = [2, 16, 16], strides = [1, 1, 1]} : vector<8x16x16xbf16> to vector<2x16x16xbf16>
    "tpu.trace_start"() <{level = 10 : i32, message = "bqk,bkd->bqd"}> : () -> ()
    %cst_23 = arith.constant dense<0.000000e+00> : vector<2x16x32xf32>
    %79 = tpu.matmul %78, %77, %cst_23 {dimension_numbers = #tpu.dot_dimension_numbers<[2], [1], [1], [2], [0, 0, 0, 1, 1, 2], [0], [0]>} : vector<2x16x16xbf16>, vector<2x16x32xbf16>, vector<2x16x32xf32> -> vector<2x16x32xf32>
    "tpu.trace_stop"() : () -> ()
    %80 = vector.shape_cast %79 : vector<2x16x32xf32> to vector<32x32xf32>
    %81 = arith.truncf %80 : vector<32x32xf32> to vector<32x32xbf16>
    %82 = vector.extract_strided_slice %74 {offsets = [0, 0], sizes = [32, 128], strides = [1, 1]} : vector<128x128xbf16> to vector<32x128xbf16>
    %cst_24 = arith.constant dense<0.000000e+00> : vector<32x128xf32>
    %83 = tpu.matmul %81, %82, %cst_24 {dimension_numbers = #tpu.dot_dimension_numbers<[1], [0], [0], [1], [0, 0, 1, 1], [], []>} : vector<32x32xbf16>, vector<32x128xbf16>, vector<32x128xf32> -> vector<32x128xf32>
    %84 = vector.extract_strided_slice %33 {offsets = [0, 288], sizes = [32, 32], strides = [1, 1]} : vector<32x384xf32> to vector<32x32xf32>
    %85 = vector.shape_cast %84 : vector<32x32xf32> to vector<2x16x32xf32>
    %86 = arith.truncf %85 : vector<2x16x32xf32> to vector<2x16x32xbf16>
    %87 = vector.extract_strided_slice %73 {offsets = [2, 0, 0], sizes = [2, 16, 16], strides = [1, 1, 1]} : vector<8x16x16xbf16> to vector<2x16x16xbf16>
    "tpu.trace_start"() <{level = 10 : i32, message = "bqk,bkd->bqd"}> : () -> ()
    %cst_25 = arith.constant dense<0.000000e+00> : vector<2x16x32xf32>
    %88 = tpu.matmul %87, %86, %cst_25 {dimension_numbers = #tpu.dot_dimension_numbers<[2], [1], [1], [2], [0, 0, 0, 1, 1, 2], [0], [0]>} : vector<2x16x16xbf16>, vector<2x16x32xbf16>, vector<2x16x32xf32> -> vector<2x16x32xf32>
    "tpu.trace_stop"() : () -> ()
    %89 = vector.shape_cast %88 : vector<2x16x32xf32> to vector<32x32xf32>
    %90 = arith.truncf %89 : vector<32x32xf32> to vector<32x32xbf16>
    %91 = vector.extract_strided_slice %74 {offsets = [32, 0], sizes = [32, 128], strides = [1, 1]} : vector<128x128xbf16> to vector<32x128xbf16>
    %cst_26 = arith.constant dense<0.000000e+00> : vector<32x128xf32>
    %92 = tpu.matmul %90, %91, %cst_26 {dimension_numbers = #tpu.dot_dimension_numbers<[1], [0], [0], [1], [0, 0, 1, 1], [], []>} : vector<32x32xbf16>, vector<32x128xbf16>, vector<32x128xf32> -> vector<32x128xf32>
    %93 = arith.addf %83, %92 : vector<32x128xf32>
    %94 = vector.extract_strided_slice %33 {offsets = [0, 320], sizes = [32, 32], strides = [1, 1]} : vector<32x384xf32> to vector<32x32xf32>
    %95 = vector.shape_cast %94 : vector<32x32xf32> to vector<2x16x32xf32>
    %96 = arith.truncf %95 : vector<2x16x32xf32> to vector<2x16x32xbf16>
    %97 = vector.extract_strided_slice %73 {offsets = [4, 0, 0], sizes = [2, 16, 16], strides = [1, 1, 1]} : vector<8x16x16xbf16> to vector<2x16x16xbf16>
    "tpu.trace_start"() <{level = 10 : i32, message = "bqk,bkd->bqd"}> : () -> ()
    %cst_27 = arith.constant dense<0.000000e+00> : vector<2x16x32xf32>
    %98 = tpu.matmul %97, %96, %cst_27 {dimension_numbers = #tpu.dot_dimension_numbers<[2], [1], [1], [2], [0, 0, 0, 1, 1, 2], [0], [0]>} : vector<2x16x16xbf16>, vector<2x16x32xbf16>, vector<2x16x32xf32> -> vector<2x16x32xf32>
    "tpu.trace_stop"() : () -> ()
    %99 = vector.shape_cast %98 : vector<2x16x32xf32> to vector<32x32xf32>
    %100 = arith.truncf %99 : vector<32x32xf32> to vector<32x32xbf16>
    %101 = vector.extract_strided_slice %74 {offsets = [64, 0], sizes = [32, 128], strides = [1, 1]} : vector<128x128xbf16> to vector<32x128xbf16>
    %cst_28 = arith.constant dense<0.000000e+00> : vector<32x128xf32>
    %102 = tpu.matmul %100, %101, %cst_28 {dimension_numbers = #tpu.dot_dimension_numbers<[1], [0], [0], [1], [0, 0, 1, 1], [], []>} : vector<32x32xbf16>, vector<32x128xbf16>, vector<32x128xf32> -> vector<32x128xf32>
    %103 = arith.addf %93, %102 : vector<32x128xf32>
    %104 = vector.extract_strided_slice %33 {offsets = [0, 352], sizes = [32, 32], strides = [1, 1]} : vector<32x384xf32> to vector<32x32xf32>
    %105 = vector.shape_cast %104 : vector<32x32xf32> to vector<2x16x32xf32>
    %106 = arith.truncf %105 : vector<2x16x32xf32> to vector<2x16x32xbf16>
    %107 = vector.extract_strided_slice %73 {offsets = [6, 0, 0], sizes = [2, 16, 16], strides = [1, 1, 1]} : vector<8x16x16xbf16> to vector<2x16x16xbf16>
    "tpu.trace_start"() <{level = 10 : i32, message = "bqk,bkd->bqd"}> : () -> ()
    %cst_29 = arith.constant dense<0.000000e+00> : vector<2x16x32xf32>
    %108 = tpu.matmul %107, %106, %cst_29 {dimension_numbers = #tpu.dot_dimension_numbers<[2], [1], [1], [2], [0, 0, 0, 1, 1, 2], [0], [0]>} : vector<2x16x16xbf16>, vector<2x16x32xbf16>, vector<2x16x32xf32> -> vector<2x16x32xf32>
    "tpu.trace_stop"() : () -> ()
    %109 = vector.shape_cast %108 : vector<2x16x32xf32> to vector<32x32xf32>
    %110 = arith.truncf %109 : vector<32x32xf32> to vector<32x32xbf16>
    %111 = vector.extract_strided_slice %74 {offsets = [96, 0], sizes = [32, 128], strides = [1, 1]} : vector<128x128xbf16> to vector<32x128xbf16>
    %cst_30 = arith.constant dense<0.000000e+00> : vector<32x128xf32>
    %112 = tpu.matmul %110, %111, %cst_30 {dimension_numbers = #tpu.dot_dimension_numbers<[1], [0], [0], [1], [0, 0, 1, 1], [], []>} : vector<32x32xbf16>, vector<32x128xbf16>, vector<32x128xf32> -> vector<32x128xf32>
    %113 = arith.addf %103, %112 : vector<32x128xf32>
    %c0_31 = arith.constant 0 : index
    %c0_32 = arith.constant 0 : index
    %114 = vector.load %arg7[%c0_31, %c0_32] : memref<1x128xf32, #tpu.memory_space<vmem>>, vector<1x128xf32>
    %115 = vector.broadcast %114 : vector<1x128xf32> to vector<32x128xf32>
    %116 = arith.addf %113, %115 : vector<32x128xf32>
    %117 = vector.shape_cast %116 : vector<32x128xf32> to vector<2x16x128xf32>
    %118 = arith.addf %0, %117 : vector<2x16x128xf32>
    %c0_33 = arith.constant 0 : index
    %c0_34 = arith.constant 0 : index
    %119 = vector.load %arg8[%c0_33, %c0_34] : memref<1x128xf32, #tpu.memory_space<vmem>>, vector<1x128xf32>
    %c0_35 = arith.constant 0 : index
    %c0_36 = arith.constant 0 : index
    %120 = vector.load %arg9[%c0_35, %c0_36] : memref<1x128xf32, #tpu.memory_space<vmem>>, vector<1x128xf32>
    %cst_37 = arith.constant dense<0.000000e+00> : vector<2x16xf32>
    %121 = vector.multi_reduction <add>, %118, %cst_37 [2] : vector<2x16x128xf32> to vector<2x16xf32>
    %122 = vector.shape_cast %121 : vector<2x16xf32> to vector<2x16x1xf32>
    %cst_38 = arith.constant 1.280000e+02 : f32
    %123 = vector.broadcast %cst_38 : f32 to vector<2x16x1xf32>
    %124 = arith.divf %122, %123 : vector<2x16x1xf32>
    %125 = arith.mulf %118, %118 : vector<2x16x128xf32>
    %cst_39 = arith.constant dense<0.000000e+00> : vector<2x16xf32>
    %126 = vector.multi_reduction <add>, %125, %cst_39 [2] : vector<2x16x128xf32> to vector<2x16xf32>
    %127 = vector.shape_cast %126 : vector<2x16xf32> to vector<2x16x1xf32>
    %cst_40 = arith.constant 1.280000e+02 : f32
    %128 = vector.broadcast %cst_40 : f32 to vector<2x16x1xf32>
    %129 = arith.divf %127, %128 : vector<2x16x1xf32>
    %130 = arith.mulf %124, %124 : vector<2x16x1xf32>
    %131 = arith.subf %129, %130 : vector<2x16x1xf32>
    %132 = vector.broadcast %124 : vector<2x16x1xf32> to vector<2x16x128xf32>
    %133 = arith.subf %118, %132 : vector<2x16x128xf32>
    %cst_41 = arith.constant 9.99999997E-7 : f32
    %134 = vector.broadcast %cst_41 : f32 to vector<2x16x1xf32>
    %135 = arith.addf %131, %134 : vector<2x16x1xf32>
    %136 = math.rsqrt %135 : vector<2x16x1xf32>
    %137 = vector.broadcast %136 : vector<2x16x1xf32> to vector<2x16x128xf32>
    %138 = arith.mulf %133, %137 : vector<2x16x128xf32>
    %139 = vector.shape_cast %119 : vector<1x128xf32> to vector<1x1x128xf32>
    %140 = vector.broadcast %139 : vector<1x1x128xf32> to vector<2x16x128xf32>
    %141 = arith.mulf %138, %140 : vector<2x16x128xf32>
    %142 = vector.shape_cast %120 : vector<1x128xf32> to vector<1x1x128xf32>
    %143 = vector.broadcast %142 : vector<1x1x128xf32> to vector<2x16x128xf32>
    %144 = arith.addf %141, %143 : vector<2x16x128xf32>
    %145 = vector.shape_cast %144 : vector<2x16x128xf32> to vector<32x128xf32>
    %146 = arith.truncf %145 : vector<32x128xf32> to vector<32x128xbf16>
    %c0_42 = arith.constant 0 : index
    %c0_43 = arith.constant 0 : index
    %147 = vector.load %arg10[%c0_42, %c0_43] : memref<128x256xbf16, #tpu.memory_space<vmem>>, vector<128x256xbf16>
    %cst_44 = arith.constant dense<0.000000e+00> : vector<32x256xf32>
    %148 = tpu.matmul %146, %147, %cst_44 {dimension_numbers = #tpu.dot_dimension_numbers<[1], [0], [0], [1], [0, 0, 1, 1], [], []>} : vector<32x128xbf16>, vector<128x256xbf16>, vector<32x256xf32> -> vector<32x256xf32>
    %c0_45 = arith.constant 0 : index
    %c0_46 = arith.constant 0 : index
    %149 = vector.load %arg11[%c0_45, %c0_46] : memref<1x256xf32, #tpu.memory_space<vmem>>, vector<1x256xf32>
    %150 = vector.broadcast %149 : vector<1x256xf32> to vector<32x256xf32>
    %151 = arith.addf %148, %150 : vector<32x256xf32>
    %152 = arith.mulf %151, %151 : vector<32x256xf32>
    %153 = arith.mulf %151, %152 : vector<32x256xf32>
    %cst_47 = arith.constant 4.471500e-02 : f32
    %154 = vector.broadcast %cst_47 : f32 to vector<32x256xf32>
    %155 = arith.mulf %154, %153 : vector<32x256xf32>
    %156 = arith.addf %151, %155 : vector<32x256xf32>
    %cst_48 = arith.constant 0.797884583 : f32
    %157 = vector.broadcast %cst_48 : f32 to vector<32x256xf32>
    %158 = arith.mulf %157, %156 : vector<32x256xf32>
    %159 = math.tanh %158 : vector<32x256xf32>
    %cst_49 = arith.constant 1.000000e+00 : f32
    %160 = vector.broadcast %cst_49 : f32 to vector<32x256xf32>
    %161 = arith.addf %160, %159 : vector<32x256xf32>
    %cst_50 = arith.constant 5.000000e-01 : f32
    %162 = vector.broadcast %cst_50 : f32 to vector<32x256xf32>
    %163 = arith.mulf %162, %161 : vector<32x256xf32>
    %164 = arith.mulf %151, %163 : vector<32x256xf32>
    %165 = arith.truncf %164 : vector<32x256xf32> to vector<32x256xbf16>
    %c0_51 = arith.constant 0 : index
    %c0_52 = arith.constant 0 : index
    %166 = vector.load %arg12[%c0_51, %c0_52] : memref<256x128xbf16, #tpu.memory_space<vmem>>, vector<256x128xbf16>
    %cst_53 = arith.constant dense<0.000000e+00> : vector<32x128xf32>
    %167 = tpu.matmul %165, %166, %cst_53 {dimension_numbers = #tpu.dot_dimension_numbers<[1], [0], [0], [1], [0, 0, 1, 1], [], []>} : vector<32x256xbf16>, vector<256x128xbf16>, vector<32x128xf32> -> vector<32x128xf32>
    %c0_54 = arith.constant 0 : index
    %c0_55 = arith.constant 0 : index
    %168 = vector.load %arg13[%c0_54, %c0_55] : memref<1x128xf32, #tpu.memory_space<vmem>>, vector<1x128xf32>
    %169 = vector.broadcast %168 : vector<1x128xf32> to vector<32x128xf32>
    %170 = arith.addf %167, %169 : vector<32x128xf32>
    %171 = vector.shape_cast %170 : vector<32x128xf32> to vector<2x16x128xf32>
    %172 = arith.addf %118, %171 : vector<2x16x128xf32>
    %c0_56 = arith.constant 0 : index
    %c0_57 = arith.constant 0 : index
    %c0_58 = arith.constant 0 : index
    %173 = vector.load %arg14[%c0_56, %c0_57, %c0_58] : memref<2x16x128xf32, #tpu.memory_space<vmem>>, vector<2x16x128xf32>
    tpu.vector_store %arg14[%c0_56, %c0_57, %c0_58], %172 {strides = array<i32>} : memref<2x16x128xf32, #tpu.memory_space<vmem>>, vector<2x16x128xf32>,
    return
  }
  func.func @transform_0(%arg0: i32) -> (i32, i32, i32) {
    %c0_i32 = arith.constant 0 : i32
    %c0_i32_0 = arith.constant 0 : i32
    %c0_i32_1 = arith.constant 0 : i32
    return %arg0, %c0_i32, %c0_i32_0 : i32, i32, i32
  }
  func.func @transform_1(%arg0: i32) -> (i32, i32) {
    %c0_i32 = arith.constant 0 : i32
    %c0_i32_0 = arith.constant 0 : i32
    %c0_i32_1 = arith.constant 0 : i32
    return %c0_i32, %c0_i32_0 : i32, i32
  }
  func.func @transform_2(%arg0: i32) -> (i32, i32) {
    %c0_i32 = arith.constant 0 : i32
    %c0_i32_0 = arith.constant 0 : i32
    %c0_i32_1 = arith.constant 0 : i32
    return %c0_i32, %c0_i32_0 : i32, i32
  }
  func.func @transform_3(%arg0: i32) -> (i32, i32) {
    %c0_i32 = arith.constant 0 : i32
    %c0_i32_0 = arith.constant 0 : i32
    %c0_i32_1 = arith.constant 0 : i32
    return %c0_i32, %c0_i32_0 : i32, i32
  }
  func.func @transform_4(%arg0: i32) -> (i32, i32) {
    %c0_i32 = arith.constant 0 : i32
    %c0_i32_0 = arith.constant 0 : i32
    %c0_i32_1 = arith.constant 0 : i32
    return %c0_i32, %c0_i32_0 : i32, i32
  }
  func.func @transform_5(%arg0: i32) -> (i32, i32) {
    %c0_i32 = arith.constant 0 : i32
    %c0_i32_0 = arith.constant 0 : i32
    %c0_i32_1 = arith.constant 0 : i32
    return %c0_i32, %c0_i32_0 : i32, i32
  }
  func.func @transform_6(%arg0: i32) -> (i32, i32) {
    %c0_i32 = arith.constant 0 : i32
    %c0_i32_0 = arith.constant 0 : i32
    %c0_i32_1 = arith.constant 0 : i32
    return %c0_i32, %c0_i32_0 : i32, i32
  }
  func.func @transform_7(%arg0: i32) -> (i32, i32) {
    %c0_i32 = arith.constant 0 : i32
    %c0_i32_0 = arith.constant 0 : i32
    %c0_i32_1 = arith.constant 0 : i32
    return %c0_i32, %c0_i32_0 : i32, i32
  }
  func.func @transform_8(%arg0: i32) -> (i32, i32) {
    %c0_i32 = arith.constant 0 : i32
    %c0_i32_0 = arith.constant 0 : i32
    %c0_i32_1 = arith.constant 0 : i32
    return %c0_i32, %c0_i32_0 : i32, i32
  }
  func.func @transform_9(%arg0: i32) -> (i32, i32) {
    %c0_i32 = arith.constant 0 : i32
    %c0_i32_0 = arith.constant 0 : i32
    %c0_i32_1 = arith.constant 0 : i32
    return %c0_i32, %c0_i32_0 : i32, i32
  }
  func.func @transform_10(%arg0: i32) -> (i32, i32) {
    %c0_i32 = arith.constant 0 : i32
    %c0_i32_0 = arith.constant 0 : i32
    %c0_i32_1 = arith.constant 0 : i32
    return %c0_i32, %c0_i32_0 : i32, i32
  }
  func.func @transform_11(%arg0: i32) -> (i32, i32) {
    %c0_i32 = arith.constant 0 : i32
    %c0_i32_0 = arith.constant 0 : i32
    %c0_i32_1 = arith.constant 0 : i32
    return %c0_i32, %c0_i32_0 : i32, i32
  }
  func.func @transform_12(%arg0: i32) -> (i32, i32) {
    %c0_i32 = arith.constant 0 : i32
    %c0_i32_0 = arith.constant 0 : i32
    %c0_i32_1 = arith.constant 0 : i32
    return %c0_i32, %c0_i32_0 : i32, i32
  }
  func.func @transform_13(%arg0: i32) -> (i32, i32, i32) {
    %c0_i32 = arith.constant 0 : i32
    %c0_i32_0 = arith.constant 0 : i32
    %c0_i32_1 = arith.constant 0 : i32
    return %arg0, %c0_i32, %c0_i32_0 : i32, i32, i32
  }
}

module attributes {stable_mosaic.version = 11 : i64} {
  func.func @encoder_layer_kernel(%arg0: i32, %arg1: memref<2x16x128xf32, #tpu.memory_space<vmem>>, %arg2: memref<1x128xf32, #tpu.memory_space<vmem>>, %arg3: memref<1x128xf32, #tpu.memory_space<vmem>>, %arg4: memref<128x384xbf16, #tpu.memory_space<vmem>>, %arg5: memref<1x384xf32, #tpu.memory_space<vmem>>, %arg6: memref<128x128xbf16, #tpu.memory_space<vmem>>, %arg7: memref<1x128xf32, #tpu.memory_space<vmem>>, %arg8: memref<1x128xf32, #tpu.memory_space<vmem>>, %arg9: memref<1x128xf32, #tpu.memory_space<vmem>>, %arg10: memref<128x256xbf16, #tpu.memory_space<vmem>>, %arg11: memref<1x256xf32, #tpu.memory_space<vmem>>, %arg12: memref<256x128xbf16, #tpu.memory_space<vmem>>, %arg13: memref<1x128xf32, #tpu.memory_space<vmem>>, %arg14: memref<2x16x128xf32, #tpu.memory_space<vmem>>) attributes {dimension_semantics = [#tpu.dimension_semantics<arbitrary>], iteration_bounds = array<i64: 1>, scalar_prefetch = 0 : i64, scratch_operands = 0 : i64, tpu.core_type = #tpu.core_type<tc>, window_params = [{transform_indices = @transform_0, window_bounds = array<i64: 2, 16, 128>}, {pipeline_mode = #tpu.pipeline_mode<synchronous>, transform_indices = @transform_1, window_bounds = array<i64: 1, 128>}, {pipeline_mode = #tpu.pipeline_mode<synchronous>, transform_indices = @transform_2, window_bounds = array<i64: 1, 128>}, {pipeline_mode = #tpu.pipeline_mode<synchronous>, transform_indices = @transform_3, window_bounds = array<i64: 128, 384>}, {pipeline_mode = #tpu.pipeline_mode<synchronous>, transform_indices = @transform_4, window_bounds = array<i64: 1, 384>}, {pipeline_mode = #tpu.pipeline_mode<synchronous>, transform_indices = @transform_5, window_bounds = array<i64: 128, 128>}, {pipeline_mode = #tpu.pipeline_mode<synchronous>, transform_indices = @transform_6, window_bounds = array<i64: 1, 128>}, {pipeline_mode = #tpu.pipeline_mode<synchronous>, transform_indices = @transform_7, window_bounds = array<i64: 1, 128>}, {pipeline_mode = #tpu.pipeline_mode<synchronous>, transform_indices = @transform_8, window_bounds = array<i64: 1, 128>}, {pipeline_mode = #tpu.pipeline_mode<synchronous>, transform_indices = @transform_9, window_bounds = array<i64: 128, 256>}, {pipeline_mode = #tpu.pipeline_mode<synchronous>, transform_indices = @transform_10, window_bounds = array<i64: 1, 256>}, {pipeline_mode = #tpu.pipeline_mode<synchronous>, transform_indices = @transform_11, window_bounds = array<i64: 256, 128>}, {pipeline_mode = #tpu.pipeline_mode<synchronous>, transform_indices = @transform_12, window_bounds = array<i64: 1, 128>}, {transform_indices = @transform_13, window_bounds = array<i64: 2, 16, 128>}]} {
    %c0 = arith.constant 0 : index
    %c0_0 = arith.constant 0 : index
    %c0_1 = arith.constant 0 : index
    %0 = vector.load %arg1[%c0, %c0_0, %c0_1] : memref<2x16x128xf32, #tpu.memory_space<vmem>>, vector<2x16x128xf32>
    %c0_2 = arith.constant 0 : index
    %c0_3 = arith.constant 0 : index
    %1 = vector.load %arg2[%c0_2, %c0_3] : memref<1x128xf32, #tpu.memory_space<vmem>>, vector<1x128xf32>
    %c0_4 = arith.constant 0 : index
    %c0_5 = arith.constant 0 : index
    %2 = vector.load %arg3[%c0_4, %c0_5] : memref<1x128xf32, #tpu.memory_space<vmem>>, vector<1x128xf32>
    %cst = arith.constant dense<0.000000e+00> : vector<2x16xf32>
    %3 = vector.multi_reduction <add>, %0, %cst [2] : vector<2x16x128xf32> to vector<2x16xf32>
    %4 = vector.shape_cast %3 : vector<2x16xf32> to vector<2x16x1xf32>
    %cst_6 = arith.constant 1.280000e+02 : f32
    %5 = vector.broadcast %cst_6 : f32 to vector<2x16x1xf32>
    %6 = arith.divf %4, %5 : vector<2x16x1xf32>
    %7 = arith.mulf %0, %0 : vector<2x16x128xf32>
    %cst_7 = arith.constant dense<0.000000e+00> : vector<2x16xf32>
    %8 = vector.multi_reduction <add>, %7, %cst_7 [2] : vector<2x16x128xf32> to vector<2x16xf32>
    %9 = vector.shape_cast %8 : vector<2x16xf32> to vector<2x16x1xf32>
    %cst_8 = arith.constant 1.280000e+02 : f32
    %10 = vector.broadcast %cst_8 : f32 to vector<2x16x1xf32>
    %11 = arith.divf %9, %10 : vector<2x16x1xf32>
    %12 = arith.mulf %6, %6 : vector<2x16x1xf32>
    %13 = arith.subf %11, %12 : vector<2x16x1xf32>
    %14 = vector.broadcast %6 : vector<2x16x1xf32> to vector<2x16x128xf32>
    %15 = arith.subf %0, %14 : vector<2x16x128xf32>
    %cst_9 = arith.constant 9.99999997E-7 : f32
    %16 = vector.broadcast %cst_9 : f32 to vector<2x16x1xf32>
    %17 = arith.addf %13, %16 : vector<2x16x1xf32>
    %18 = math.rsqrt %17 : vector<2x16x1xf32>
    %19 = vector.broadcast %18 : vector<2x16x1xf32> to vector<2x16x128xf32>
    %20 = arith.mulf %15, %19 : vector<2x16x128xf32>
    %21 = vector.shape_cast %1 : vector<1x128xf32> to vector<1x1x128xf32>
    %22 = vector.broadcast %21 : vector<1x1x128xf32> to vector<2x16x128xf32>
    %23 = arith.mulf %20, %22 : vector<2x16x128xf32>
    %24 = vector.shape_cast %2 : vector<1x128xf32> to vector<1x1x128xf32>
    %25 = vector.broadcast %24 : vector<1x1x128xf32> to vector<2x16x128xf32>
    %26 = arith.addf %23, %25 : vector<2x16x128xf32>
    %27 = vector.shape_cast %26 : vector<2x16x128xf32> to vector<32x128xf32>
    %28 = arith.truncf %27 : vector<32x128xf32> to vector<32x128xbf16>
    %c0_10 = arith.constant 0 : index
    %c0_11 = arith.constant 0 : index
    %29 = vector.load %arg4[%c0_10, %c0_11] : memref<128x384xbf16, #tpu.memory_space<vmem>>, vector<128x384xbf16>
    %cst_12 = arith.constant dense<0.000000e+00> : vector<32x384xf32>
    %30 = tpu.matmul %28, %29, %cst_12 {dimension_numbers = #tpu.dot_dimension_numbers<[1], [0], [0], [1], [0, 0, 1, 1], [], []>} : vector<32x128xbf16>, vector<128x384xbf16>, vector<32x384xf32> -> vector<32x384xf32>
    %c0_13 = arith.constant 0 : index
    %c0_14 = arith.constant 0 : index
    %31 = vector.load %arg5[%c0_13, %c0_14] : memref<1x384xf32, #tpu.memory_space<vmem>>, vector<1x384xf32>
    %32 = vector.broadcast %31 : vector<1x384xf32> to vector<32x384xf32>
    %33 = arith.addf %30, %32 : vector<32x384xf32>
    %34 = vector.extract_strided_slice %33 {offsets = [0, 0], sizes = [32, 32], strides = [1, 1]} : vector<32x384xf32> to vector<32x32xf32>
    %35 = vector.shape_cast %34 : vector<32x32xf32> to vector<2x16x32xf32>
    %36 = arith.truncf %35 : vector<2x16x32xf32> to vector<2x16x32xbf16>
    %37 = vector.extract_strided_slice %33 {offsets = [0, 128], sizes = [32, 32], strides = [1, 1]} : vector<32x384xf32> to vector<32x32xf32>
    %38 = vector.shape_cast %37 : vector<32x32xf32> to vector<2x16x32xf32>
    %39 = arith.truncf %38 : vector<2x16x32xf32> to vector<2x16x32xbf16>
    "tpu.trace_start"() <{level = 10 : i32, message = "bqd,bkd->bqk"}> : () -> ()
    %cst_15 = arith.constant dense<0.000000e+00> : vector<2x16x16xf32>
    %40 = tpu.matmul %36, %39, %cst_15 {dimension_numbers = #tpu.dot_dimension_numbers<[2], [2], [1], [1], [0, 0, 0, 1, 1, 1], [0], [0]>} : vector<2x16x32xbf16>, vector<2x16x32xbf16>, vector<2x16x16xf32> -> vector<2x16x16xf32>
    "tpu.trace_stop"() : () -> ()
    %41 = vector.extract_strided_slice %33 {offsets = [0, 32], sizes = [32, 32], strides = [1, 1]} : vector<32x384xf32> to vector<32x32xf32>
    %42 = vector.shape_cast %41 : vector<32x32xf32> to vector<2x16x32xf32>
    %43 = arith.truncf %42 : vector<2x16x32xf32> to vector<2x16x32xbf16>
    %44 = vector.extract_strided_slice %33 {offsets = [0, 160], sizes = [32, 32], strides = [1, 1]} : vector<32x384xf32> to vector<32x32xf32>
    %45 = vector.shape_cast %44 : vector<32x32xf32> to vector<2x16x32xf32>
    %46 = arith.truncf %45 : vector<2x16x32xf32> to vector<2x16x32xbf16>
    "tpu.trace_start"() <{level = 10 : i32, message = "bqd,bkd->bqk"}> : () -> ()
    %cst_16 = arith.constant dense<0.000000e+00> : vector<2x16x16xf32>
    %47 = tpu.matmul %43, %46, %cst_16 {dimension_numbers = #tpu.dot_dimension_numbers<[2], [2], [1], [1], [0, 0, 0, 1, 1, 1], [0], [0]>} : vector<2x16x32xbf16>, vector<2x16x32xbf16>, vector<2x16x16xf32> -> vector<2x16x16xf32>
    "tpu.trace_stop"() : () -> ()
    %48 = vector.extract_strided_slice %33 {offsets = [0, 64], sizes = [32, 32], strides = [1, 1]} : vector<32x384xf32> to vector<32x32xf32>
    %49 = vector.shape_cast %48 : vector<32x32xf32> to vector<2x16x32xf32>
    %50 = arith.truncf %49 : vector<2x16x32xf32> to vector<2x16x32xbf16>
    %51 = vector.extract_strided_slice %33 {offsets = [0, 192], sizes = [32, 32], strides = [1, 1]} : vector<32x384xf32> to vector<32x32xf32>
    %52 = vector.shape_cast %51 : vector<32x32xf32> to vector<2x16x32xf32>
    %53 = arith.truncf %52 : vector<2x16x32xf32> to vector<2x16x32xbf16>
    "tpu.trace_start"() <{level = 10 : i32, message = "bqd,bkd->bqk"}> : () -> ()
    %cst_17 = arith.constant dense<0.000000e+00> : vector<2x16x16xf32>
    %54 = tpu.matmul %50, %53, %cst_17 {dimension_numbers = #tpu.dot_dimension_numbers<[2], [2], [1], [1], [0, 0, 0, 1, 1, 1], [0], [0]>} : vector<2x16x32xbf16>, vector<2x16x32xbf16>, vector<2x16x16xf32> -> vector<2x16x16xf32>
    "tpu.trace_stop"() : () -> ()
    %55 = vector.extract_strided_slice %33 {offsets = [0, 96], sizes = [32, 32], strides = [1, 1]} : vector<32x384xf32> to vector<32x32xf32>
    %56 = vector.shape_cast %55 : vector<32x32xf32> to vector<2x16x32xf32>
    %57 = arith.truncf %56 : vector<2x16x32xf32> to vector<2x16x32xbf16>
    %58 = vector.extract_strided_slice %33 {offsets = [0, 224], sizes = [32, 32], strides = [1, 1]} : vector<32x384xf32> to vector<32x32xf32>
    %59 = vector.shape_cast %58 : vector<32x32xf32> to vector<2x16x32xf32>
    %60 = arith.truncf %59 : vector<2x16x32xf32> to vector<2x16x32xbf16>
    "tpu.trace_start"() <{level = 10 : i32, message = "bqd,bkd->bqk"}> : () -> ()
    %cst_18 = arith.constant dense<0.000000e+00> : vector<2x16x16xf32>
    %61 = tpu.matmul %57, %60, %cst_18 {dimension_numbers = #tpu.dot_dimension_numbers<[2], [2], [1], [1], [0, 0, 0, 1, 1, 1], [0], [0]>} : vector<2x16x32xbf16>, vector<2x16x32xbf16>, vector<2x16x16xf32> -> vector<2x16x16xf32>
    "tpu.trace_stop"() : () -> ()
    %62 = tpu.concatenate %40, %47, %54, %61 in 0 : vector<2x16x16xf32>, vector<2x16x16xf32>, vector<2x16x16xf32>, vector<2x16x16xf32> -> vector<8x16x16xf32>
    %cst_19 = arith.constant dense<0xFF800000> : vector<8x16xf32>
    %63 = vector.multi_reduction <maximumf>, %62, %cst_19 [2] : vector<8x16x16xf32> to vector<8x16xf32>
    %64 = vector.shape_cast %63 : vector<8x16xf32> to vector<8x16x1xf32>
    %65 = vector.broadcast %64 : vector<8x16x1xf32> to vector<8x16x16xf32>
    %66 = arith.subf %62, %65 : vector<8x16x16xf32>
    %67 = math.exp %66 : vector<8x16x16xf32>
    %cst_20 = arith.constant dense<0.000000e+00> : vector<8x16xf32>
    %68 = vector.multi_reduction <add>, %67, %cst_20 [2] : vector<8x16x16xf32> to vector<8x16xf32>
    %69 = vector.shape_cast %68 : vector<8x16xf32> to vector<8x16x1xf32>
    %70 = tpu.reciprocal %69 {approx = true} : vector<8x16x1xf32> -> vector<8x16x1xf32>
    %71 = vector.broadcast %70 : vector<8x16x1xf32> to vector<8x16x16xf32>
    %72 = arith.mulf %67, %71 : vector<8x16x16xf32>
    %73 = arith.truncf %72 : vector<8x16x16xf32> to vector<8x16x16xbf16>
    %c0_21 = arith.constant 0 : index
    %c0_22 = arith.constant 0 : index
    %74 = vector.load %arg6[%c0_21, %c0_22] : memref<128x128xbf16, #tpu.memory_space<vmem>>, vector<128x128xbf16>
    %75 = vector.extract_strided_slice %33 {offsets = [0, 256], sizes = [32, 32], strides = [1, 1]} : vector<32x384xf32> to vector<32x32xf32>
    %76 = vector.shape_cast %75 : vector<32x32xf32> to vector<2x16x32xf32>
    %77 = arith.truncf %76 : vector<2x16x32xf32> to vector<2x16x32xbf16>
    %78 = vector.extract_strided_slice %73 {offsets = [0, 0, 0], sizes = [2, 16, 16], strides = [1, 1, 1]} : vector<8x16x16xbf16> to vector<2x16x16xbf16>
    "tpu.trace_start"() <{level = 10 : i32, message = "bqk,bkd->bqd"}> : () -> ()
    %cst_23 = arith.constant dense<0.000000e+00> : vector<2x16x32xf32>
    %79 = tpu.matmul %78, %77, %cst_23 {dimension_numbers = #tpu.dot_dimension_numbers<[2], [1], [1], [2], [0, 0, 0, 1, 1, 2], [0], [0]>} : vector<2x16x16xbf16>, vector<2x16x32xbf16>, vector<2x16x32xf32> -> vector<2x16x32xf32>
    "tpu.trace_stop"() : () -> ()
    %80 = vector.shape_cast %79 : vector<2x16x32xf32> to vector<32x32xf32>
    %81 = arith.truncf %80 : vector<32x32xf32> to vector<32x32xbf16>
    %82 = vector.extract_strided_slice %74 {offsets = [0, 0], sizes = [32, 128], strides = [1, 1]} : vector<128x128xbf16> to vector<32x128xbf16>
    %cst_24 = arith.constant dense<0.000000e+00> : vector<32x128xf32>
    %83 = tpu.matmul %81, %82, %cst_24 {dimension_numbers = #tpu.dot_dimension_numbers<[1], [0], [0], [1], [0, 0, 1, 1], [], []>} : vector<32x32xbf16>, vector<32x128xbf16>, vector<32x128xf32> -> vector<32x128xf32>
    %84 = vector.extract_strided_slice %33 {offsets = [0, 288], sizes = [32, 32], strides = [1, 1]} : vector<32x384xf32> to vector<32x32xf32>
    %85 = vector.shape_cast %84 : vector<32x32xf32> to vector<2x16x32xf32>
    %86 = arith.truncf %85 : vector<2x16x32xf32> to vector<2x16x32xbf16>
    %87 = vector.extract_strided_slice %73 {offsets = [2, 0, 0], sizes = [2, 16, 16], strides = [1, 1, 1]} : vector<8x16x16xbf16> to vector<2x16x16xbf16>
    "tpu.trace_start"() <{level = 10 : i32, message = "bqk,bkd->bqd"}> : () -> ()
    %cst_25 = arith.constant dense<0.000000e+00> : vector<2x16x32xf32>
    %88 = tpu.matmul %87, %86, %cst_25 {dimension_numbers = #tpu.dot_dimension_numbers<[2], [1], [1], [2], [0, 0, 0, 1, 1, 2], [0], [0]>} : vector<2x16x16xbf16>, vector<2x16x32xbf16>, vector<2x16x32xf32> -> vector<2x16x32xf32>
    "tpu.trace_stop"() : () -> ()
    %89 = vector.shape_cast %88 : vector<2x16x32xf32> to vector<32x32xf32>
    %90 = arith.truncf %89 : vector<32x32xf32> to vector<32x32xbf16>
    %91 = vector.extract_strided_slice %74 {offsets = [32, 0], sizes = [32, 128], strides = [1, 1]} : vector<128x128xbf16> to vector<32x128xbf16>
    %cst_26 = arith.constant dense<0.000000e+00> : vector<32x128xf32>
    %92 = tpu.matmul %90, %91, %cst_26 {dimension_numbers = #tpu.dot_dimension_numbers<[1], [0], [0], [1], [0, 0, 1, 1], [], []>} : vector<32x32xbf16>, vector<32x128xbf16>, vector<32x128xf32> -> vector<32x128xf32>
    %93 = arith.addf %83, %92 : vector<32x128xf32>
    %94 = vector.extract_strided_slice %33 {offsets = [0, 320], sizes = [32, 32], strides = [1, 1]} : vector<32x384xf32> to vector<32x32xf32>
    %95 = vector.shape_cast %94 : vector<32x32xf32> to vector<2x16x32xf32>
    %96 = arith.truncf %95 : vector<2x16x32xf32> to vector<2x16x32xbf16>
    %97 = vector.extract_strided_slice %73 {offsets = [4, 0, 0], sizes = [2, 16, 16], strides = [1, 1, 1]} : vector<8x16x16xbf16> to vector<2x16x16xbf16>
    "tpu.trace_start"() <{level = 10 : i32, message = "bqk,bkd->bqd"}> : () -> ()
    %cst_27 = arith.constant dense<0.000000e+00> : vector<2x16x32xf32>
    %98 = tpu.matmul %97, %96, %cst_27 {dimension_numbers = #tpu.dot_dimension_numbers<[2], [1], [1], [2], [0, 0, 0, 1, 1, 2], [0], [0]>} : vector<2x16x16xbf16>, vector<2x16x32xbf16>, vector<2x16x32xf32> -> vector<2x16x32xf32>
    "tpu.trace_stop"() : () -> ()
    %99 = vector.shape_cast %98 : vector<2x16x32xf32> to vector<32x32xf32>
    %100 = arith.truncf %99 : vector<32x32xf32> to vector<32x32xbf16>
    %101 = vector.extract_strided_slice %74 {offsets = [64, 0], sizes = [32, 128], strides = [1, 1]} : vector<128x128xbf16> to vector<32x128xbf16>
    %cst_28 = arith.constant dense<0.000000e+00> : vector<32x128xf32>
    %102 = tpu.matmul %100, %101, %cst_28 {dimension_numbers = #tpu.dot_dimension_numbers<[1], [0], [0], [1], [0, 0, 1, 1], [], []>} : vector<32x32xbf16>, vector<32x128xbf16>, vector<32x128xf32> -> vector<32x128xf32>
    %103 = arith.addf %93, %102 : vector<32x128xf32>
    %104 = vector.extract_strided_slice %33 {offsets = [0, 352], sizes = [32, 32], strides = [1, 1]} : vector<32x384xf32> to vector<32x32xf32>
    %105 = vector.shape_cast %104 : vector<32x32xf32> to vector<2x16x32xf32>
    %106 = arith.truncf %105 : vector<2x16x32xf32> to vector<2x16x32xbf16>
    %107 = vector.extract_strided_slice %73 {offsets = [6, 0, 0], sizes = [2, 16, 16], strides = [1, 1, 1]} : vector<8x16x16xbf16> to vector<2x16x16xbf16>
    "tpu.trace_start"() <{level = 10 : i32, message = "bqk,bkd->bqd"}> : () -> ()
    %cst_29 = arith.constant dense<0.000000e+00> : vector<2x16x32xf32>
    %108 = tpu.matmul %107, %106, %cst_29 {dimension_numbers = #tpu.dot_dimension_numbers<[2], [1], [1], [2], [0, 0, 0, 1, 1, 2], [0], [0]>} : vector<2x16x16xbf16>, vector<2x16x32xbf16>, vector<2x16x32xf32> -> vector<2x16x32xf32>
    "tpu.trace_stop"() : () -> ()
    %109 = vector.shape_cast %108 : vector<2x16x32xf32> to vector<32x32xf32>
    %110 = arith.truncf %109 : vector<32x32xf32> to vector<32x32xbf16>
    %111 = vector.extract_strided_slice %74 {offsets = [96, 0], sizes = [32, 128], strides = [1, 1]} : vector<128x128xbf16> to vector<32x128xbf16>
    %cst_30 = arith.constant dense<0.000000e+00> : vector<32x128xf32>
    %112 = tpu.matmul %110, %111, %cst_30 {dimension_numbers = #tpu.dot_dimension_numbers<[1], [0], [0], [1], [0, 0, 1, 1], [], []>} : vector<32x32xbf16>, vector<32x128xbf16>, vector<32x128xf32> -> vector<32x128xf32>
    %113 = arith.addf %103, %112 : vector<32x128xf32>
    %c0_31 = arith.constant 0 : index
    %c0_32 = arith.constant 0 : index
    %114 = vector.load %arg7[%c0_31, %c0_32] : memref<1x128xf32, #tpu.memory_space<vmem>>, vector<1x128xf32>
    %115 = vector.broadcast %114 : vector<1x128xf32> to vector<32x128xf32>
    %116 = arith.addf %113, %115 : vector<32x128xf32>
    %117 = vector.shape_cast %116 : vector<32x128xf32> to vector<2x16x128xf32>
    %118 = arith.addf %0, %117 : vector<2x16x128xf32>
    %c0_33 = arith.constant 0 : index
    %c0_34 = arith.constant 0 : index
    %119 = vector.load %arg8[%c0_33, %c0_34] : memref<1x128xf32, #tpu.memory_space<vmem>>, vector<1x128xf32>
    %c0_35 = arith.constant 0 : index
    %c0_36 = arith.constant 0 : index
    %120 = vector.load %arg9[%c0_35, %c0_36] : memref<1x128xf32, #tpu.memory_space<vmem>>, vector<1x128xf32>
    %cst_37 = arith.constant dense<0.000000e+00> : vector<2x16xf32>
    %121 = vector.multi_reduction <add>, %118, %cst_37 [2] : vector<2x16x128xf32> to vector<2x16xf32>
    %122 = vector.shape_cast %121 : vector<2x16xf32> to vector<2x16x1xf32>
    %cst_38 = arith.constant 1.280000e+02 : f32
    %123 = vector.broadcast %cst_38 : f32 to vector<2x16x1xf32>
    %124 = arith.divf %122, %123 : vector<2x16x1xf32>
    %125 = arith.mulf %118, %118 : vector<2x16x128xf32>
    %cst_39 = arith.constant dense<0.000000e+00> : vector<2x16xf32>
    %126 = vector.multi_reduction <add>, %125, %cst_39 [2] : vector<2x16x128xf32> to vector<2x16xf32>
    %127 = vector.shape_cast %126 : vector<2x16xf32> to vector<2x16x1xf32>
    %cst_40 = arith.constant 1.280000e+02 : f32
    %128 = vector.broadcast %cst_40 : f32 to vector<2x16x1xf32>
    %129 = arith.divf %127, %128 : vector<2x16x1xf32>
    %130 = arith.mulf %124, %124 : vector<2x16x1xf32>
    %131 = arith.subf %129, %130 : vector<2x16x1xf32>
    %132 = vector.broadcast %124 : vector<2x16x1xf32> to vector<2x16x128xf32>
    %133 = arith.subf %118, %132 : vector<2x16x128xf32>
    %cst_41 = arith.constant 9.99999997E-7 : f32
    %134 = vector.broadcast %cst_41 : f32 to vector<2x16x1xf32>
    %135 = arith.addf %131, %134 : vector<2x16x1xf32>
    %136 = math.rsqrt %135 : vector<2x16x1xf32>
    %137 = vector.broadcast %136 : vector<2x16x1xf32> to vector<2x16x128xf32>
    %138 = arith.mulf %133, %137 : vector<2x16x128xf32>
    %139 = vector.shape_cast %119 : vector<1x128xf32> to vector<1x1x128xf32>
    %140 = vector.broadcast %139 : vector<1x1x128xf32> to vector<2x16x128xf32>
    %141 = arith.mulf %138, %140 : vector<2x16x128xf32>
    %142 = vector.shape_cast %120 : vector<1x128xf32> to vector<1x1x128xf32>
    %143 = vector.broadcast %142 : vector<1x1x128xf32> to vector<2x16x128xf32>
    %144 = arith.addf %141, %143 : vector<2x16x128xf32>
    %145 = vector.shape_cast %144 : vector<2x16x128xf32> to vector<32x128xf32>
    %146 = arith.truncf %145 : vector<32x128xf32> to vector<32x128xbf16>
    %c0_42 = arith.constant 0 : index
    %c0_43 = arith.constant 0 : index
    %147 = vector.load %arg10[%c0_42, %c0_43] : memref<128x256xbf16, #tpu.memory_space<vmem>>, vector<128x256xbf16>
    %cst_44 = arith.constant dense<0.000000e+00> : vector<32x256xf32>
    %148 = tpu.matmul %146, %147, %cst_44 {dimension_numbers = #tpu.dot_dimension_numbers<[1], [0], [0], [1], [0, 0, 1, 1], [], []>} : vector<32x128xbf16>, vector<128x256xbf16>, vector<32x256xf32> -> vector<32x256xf32>
    %c0_45 = arith.constant 0 : index
    %c0_46 = arith.constant 0 : index
    %149 = vector.load %arg11[%c0_45, %c0_46] : memref<1x256xf32, #tpu.memory_space<vmem>>, vector<1x256xf32>
    %150 = vector.broadcast %149 : vector<1x256xf32> to vector<32x256xf32>
    %151 = arith.addf %148, %150 : vector<32x256xf32>
    %152 = arith.mulf %151, %151 : vector<32x256xf32>
    %153 = arith.mulf %151, %152 : vector<32x256xf32>
    %cst_47 = arith.constant 4.471500e-02 : f32
    %154 = vector.broadcast %cst_47 : f32 to vector<32x256xf32>
    %155 = arith.mulf %154, %153 : vector<32x256xf32>
    %156 = arith.addf %151, %155 : vector<32x256xf32>
    %cst_48 = arith.constant 0.797884583 : f32
    %157 = vector.broadcast %cst_48 : f32 to vector<32x256xf32>
    %158 = arith.mulf %157, %156 : vector<32x256xf32>
    %159 = math.tanh %158 : vector<32x256xf32>
    %cst_49 = arith.constant 1.000000e+00 : f32
    %160 = vector.broadcast %cst_49 : f32 to vector<32x256xf32>
    %161 = arith.addf %160, %159 : vector<32x256xf32>
    %cst_50 = arith.constant 5.000000e-01 : f32
    %162 = vector.broadcast %cst_50 : f32 to vector<32x256xf32>
    %163 = arith.mulf %162, %161 : vector<32x256xf32>
    %164 = arith.mulf %151, %163 : vector<32x256xf32>
    %165 = arith.truncf %164 : vector<32x256xf32> to vector<32x256xbf16>
    %c0_51 = arith.constant 0 : index
    %c0_52 = arith.constant 0 : index
    %166 = vector.load %arg12[%c0_51, %c0_52] : memref<256x128xbf16, #tpu.memory_space<vmem>>, vector<256x128xbf16>
    %cst_53 = arith.constant dense<0.000000e+00> : vector<32x128xf32>
    %167 = tpu.matmul %165, %166, %cst_53 {dimension_numbers = #tpu.dot_dimension_numbers<[1], [0], [0], [1], [0, 0, 1, 1], [], []>} : vector<32x256xbf16>, vector<256x128xbf16>, vector<32x128xf32> -> vector<32x128xf32>
    %c0_54 = arith.constant 0 : index
    %c0_55 = arith.constant 0 : index
    %168 = vector.load %arg13[%c0_54, %c0_55] : memref<1x128xf32, #tpu.memory_space<vmem>>, vector<1x128xf32>
    %169 = vector.broadcast %168 : vector<1x128xf32> to vector<32x128xf32>
    %170 = arith.addf %167, %169 : vector<32x128xf32>
    %171 = vector.shape_cast %170 : vector<32x128xf32> to vector<2x16x128xf32>
    %172 = arith.addf %118, %171 : vector<2x16x128xf32>
    %c0_56 = arith.constant 0 : index
    %c0_57 = arith.constant 0 : index
    %c0_58 = arith.constant 0 : index
    %173 = vector.load %arg14[%c0_56, %c0_57, %c0_58] : memref<2x16x128xf32, #tpu.memory_space<vmem>>, vector<2x16x128xf32>
    tpu.vector_store %arg14[%c0_56, %c0_57, %c0_58], %172 {strides = array<i32>} : memref<2x16x128xf32, #tpu.memory_space<vmem>>, vector<2x16x128xf32>,
    return
  }
  func.func @transform_0(%arg0: i32) -> (i32, i32, i32) {
    %c0_i32 = arith.constant 0 : i32
    %c0_i32_0 = arith.constant 0 : i32
    %c0_i32_1 = arith.constant 0 : i32
    return %arg0, %c0_i32, %c0_i32_0 : i32, i32, i32
  }
  func.func @transform_1(%arg0: i32) -> (i32, i32) {
    %c0_i32 = arith.constant 0 : i32
    %c0_i32_0 = arith.constant 0 : i32
    %c0_i32_1 = arith.constant 0 : i32
    return %c0_i32, %c0_i32_0 : i32, i32
  }
  func.func @transform_2(%arg0: i32) -> (i32, i32) {
    %c0_i32 = arith.constant 0 : i32
    %c0_i32_0 = arith.constant 0 : i32
    %c0_i32_1 = arith.constant 0 : i32
    return %c0_i32, %c0_i32_0 : i32, i32
  }
  func.func @transform_3(%arg0: i32) -> (i32, i32) {
    %c0_i32 = arith.constant 0 : i32
    %c0_i32_0 = arith.constant 0 : i32
    %c0_i32_1 = arith.constant 0 : i32
    return %c0_i32, %c0_i32_0 : i32, i32
  }
  func.func @transform_4(%arg0: i32) -> (i32, i32) {
    %c0_i32 = arith.constant 0 : i32
    %c0_i32_0 = arith.constant 0 : i32
    %c0_i32_1 = arith.constant 0 : i32
    return %c0_i32, %c0_i32_0 : i32, i32
  }
  func.func @transform_5(%arg0: i32) -> (i32, i32) {
    %c0_i32 = arith.constant 0 : i32
    %c0_i32_0 = arith.constant 0 : i32
    %c0_i32_1 = arith.constant 0 : i32
    return %c0_i32, %c0_i32_0 : i32, i32
  }
  func.func @transform_6(%arg0: i32) -> (i32, i32) {
    %c0_i32 = arith.constant 0 : i32
    %c0_i32_0 = arith.constant 0 : i32
    %c0_i32_1 = arith.constant 0 : i32
    return %c0_i32, %c0_i32_0 : i32, i32
  }
  func.func @transform_7(%arg0: i32) -> (i32, i32) {
    %c0_i32 = arith.constant 0 : i32
    %c0_i32_0 = arith.constant 0 : i32
    %c0_i32_1 = arith.constant 0 : i32
    return %c0_i32, %c0_i32_0 : i32, i32
  }
  func.func @transform_8(%arg0: i32) -> (i32, i32) {
    %c0_i32 = arith.constant 0 : i32
    %c0_i32_0 = arith.constant 0 : i32
    %c0_i32_1 = arith.constant 0 : i32
    return %c0_i32, %c0_i32_0 : i32, i32
  }
  func.func @transform_9(%arg0: i32) -> (i32, i32) {
    %c0_i32 = arith.constant 0 : i32
    %c0_i32_0 = arith.constant 0 : i32
    %c0_i32_1 = arith.constant 0 : i32
    return %c0_i32, %c0_i32_0 : i32, i32
  }
  func.func @transform_10(%arg0: i32) -> (i32, i32) {
    %c0_i32 = arith.constant 0 : i32
    %c0_i32_0 = arith.constant 0 : i32
    %c0_i32_1 = arith.constant 0 : i32
    return %c0_i32, %c0_i32_0 : i32, i32
  }
  func.func @transform_11(%arg0: i32) -> (i32, i32) {
    %c0_i32 = arith.constant 0 : i32
    %c0_i32_0 = arith.constant 0 : i32
    %c0_i32_1 = arith.constant 0 : i32
    return %c0_i32, %c0_i32_0 : i32, i32
  }
  func.func @transform_12(%arg0: i32) -> (i32, i32) {
    %c0_i32 = arith.constant 0 : i32
    %c0_i32_0 = arith.constant 0 : i32
    %c0_i32_1 = arith.constant 0 : i32
    return %c0_i32, %c0_i32_0 : i32, i32
  }
  func.func @transform_13(%arg0: i32) -> (i32, i32, i32) {
    %c0_i32 = arith.constant 0 : i32
    %c0_i32_0 = arith.constant 0 : i32
    %c0_i32_1 = arith.constant 0 : i32
    return %arg0, %c0_i32, %c0_i32_0 : i32, i32, i32
  }
}

</mosaic_0001>

<llo_original>
// kernel: tpu_custom_call.1
$region0: #{tpu_custom_call.1}
  #allocation0 [shape = 'u32[]', space=smem, size = 0x4, offset = 0x4, fixed_abs, tag = 'smem constant byte address 0x4 - core index']
  #allocation1 [shape = 'u32[144,128]{1,0:T(1,128)}', space=vmem, size = 0x12000, scoped, tag = 'internal scratch']
  %s0 = inlined_call_operand.hbm [shape: f32[2,16,128], index: 0, kind: input, shape index: {}]
  %s1 = inlined_call_operand.vmem [shape: f32[1,128], index: 1, kind: input, shape index: {}]
  %s2 = inlined_call_operand.vmem [shape: f32[1,128], index: 2, kind: input, shape index: {}]
  %s3 = inlined_call_operand.hbm [shape: bf16[128,384], index: 3, kind: input, shape index: {}]
  %s4 = inlined_call_operand.vmem [shape: f32[1,384], index: 4, kind: input, shape index: {}]
  %s5 = inlined_call_operand.hbm [shape: bf16[128,128], index: 5, kind: input, shape index: {}]
  %s6 = inlined_call_operand.vmem [shape: f32[1,128], index: 6, kind: input, shape index: {}]
  %s7 = inlined_call_operand.vmem [shape: f32[1,128], index: 7, kind: input, shape index: {}]
  %s8 = inlined_call_operand.vmem [shape: f32[1,128], index: 8, kind: input, shape index: {}]
  %s9 = inlined_call_operand.hbm [shape: bf16[128,256], index: 9, kind: input, shape index: {}]
  %s10 = inlined_call_operand.vmem [shape: f32[1,256], index: 10, kind: input, shape index: {}]
  %s11 = inlined_call_operand.hbm [shape: bf16[256,128], index: 11, kind: input, shape index: {}]
  %s12 = inlined_call_operand.vmem [shape: f32[1,128], index: 12, kind: input, shape index: {}]
  %s13 = inlined_call_operand.hbm [shape: f32[2,16,128], index: 13, kind: output, shape index: {}]
  %s14 = sld [smem:[#allocation0]]
  $region82: #{tpu_custom_call.1} parent=0
    _
  %s16 = ssub.s32 1, %s14
  %s17 = scalar_select 0, %s16, %s14
  $region1: #{tpu_custom_call.1} parent=0
    #allocation2 [shape = 'u8[16384]{0}', space=vmem, size = 0x4000, scoped, tag = 'input window, operand 0, single buffered']
    #allocation3 [shape = 's32[1]{0}', space=sflag, size = 0x4, scoped, tag = 'scoped memory for tpu_custom_call.1']
    #allocation4 [shape = 's32[1]{0}', space=sflag, size = 0x4, scoped, tag = 'scoped memory for tpu_custom_call.1']
    #allocation5 [shape = 'u8[98304]{0}', space=vmem, size = 0x18000, scoped, tag = 'input window, operand 3, single buffered']
    #allocation6 [shape = 's32[1]{0}', space=sflag, size = 0x4, scoped, tag = 'scoped memory for tpu_custom_call.1']
    #allocation7 [shape = 'u8[32768]{0}', space=vmem, size = 0x8000, scoped, tag = 'input window, operand 5, single buffered']
    #allocation8 [shape = 'u8[65536]{0}', space=vmem, size = 0x10000, scoped, tag = 'input window, operand 9, single buffered']
    #allocation9 [shape = 's32[1]{0}', space=sflag, size = 0x4, scoped, tag = 'scoped memory for tpu_custom_call.1']
    #allocation10 [shape = 'u8[65536]{0}', space=vmem, size = 0x10000, scoped, tag = 'input window, operand 11, single buffered']
    #allocation11 [shape = 'u8[16384]{0}', space=vmem, size = 0x4000, scoped, tag = 'output window, operand 0, single buffered']
    %18 = vsyncpa [#allocation3], 0
    %19 = vsyncpa [#allocation6], 0
    %20 = vsyncpa [#allocation9], 0
    %21 = vsyncpa [#allocation4], 0
    // Predicated region
    $region2: #{tpu_custom_call.1} parent=1 // pred_check
      _
    $region3: #{tpu_custom_call.1} parent=1 // pred_check_branch
      %23 = sbr.rel (0) target = $region5
    $region4: #{tpu_custom_call.1} parent=1 // pred_region
      %s25 = ssub.s32 512, 512
      %26 = vsyncadd [#allocation3], %s25
      %s27 = sshll.u32 [#allocation2], 4
      %s28 = int_to_ptr.vmem [resolvable:$true] %s27
      %33 = dma.hbm_to_vmem [thread:$0]  %s0, 512, %s28, [#allocation3], 128, 128, 8
    $region5: #{tpu_custom_call.1} parent=1 // pred_fallthru
      _
    // Predicated region
    $region6: #{tpu_custom_call.1} parent=1 // pred_check
      _
    $region7: #{tpu_custom_call.1} parent=1 // pred_check_branch
      %35 = sbr.rel (0) target = $region9
    $region8: #{tpu_custom_call.1} parent=1 // pred_region
      _
    $region9: #{tpu_custom_call.1} parent=1 // pred_fallthru
      _
    // Predicated region
    $region10: #{tpu_custom_call.1} parent=1 // pred_check
      _
    $region11: #{tpu_custom_call.1} parent=1 // pred_check_branch
      %37 = sbr.rel (0) target = $region13
    $region12: #{tpu_custom_call.1} parent=1 // pred_region
      _
    $region13: #{tpu_custom_call.1} parent=1 // pred_fallthru
      _
    // Predicated region
    $region14: #{tpu_custom_call.1} parent=1 // pred_check
      _
    $region15: #{tpu_custom_call.1} parent=1 // pred_check_branch
      %39 = sbr.rel (0) target = $region17
    $region16: #{tpu_custom_call.1} parent=1 // pred_region
      %s41 = ssub.s32 3072, 3072
      %42 = vsyncadd [#allocation6], %s41
      %s43 = sshll.u32 [#allocation5], 4
      %s44 = int_to_ptr.vmem [resolvable:$true] %s43
      %49 = dma.hbm_to_vmem [thread:$0]  %s3, 3072, %s44, [#allocation6], 192, 192, 12
    $region17: #{tpu_custom_call.1} parent=1 // pred_fallthru
      _
    // Predicated region
    $region18: #{tpu_custom_call.1} parent=1 // pred_check
      _
    $region19: #{tpu_custom_call.1} parent=1 // pred_check_branch
      %51 = sbr.rel (0) target = $region21
    $region20: #{tpu_custom_call.1} parent=1 // pred_region
      _
    $region21: #{tpu_custom_call.1} parent=1 // pred_fallthru
      _
    // Predicated region
    $region22: #{tpu_custom_call.1} parent=1 // pred_check
      _
    $region23: #{tpu_custom_call.1} parent=1 // pred_check_branch
      %53 = sbr.rel (0) target = $region25
    $region24: #{tpu_custom_call.1} parent=1 // pred_region
      %s55 = ssub.s32 1024, 1024
      %56 = vsyncadd [#allocation6], %s55
      %s57 = sshll.u32 [#allocation7], 4
      %s58 = int_to_ptr.vmem [resolvable:$true] %s57
      %63 = dma.hbm_to_vmem [thread:$0]  %s5, 1024, %s58, [#allocation6], 64, 64, 4
    $region25: #{tpu_custom_call.1} parent=1 // pred_fallthru
      _
    // Predicated region
    $region26: #{tpu_custom_call.1} parent=1 // pred_check
      _
    $region27: #{tpu_custom_call.1} parent=1 // pred_check_branch
      %65 = sbr.rel (0) target = $region29
    $region28: #{tpu_custom_call.1} parent=1 // pred_region
      _
    $region29: #{tpu_custom_call.1} parent=1 // pred_fallthru
      _
    // Predicated region
    $region30: #{tpu_custom_call.1} parent=1 // pred_check
      _
    $region31: #{tpu_custom_call.1} parent=1 // pred_check_branch
      %67 = sbr.rel (0) target = $region33
    $region32: #{tpu_custom_call.1} parent=1 // pred_region
      _
    $region33: #{tpu_custom_call.1} parent=1 // pred_fallthru
      _
    // Predicated region
    $region34: #{tpu_custom_call.1} parent=1 // pred_check
      _
    $region35: #{tpu_custom_call.1} parent=1 // pred_check_branch
      %69 = sbr.rel (0) target = $region37
    $region36: #{tpu_custom_call.1} parent=1 // pred_region
      _
    $region37: #{tpu_custom_call.1} parent=1 // pred_fallthru
      _
    // Predicated region
    $region38: #{tpu_custom_call.1} parent=1 // pred_check
      _
    $region39: #{tpu_custom_call.1} parent=1 // pred_check_branch
      %71 = sbr.rel (0) target = $region41
    $region40: #{tpu_custom_call.1} parent=1 // pred_region
      %s73 = ssub.s32 2048, 2048
      %74 = vsyncadd [#allocation9], %s73
      %s75 = sshll.u32 [#allocation8], 4
      %s76 = int_to_ptr.vmem [resolvable:$true] %s75
      %81 = dma.hbm_to_vmem [thread:$0]  %s9, 2048, %s76, [#allocation9], 128, 128, 8
    $region41: #{tpu_custom_call.1} parent=1 // pred_fallthru
      _
    // Predicated region
    $region42: #{tpu_custom_call.1} parent=1 // pred_check
      _
    $region43: #{tpu_custom_call.1} parent=1 // pred_check_branch
      %83 = sbr.rel (0) target = $region45
    $region44: #{tpu_custom_call.1} parent=1 // pred_region
      _
    $region45: #{tpu_custom_call.1} parent=1 // pred_fallthru
      _
    // Predicated region
    $region46: #{tpu_custom_call.1} parent=1 // pred_check
      _
    $region47: #{tpu_custom_call.1} parent=1 // pred_check_branch
      %85 = sbr.rel (0) target = $region49
    $region48: #{tpu_custom_call.1} parent=1 // pred_region
      %s87 = ssub.s32 2048, 2048
      %88 = vsyncadd [#allocation9], %s87
      %s89 = sshll.u32 [#allocation10], 4
      %s90 = int_to_ptr.vmem [resolvable:$true] %s89
      %95 = dma.hbm_to_vmem [thread:$0]  %s11, 2048, %s90, [#allocation9], 64, 64, 4
    $region49: #{tpu_custom_call.1} parent=1 // pred_fallthru
      _
    // Predicated region
    $region50: #{tpu_custom_call.1} parent=1 // pred_check
      _
    $region51: #{tpu_custom_call.1} parent=1 // pred_check_branch
      %97 = sbr.rel (0) target = $region53
    $region52: #{tpu_custom_call.1} parent=1 // pred_region
      _
    $region53: #{tpu_custom_call.1} parent=1 // pred_fallthru
      _
    // Predicated region
    $region54: #{tpu_custom_call.1} parent=1 // pred_check
      _
    $region55: #{tpu_custom_call.1} parent=1 // pred_check_branch
      %99 = sbr.rel (0) target = $region57
    $region56: #{tpu_custom_call.1} parent=1 // pred_region
      %100 = dma.done [#allocation3], 512
    $region57: #{tpu_custom_call.1} parent=1 // pred_fallthru
      _
    // Predicated region
    $region58: #{tpu_custom_call.1} parent=1 // pred_check
      _
    $region59: #{tpu_custom_call.1} parent=1 // pred_check_branch
      %102 = sbr.rel (0) target = $region61
    $region60: #{tpu_custom_call.1} parent=1 // pred_region
      %103 = dma.done [#allocation6], 3072
    $region61: #{tpu_custom_call.1} parent=1 // pred_fallthru
      _
    // Predicated region
    $region62: #{tpu_custom_call.1} parent=1 // pred_check
      _
    $region63: #{tpu_custom_call.1} parent=1 // pred_check_branch
      %105 = sbr.rel (0) target = $region65
    $region64: #{tpu_custom_call.1} parent=1 // pred_region
      %106 = dma.done [#allocation6], 1024
    $region65: #{tpu_custom_call.1} parent=1 // pred_fallthru
      _
    // Predicated region
    $region66: #{tpu_custom_call.1} parent=1 // pred_check
      _
    $region67: #{tpu_custom_call.1} parent=1 // pred_check_branch
      %108 = sbr.rel (0) target = $region69
    $region68: #{tpu_custom_call.1} parent=1 // pred_region
      %109 = dma.done [#allocation9], 2048
    $region69: #{tpu_custom_call.1} parent=1 // pred_fallthru
      _
    // Predicated region
    $region70: #{tpu_custom_call.1} parent=1 // pred_check
      _
    $region71: #{tpu_custom_call.1} parent=1 // pred_check_branch
      %111 = sbr.rel (0) target = $region73
    $region72: #{tpu_custom_call.1} parent=1 // pred_region
      %112 = dma.done [#allocation9], 2048
    $region73: #{tpu_custom_call.1} parent=1 // pred_fallthru
      _
    %v114 = vld [vmem:[#allocation2] sm:$0xff]
    %v115 = vld [vmem:[#allocation2 + $0x8] sm:$0xff]
    %v116 = vld [vmem:[#allocation2 + $0x10] sm:$0xff]
    %v117 = vld [vmem:[#allocation2 + $0x18] sm:$0xff]
    %v118 = vld [vmem:[%s1] sm:$0x1]
    %v119 = vld [vmem:[%s2] sm:$0x1]
    %120 = vadd.xlane.f32.xlu0 %v114
    %v121 = vpop.xlane.xlu0 %120
    %122 = vadd.xlane.f32.xlu0 %v115
    %v123 = vpop.xlane.xlu0 %122
    %124 = vadd.xlane.f32.xlu0 %v116
    %v125 = vpop.xlane.xlu0 %124
    %126 = vadd.xlane.f32.xlu0 %v117
    %v127 = vpop.xlane.xlu0 %126
    %v128 = vrcp.pop 128.0
    %v129 = vmul.f32 %v121, %v128
    %v130 = vmul.f32 %v123, %v128
    %v131 = vmul.f32 %v125, %v128
    %v132 = vmul.f32 %v127, %v128
    %v133 = vmul.f32 %v114, %v114
    %v134 = vmul.f32 %v115, %v115
    %v135 = vmul.f32 %v116, %v116
    %v136 = vmul.f32 %v117, %v117
    %137 = vadd.xlane.f32.xlu0 %v133
    %v138 = vpop.xlane.xlu0 %137
    %139 = vadd.xlane.f32.xlu0 %v134
    %v140 = vpop.xlane.xlu0 %139
    %141 = vadd.xlane.f32.xlu0 %v135
    %v142 = vpop.xlane.xlu0 %141
    %143 = vadd.xlane.f32.xlu0 %v136
    %v144 = vpop.xlane.xlu0 %143
    %v145 = vmul.f32 %v138, %v128
    %v146 = vmul.f32 %v140, %v128
    %v147 = vmul.f32 %v142, %v128
    %v148 = vmul.f32 %v144, %v128
    %v149 = vmul.f32 %v129, %v129
    %v150 = vmul.f32 %v130, %v130
    %v151 = vmul.f32 %v131, %v131
    %v152 = vmul.f32 %v132, %v132
    %v153 = vsub.f32 %v145, %v149
    %v154 = vsub.f32 %v146, %v150
    %v155 = vsub.f32 %v147, %v151
    %v156 = vsub.f32 %v148, %v152
    %v157 = vsub.f32 %v114, %v129
    %v158 = vsub.f32 %v115, %v130
    %v159 = vsub.f32 %v116, %v131
    %v160 = vsub.f32 %v117, %v132
    %v161 = vadd.f32 %v153, 1e-06
    %v162 = vadd.f32 %v154, 1e-06
    %v163 = vadd.f32 %v155, 1e-06
    %v164 = vadd.f32 %v156, 1e-06
    %v165 = vrsqrt.pop %v161
    %v166 = vrsqrt.pop %v162
    %v167 = vrsqrt.pop %v163
    %v168 = vrsqrt.pop %v164
    %v169 = vmul.f32 %v157, %v165
    %v170 = vmul.f32 %v158, %v166
    %v171 = vmul.f32 %v159, %v167
    %v172 = vmul.f32 %v160, %v168
    %v174 = vlaneseq
    %v175 = vshrl.u32 %v174, 7
    %v176 = vsub.s32 0, %v175
    %v177 = vrot.slane %v118, %v176
    %v179 = vmul.f32 %v169, %v177
    %v180 = vmul.f32 %v170, %v177
    %v181 = vmul.f32 %v171, %v177
    %v182 = vmul.f32 %v172, %v177
    %v184 = vlaneseq
    %v185 = vshrl.u32 %v184, 7
    %v186 = vsub.s32 0, %v185
    %v187 = vrot.slane %v119, %v186
    %v189 = vadd.f32 %v179, %v187
    %v190 = vadd.f32 %v180, %v187
    %v191 = vadd.f32 %v181, %v187
    %v192 = vadd.f32 %v182, %v187
    %v193 = vpack.c.bf16 %v190, %v189
    %v194 = vpack.c.bf16 %v192, %v191
    %v195 = vld [vmem:[#allocation5] sm:$0xff]
    %v196 = vld [vmem:[#allocation5 + $0x8] sm:$0xf]
    %v197 = vld [vmem:[#allocation5 + $0xc] sm:$0xff]
    %v198 = vld [vmem:[#allocation5 + $0x14] sm:$0xf]
    %v199 = vld [vmem:[#allocation5 + $0x18] sm:$0xff]
    %v200 = vld [vmem:[#allocation5 + $0x20] sm:$0xf]
    %v201 = vld [vmem:[#allocation5 + $0x24] sm:$0xff]
    %v202 = vld [vmem:[#allocation5 + $0x2c] sm:$0xf]
    %v203 = vld [vmem:[#allocation5 + $0x30] sm:$0xff]
    %v204 = vld [vmem:[#allocation5 + $0x38] sm:$0xf]
    %v205 = vld [vmem:[#allocation5 + $0x3c] sm:$0xff]
    %v206 = vld [vmem:[#allocation5 + $0x44] sm:$0xf]
    %v207 = vld [vmem:[#allocation5 + $0x48] sm:$0xff]
    %v208 = vld [vmem:[#allocation5 + $0x50] sm:$0xf]
    %v209 = vld [vmem:[#allocation5 + $0x54] sm:$0xff]
    %v210 = vld [vmem:[#allocation5 + $0x5c] sm:$0xf]
    %v211 = vld [vmem:[#allocation5 + $0x60] sm:$0xff]
    %v212 = vld [vmem:[#allocation5 + $0x68] sm:$0xf]
    %v213 = vld [vmem:[#allocation5 + $0x6c] sm:$0xff]
    %v214 = vld [vmem:[#allocation5 + $0x74] sm:$0xf]
    %v215 = vld [vmem:[#allocation5 + $0x78] sm:$0xff]
    %v216 = vld [vmem:[#allocation5 + $0x80] sm:$0xf]
    %v217 = vld [vmem:[#allocation5 + $0x84] sm:$0xff]
    %v218 = vld [vmem:[#allocation5 + $0x8c] sm:$0xf]
    %v219 = vld [vmem:[#allocation5 + $0x90] sm:$0xff]
    %v220 = vld [vmem:[#allocation5 + $0x98] sm:$0xf]
    %v221 = vld [vmem:[#allocation5 + $0x9c] sm:$0xff]
    %v222 = vld [vmem:[#allocation5 + $0xa4] sm:$0xf]
    %v223 = vld [vmem:[#allocation5 + $0xa8] sm:$0xff]
    %v224 = vld [vmem:[#allocation5 + $0xb0] sm:$0xf]
    %v225 = vld [vmem:[#allocation5 + $0xb4] sm:$0xff]
    %v226 = vld [vmem:[#allocation5 + $0xbc] sm:$0xf]
    %v227 = vld [vmem:[%s4] sm:$0x7]
    %v229 = vlaneseq
    %v230 = vshrl.u32 %v229, 7
    %v231 = vsub.s32 0, %v230
    %v232 = vrot.slane %v227, %v231
    %v233 = vlaneseq
    %v234 = vshrl.u32 %v233, 7
    %v235 = vsub.s32 1, %v234
    %v236 = vrot.slane %v227, %v235
    %v237 = vlaneseq
    %v238 = vshrl.u32 %v237, 7
    %v239 = vsub.s32 2, %v238
    %v240 = vrot.slane %v227, %v239
    %v276 = vunpack.c.l.b16 %v195
    %v277 = vunpack.c.h.b16 %v195
    %v278 = vunpack.c.l.b16 %v196
    %v279 = vunpack.c.l.b16 %v197
    %v280 = vunpack.c.h.b16 %v197
    %v281 = vunpack.c.l.b16 %v198
    %v282 = vunpack.c.l.b16 %v199
    %v283 = vunpack.c.h.b16 %v199
    %v284 = vunpack.c.l.b16 %v200
    %v285 = vunpack.c.l.b16 %v201
    %v286 = vunpack.c.h.b16 %v201
    %v287 = vunpack.c.l.b16 %v202
    %v288 = vunpack.c.l.b16 %v203
    %v289 = vunpack.c.h.b16 %v203
    %v290 = vunpack.c.l.b16 %v204
    %v291 = vunpack.c.l.b16 %v205
    %v292 = vunpack.c.h.b16 %v205
    %v293 = vunpack.c.l.b16 %v206
    %v294 = vunpack.c.l.b16 %v207
    %v295 = vunpack.c.h.b16 %v207
    %v296 = vunpack.c.l.b16 %v208
    %v297 = vunpack.c.l.b16 %v209
    %v298 = vunpack.c.h.b16 %v209
    %v299 = vunpack.c.l.b16 %v210
    %v300 = vunpack.c.l.b16 %v211
    %v301 = vunpack.c.h.b16 %v211
    %v302 = vunpack.c.l.b16 %v212
    %v303 = vunpack.c.l.b16 %v213
    %v304 = vunpack.c.h.b16 %v213
    %v305 = vunpack.c.l.b16 %v214
    %v306 = vunpack.c.l.b16 %v215
    %v307 = vunpack.c.h.b16 %v215
    %v308 = vunpack.c.l.b16 %v216
    %v309 = vunpack.c.l.b16 %v217
    %v310 = vunpack.c.h.b16 %v217
    %v311 = vunpack.c.l.b16 %v218
    %v312 = vunpack.c.l.b16 %v219
    %v313 = vunpack.c.h.b16 %v219
    %v314 = vunpack.c.l.b16 %v220
    %v315 = vunpack.c.l.b16 %v221
    %v316 = vunpack.c.h.b16 %v221
    %v317 = vunpack.c.l.b16 %v222
    %v318 = vunpack.c.l.b16 %v223
    %v319 = vunpack.c.h.b16 %v223
    %v320 = vunpack.c.l.b16 %v224
    %v321 = vunpack.c.l.b16 %v225
    %v322 = vunpack.c.h.b16 %v225
    %v323 = vunpack.c.l.b16 %v226
    %v324 = vpack.c.b16 %v279, %v276
    %v325 = vpack.c.b16 %v280, %v277
    %v326 = vpack.c.b16 %v281, %v278
    %v327 = vpack.c.b16 %v285, %v282
    %v328 = vpack.c.b16 %v286, %v283
    %v329 = vpack.c.b16 %v287, %v284
    %v330 = vpack.c.b16 %v291, %v288
    %v331 = vpack.c.b16 %v292, %v289
    %v332 = vpack.c.b16 %v293, %v290
    %v333 = vpack.c.b16 %v297, %v294
    %v334 = vpack.c.b16 %v298, %v295
    %v335 = vpack.c.b16 %v299, %v296
    %v336 = vpack.c.b16 %v303, %v300
    %v337 = vpack.c.b16 %v304, %v301
    %v338 = vpack.c.b16 %v305, %v302
    %v339 = vpack.c.b16 %v309, %v306
    %v340 = vpack.c.b16 %v310, %v307
    %v341 = vpack.c.b16 %v311, %v308
    %v342 = vpack.c.b16 %v315, %v312
    %v343 = vpack.c.b16 %v316, %v313
    %v344 = vpack.c.b16 %v317, %v314
    %v345 = vpack.c.b16 %v321, %v318
    %v346 = vpack.c.b16 %v322, %v319
    %v347 = vpack.c.b16 %v323, %v320
    %372 = vmatprep.subr.bf16.mxu0 %v325
    %373 = vmatpush1.bf16.msra.mxu0 %v324
    %374 = vmatprep.subr.bf16.mxu0 %v328
    %375 = vmatpush1.bf16.msra.mxu0 %v327
    %376 = vmatprep.subr.bf16.mxu0 %v331
    %377 = vmatpush1.bf16.msra.mxu0 %v330
    %378 = vmatprep.subr.bf16.mxu0 %v334
    %379 = vmatpush1.bf16.msra.mxu0 %v333
    %380 = vmatprep.subr.bf16.mxu0 %v337
    %381 = vmatpush1.bf16.msra.mxu0 %v336
    %382 = vmatprep.subr.bf16.mxu0 %v340
    %383 = vmatpush1.bf16.msra.mxu0 %v339
    %384 = vmatprep.subr.bf16.mxu0 %v343
    %385 = vmatpush1.bf16.msra.mxu0 %v342
    %386 = vmatprep.subr.bf16.mxu0 %v346
    %387 = vmatpush1.bf16.msra.mxu0 %v345
    %388 = vmatprep.subr.bf16.mxu0 0
    %389 = vmatpush1.bf16.msra.mxu0 0
    %390 = vmatprep.subr.bf16.mxu0 0
    %391 = vmatpush1.bf16.msra.mxu0 0
    %392 = vmatprep.subr.bf16.mxu0 0
    %393 = vmatpush1.bf16.msra.mxu0 0
    %394 = vmatprep.subr.bf16.mxu0 0
    %395 = vmatpush1.bf16.msra.mxu0 0
    %396 = vmatprep.subr.bf16.mxu0 0
    %397 = vmatpush1.bf16.msra.mxu0 0
    %398 = vmatprep.subr.bf16.mxu0 0
    %399 = vmatpush1.bf16.msra.mxu0 0
    %400 = vmatprep.subr.bf16.mxu0 0
    %401 = vmatpush1.bf16.msra.mxu0 0
    %402 = vmatprep.subr.bf16.mxu0 0
    %403 = vmatpush1.bf16.msra.mxu0 0
    %404 = vmatprep.mubr.bf16.mxu0 0
    %405 = vmatmul.mubr.bf16.gmra.mrb[0].mxu0 %v193
    %v406 = vpop.f32.mrb[0].mxu0
    %v407 = vadd.f32 %v232, %v406
    %v408 = vpop.f32.mrb[0].mxu0
    %v409 = vadd.f32 %v236, %v408
    %v410 = vpop.f32.mrb[0].mxu0
    %v411 = vadd.f32 %v232, %v410
    %v412 = vpop.f32.mrb[0].mxu0
    %v413 = vadd.f32 %v236, %v412
    %414 = vmatprep.mubr.bf16.mxu0 0
    %415 = vmatmul.mubr.bf16.gmra.mrb[0].mxu0 %v194
    %v416 = vpop.f32.mrb[0].mxu0
    %v417 = vadd.f32 %v232, %v416
    %v418 = vpop.f32.mrb[0].mxu0
    %v419 = vadd.f32 %v236, %v418
    %v420 = vpop.f32.mrb[0].mxu0
    %v421 = vadd.f32 %v232, %v420
    %v422 = vpop.f32.mrb[0].mxu0
    %v423 = vadd.f32 %v236, %v422
    %424 = vdwg.mxu0
    %425 = vmatprep.subr.bf16.mxu0 0
    %426 = vmatpush1.bf16.msra.mxu0 %v326
    %427 = vmatprep.subr.bf16.mxu0 0
    %428 = vmatpush1.bf16.msra.mxu0 %v329
    %429 = vmatprep.subr.bf16.mxu0 0
    %430 = vmatpush1.bf16.msra.mxu0 %v332
    %431 = vmatprep.subr.bf16.mxu0 0
    %432 = vmatpush1.bf16.msra.mxu0 %v335
    %433 = vmatprep.subr.bf16.mxu0 0
    %434 = vmatpush1.bf16.msra.mxu0 %v338
    %435 = vmatprep.subr.bf16.mxu0 0
    %436 = vmatpush1.bf16.msra.mxu0 %v341
    %437 = vmatprep.subr.bf16.mxu0 0
    %438 = vmatpush1.bf16.msra.mxu0 %v344
    %439 = vmatprep.subr.bf16.mxu0 0
    %440 = vmatpush1.bf16.msra.mxu0 %v347
    %441 = vmatprep.subr.bf16.mxu0 0
    %442 = vmatpush1.bf16.msra.mxu0 0
    %443 = vmatprep.subr.bf16.mxu0 0
    %444 = vmatpush1.bf16.msra.mxu0 0
    %445 = vmatprep.subr.bf16.mxu0 0
    %446 = vmatpush1.bf16.msra.mxu0 0
    %447 = vmatprep.subr.bf16.mxu0 0
    %448 = vmatpush1.bf16.msra.mxu0 0
    %449 = vmatprep.subr.bf16.mxu0 0
    %450 = vmatpush1.bf16.msra.mxu0 0
    %451 = vmatprep.subr.bf16.mxu0 0
    %452 = vmatpush1.bf16.msra.mxu0 0
    %453 = vmatprep.subr.bf16.mxu0 0
    %454 = vmatpush1.bf16.msra.mxu0 0
    %455 = vmatprep.subr.bf16.mxu0 0
    %456 = vmatpush1.bf16.msra.mxu0 0
    %457 = vmatprep.mubr.bf16.mxu0 0
    %458 = vmatmul.mubr.bf16.gmra.mrb[0].mxu0 %v193
    %v459 = vpop.f32.mrb[0].mxu0
    %v460 = vadd.f32 %v240, %v459
    %v461 = vpop.f32.mrb[0].mxu0
    %v462 = vpop.f32.mrb[0].mxu0
    %v463 = vadd.f32 %v240, %v462
    %v464 = vpop.f32.mrb[0].mxu0
    %465 = vmatprep.mubr.bf16.mxu0 0
    %466 = vmatmul.mubr.bf16.gmra.mrb[0].mxu0 %v194
    %v467 = vpop.f32.mrb[0].mxu0
    %v468 = vadd.f32 %v240, %v467
    %v469 = vpop.f32.mrb[0].mxu0
    %v470 = vpop.f32.mrb[0].mxu0
    %v471 = vadd.f32 %v240, %v470
    %v472 = vpop.f32.mrb[0].mxu0
    %473 = vdwg.mxu0
    %v474 = vpack.c.bf16 %v411, %v407
    %v475 = vpack.c.bf16 %v421, %v417
    %v476 = vpack.c.bf16 %v413, %v409
    %v477 = vpack.c.bf16 %v423, %v419
    %vm478 = vcmask 261120
    %v480 = vsel %vm478, %v474, 0
    %v483 = vsel %vm478, %v476, 0
    %485 = vmatprep.subr.bf16.mxu0 0
    %486 = vmatpush1.bf16.xpose.msra.mxu0 %v483
    %487 = vmatprep.subr.bf16.mxu0 0
    %488 = vmatpush1.bf16.xpose.msra.mxu0 0
    %489 = vmatprep.subr.bf16.mxu0 0
    %490 = vmatpush1.bf16.xpose.msra.mxu0 0
    %491 = vmatprep.subr.bf16.mxu0 0
    %492 = vmatpush1.bf16.xpose.msra.mxu0 0
    %493 = vmatprep.subr.bf16.mxu0 0
    %494 = vmatpush1.bf16.xpose.msra.mxu0 0
    %495 = vmatprep.subr.bf16.mxu0 0
    %496 = vmatpush1.bf16.xpose.msra.mxu0 0
    %497 = vmatprep.subr.bf16.mxu0 0
    %498 = vmatpush1.bf16.xpose.msra.mxu0 0
    %499 = vmatprep.subr.bf16.mxu0 0
    %500 = vmatpush1.bf16.xpose.msra.mxu0 0
    %501 = vmatprep.subr.bf16.mxu0 0
    %502 = vmatpush1.bf16.xpose.msra.mxu0 0
    %503 = vmatprep.subr.bf16.mxu0 0
    %504 = vmatpush1.bf16.xpose.msra.mxu0 0
    %505 = vmatprep.subr.bf16.mxu0 0
    %506 = vmatpush1.bf16.xpose.msra.mxu0 0
    %507 = vmatprep.subr.bf16.mxu0 0
    %508 = vmatpush1.bf16.xpose.msra.mxu0 0
    %509 = vmatprep.subr.bf16.mxu0 0
    %510 = vmatpush1.bf16.xpose.msra.mxu0 0
    %511 = vmatprep.subr.bf16.mxu0 0
    %512 = vmatpush1.bf16.xpose.msra.mxu0 0
    %513 = vmatprep.subr.bf16.mxu0 0
    %514 = vmatpush1.bf16.xpose.msra.mxu0 0
    %515 = vmatprep.subr.bf16.mxu0 0
    %516 = vmatpush1.bf16.xpose.msra.mxu0 0
    %517 = vmatprep.mubr.bf16.mxu0 0
    %518 = vmatmul.mubr.bf16.gmra.mrb[0].mxu0 %v480
    %v519 = vpop.f32.mrb[0].mxu0
    %v520 = vadd.f32 0.0, %v519
    %v521 = vpop.f32.mrb[0].mxu0
    %v522 = vpop.f32.mrb[0].mxu0
    %v523 = vadd.f32 0.0, %v522
    %v524 = vpop.f32.mrb[0].mxu0
    %525 = vdwg.mxu0
    %v527 = vsel %vm478, %v475, 0
    %v530 = vsel %vm478, %v477, 0
    %532 = vmatprep.subr.bf16.mxu0 0
    %533 = vmatpush1.bf16.xpose.msra.mxu0 %v530
    %534 = vmatprep.subr.bf16.mxu0 0
    %535 = vmatpush1.bf16.xpose.msra.mxu0 0
    %536 = vmatprep.subr.bf16.mxu0 0
    %537 = vmatpush1.bf16.xpose.msra.mxu0 0
    %538 = vmatprep.subr.bf16.mxu0 0
    %539 = vmatpush1.bf16.xpose.msra.mxu0 0
    %540 = vmatprep.subr.bf16.mxu0 0
    %541 = vmatpush1.bf16.xpose.msra.mxu0 0
    %542 = vmatprep.subr.bf16.mxu0 0
    %543 = vmatpush1.bf16.xpose.msra.mxu0 0
    %544 = vmatprep.subr.bf16.mxu0 0
    %545 = vmatpush1.bf16.xpose.msra.mxu0 0
    %546 = vmatprep.subr.bf16.mxu0 0
    %547 = vmatpush1.bf16.xpose.msra.mxu0 0
    %548 = vmatprep.subr.bf16.mxu0 0
    %549 = vmatpush1.bf16.xpose.msra.mxu0 0
    %550 = vmatprep.subr.bf16.mxu0 0
    %551 = vmatpush1.bf16.xpose.msra.mxu0 0
    %552 = vmatprep.subr.bf16.mxu0 0
    %553 = vmatpush1.bf16.xpose.msra.mxu0 0
    %554 = vmatprep.subr.bf16.mxu0 0
    %555 = vmatpush1.bf16.xpose.msra.mxu0 0
    %556 = vmatprep.subr.bf16.mxu0 0
    %557 = vmatpush1.bf16.xpose.msra.mxu0 0
    %558 = vmatprep.subr.bf16.mxu0 0
    %559 = vmatpush1.bf16.xpose.msra.mxu0 0
    %560 = vmatprep.subr.bf16.mxu0 0
    %561 = vmatpush1.bf16.xpose.msra.mxu0 0
    %562 = vmatprep.subr.bf16.mxu0 0
    %563 = vmatpush1.bf16.xpose.msra.mxu0 0
    %564 = vmatprep.mubr.bf16.mxu0 0
    %565 = vmatmul.mubr.bf16.gmra.mrb[0].mxu0 %v527
    %v566 = vpop.f32.mrb[0].mxu0
    %v567 = vadd.f32 0.0, %v566
    %v568 = vpop.f32.mrb[0].mxu0
    %v569 = vpop.f32.mrb[0].mxu0
    %v570 = vadd.f32 0.0, %v569
    %v571 = vpop.f32.mrb[0].mxu0
    %572 = vdwg.mxu0
    %574 = vrot.lane.b32.xlu0 %v474, 96
    %v575 = vpop.permute.xlu0 %574
    %577 = vrot.lane.b32.xlu0 %v476, 96
    %v578 = vpop.permute.xlu0 %577
    %v580 = vsel %vm478, %v575, 0
    %v583 = vsel %vm478, %v578, 0
    %585 = vmatprep.subr.bf16.mxu0 0
    %586 = vmatpush1.bf16.xpose.msra.mxu0 %v583
    %587 = vmatprep.subr.bf16.mxu0 0
    %588 = vmatpush1.bf16.xpose.msra.mxu0 0
    %589 = vmatprep.subr.bf16.mxu0 0
    %590 = vmatpush1.bf16.xpose.msra.mxu0 0
    %591 = vmatprep.subr.bf16.mxu0 0
    %592 = vmatpush1.bf16.xpose.msra.mxu0 0
    %593 = vmatprep.subr.bf16.mxu0 0
    %594 = vmatpush1.bf16.xpose.msra.mxu0 0
    %595 = vmatprep.subr.bf16.mxu0 0
    %596 = vmatpush1.bf16.xpose.msra.mxu0 0
    %597 = vmatprep.subr.bf16.mxu0 0
    %598 = vmatpush1.bf16.xpose.msra.mxu0 0
    %599 = vmatprep.subr.bf16.mxu0 0
    %600 = vmatpush1.bf16.xpose.msra.mxu0 0
    %601 = vmatprep.subr.bf16.mxu0 0
    %602 = vmatpush1.bf16.xpose.msra.mxu0 0
    %603 = vmatprep.subr.bf16.mxu0 0
    %604 = vmatpush1.bf16.xpose.msra.mxu0 0
    %605 = vmatprep.subr.bf16.mxu0 0
    %606 = vmatpush1.bf16.xpose.msra.mxu0 0
    %607 = vmatprep.subr.bf16.mxu0 0
    %608 = vmatpush1.bf16.xpose.msra.mxu0 0
    %609 = vmatprep.subr.bf16.mxu0 0
    %610 = vmatpush1.bf16.xpose.msra.mxu0 0
    %611 = vmatprep.subr.bf16.mxu0 0
    %612 = vmatpush1.bf16.xpose.msra.mxu0 0
    %613 = vmatprep.subr.bf16.mxu0 0
    %614 = vmatpush1.bf16.xpose.msra.mxu0 0
    %615 = vmatprep.subr.bf16.mxu0 0
    %616 = vmatpush1.bf16.xpose.msra.mxu0 0
    %617 = vmatprep.mubr.bf16.mxu0 0
    %618 = vmatmul.mubr.bf16.gmra.mrb[0].mxu0 %v580
    %v619 = vpop.f32.mrb[0].mxu0
    %v620 = vadd.f32 0.0, %v619
    %v621 = vpop.f32.mrb[0].mxu0
    %v622 = vpop.f32.mrb[0].mxu0
    %v623 = vadd.f32 0.0, %v622
    %v624 = vpop.f32.mrb[0].mxu0
    %625 = vdwg.mxu0
    %627 = vrot.lane.b32.xlu0 %v475, 96
    %v628 = vpop.permute.xlu0 %627
    %630 = vrot.lane.b32.xlu0 %v477, 96
    %v631 = vpop.permute.xlu0 %630
    %v633 = vsel %vm478, %v628, 0
    %v636 = vsel %vm478, %v631, 0
    %638 = vmatprep.subr.bf16.mxu0 0
    %639 = vmatpush1.bf16.xpose.msra.mxu0 %v636
    %640 = vmatprep.subr.bf16.mxu0 0
    %641 = vmatpush1.bf16.xpose.msra.mxu0 0
    %642 = vmatprep.subr.bf16.mxu0 0
    %643 = vmatpush1.bf16.xpose.msra.mxu0 0
    %644 = vmatprep.subr.bf16.mxu0 0
    %645 = vmatpush1.bf16.xpose.msra.mxu0 0
    %646 = vmatprep.subr.bf16.mxu0 0
    %647 = vmatpush1.bf16.xpose.msra.mxu0 0
    %648 = vmatprep.subr.bf16.mxu0 0
    %649 = vmatpush1.bf16.xpose.msra.mxu0 0
    %650 = vmatprep.subr.bf16.mxu0 0
    %651 = vmatpush1.bf16.xpose.msra.mxu0 0
    %652 = vmatprep.subr.bf16.mxu0 0
    %653 = vmatpush1.bf16.xpose.msra.mxu0 0
    %654 = vmatprep.subr.bf16.mxu0 0
    %655 = vmatpush1.bf16.xpose.msra.mxu0 0
    %656 = vmatprep.subr.bf16.mxu0 0
    %657 = vmatpush1.bf16.xpose.msra.mxu0 0
    %658 = vmatprep.subr.bf16.mxu0 0
    %659 = vmatpush1.bf16.xpose.msra.mxu0 0
    %660 = vmatprep.subr.bf16.mxu0 0
    %661 = vmatpush1.bf16.xpose.msra.mxu0 0
    %662 = vmatprep.subr.bf16.mxu0 0
    %663 = vmatpush1.bf16.xpose.msra.mxu0 0
    %664 = vmatprep.subr.bf16.mxu0 0
    %665 = vmatpush1.bf16.xpose.msra.mxu0 0
    %666 = vmatprep.subr.bf16.mxu0 0
    %667 = vmatpush1.bf16.xpose.msra.mxu0 0
    %668 = vmatprep.subr.bf16.mxu0 0
    %669 = vmatpush1.bf16.xpose.msra.mxu0 0
    %670 = vmatprep.mubr.bf16.mxu0 0
    %671 = vmatmul.mubr.bf16.gmra.mrb[0].mxu0 %v633
    %v672 = vpop.f32.mrb[0].mxu0
    %v673 = vadd.f32 0.0, %v672
    %v674 = vpop.f32.mrb[0].mxu0
    %v675 = vpop.f32.mrb[0].mxu0
    %v676 = vadd.f32 0.0, %v675
    %v677 = vpop.f32.mrb[0].mxu0
    %678 = vdwg.mxu0
    %679 = vrot.lane.b32.xlu0 %v474, 64
    %v680 = vpop.permute.xlu0 %679
    %681 = vrot.lane.b32.xlu0 %v476, 64
    %v682 = vpop.permute.xlu0 %681
    %v684 = vsel %vm478, %v680, 0
    %v687 = vsel %vm478, %v682, 0
    %689 = vmatprep.subr.bf16.mxu0 0
    %690 = vmatpush1.bf16.xpose.msra.mxu0 %v687
    %691 = vmatprep.subr.bf16.mxu0 0
    %692 = vmatpush1.bf16.xpose.msra.mxu0 0
    %693 = vmatprep.subr.bf16.mxu0 0
    %694 = vmatpush1.bf16.xpose.msra.mxu0 0
    %695 = vmatprep.subr.bf16.mxu0 0
    %696 = vmatpush1.bf16.xpose.msra.mxu0 0
    %697 = vmatprep.subr.bf16.mxu0 0
    %698 = vmatpush1.bf16.xpose.msra.mxu0 0
    %699 = vmatprep.subr.bf16.mxu0 0
    %700 = vmatpush1.bf16.xpose.msra.mxu0 0
    %701 = vmatprep.subr.bf16.mxu0 0
    %702 = vmatpush1.bf16.xpose.msra.mxu0 0
    %703 = vmatprep.subr.bf16.mxu0 0
    %704 = vmatpush1.bf16.xpose.msra.mxu0 0
    %705 = vmatprep.subr.bf16.mxu0 0
    %706 = vmatpush1.bf16.xpose.msra.mxu0 0
    %707 = vmatprep.subr.bf16.mxu0 0
    %708 = vmatpush1.bf16.xpose.msra.mxu0 0
    %709 = vmatprep.subr.bf16.mxu0 0
    %710 = vmatpush1.bf16.xpose.msra.mxu0 0
    %711 = vmatprep.subr.bf16.mxu0 0
    %712 = vmatpush1.bf16.xpose.msra.mxu0 0
    %713 = vmatprep.subr.bf16.mxu0 0
    %714 = vmatpush1.bf16.xpose.msra.mxu0 0
    %715 = vmatprep.subr.bf16.mxu0 0
    %716 = vmatpush1.bf16.xpose.msra.mxu0 0
    %717 = vmatprep.subr.bf16.mxu0 0
    %718 = vmatpush1.bf16.xpose.msra.mxu0 0
    %719 = vmatprep.subr.bf16.mxu0 0
    %720 = vmatpush1.bf16.xpose.msra.mxu0 0
    %721 = vmatprep.mubr.bf16.mxu0 0
    %722 = vmatmul.mubr.bf16.gmra.mrb[0].mxu0 %v684
    %v723 = vpop.f32.mrb[0].mxu0
    %v724 = vadd.f32 0.0, %v723
    %v725 = vpop.f32.mrb[0].mxu0
    %v726 = vpop.f32.mrb[0].mxu0
    %v727 = vadd.f32 0.0, %v726
    %v728 = vpop.f32.mrb[0].mxu0
    %729 = vdwg.mxu0
    %730 = vrot.lane.b32.xlu0 %v475, 64
    %v731 = vpop.permute.xlu0 %730
    %732 = vrot.lane.b32.xlu0 %v477, 64
    %v733 = vpop.permute.xlu0 %732
    %v735 = vsel %vm478, %v731, 0
    %v738 = vsel %vm478, %v733, 0
    %740 = vmatprep.subr.bf16.mxu0 0
    %741 = vmatpush1.bf16.xpose.msra.mxu0 %v738
    %742 = vmatprep.subr.bf16.mxu0 0
    %743 = vmatpush1.bf16.xpose.msra.mxu0 0
    %744 = vmatprep.subr.bf16.mxu0 0
    %745 = vmatpush1.bf16.xpose.msra.mxu0 0
    %746 = vmatprep.subr.bf16.mxu0 0
    %747 = vmatpush1.bf16.xpose.msra.mxu0 0
    %748 = vmatprep.subr.bf16.mxu0 0
    %749 = vmatpush1.bf16.xpose.msra.mxu0 0
    %750 = vmatprep.subr.bf16.mxu0 0
    %751 = vmatpush1.bf16.xpose.msra.mxu0 0
    %752 = vmatprep.subr.bf16.mxu0 0
    %753 = vmatpush1.bf16.xpose.msra.mxu0 0
    %754 = vmatprep.subr.bf16.mxu0 0
    %755 = vmatpush1.bf16.xpose.msra.mxu0 0
    %756 = vmatprep.subr.bf16.mxu0 0
    %757 = vmatpush1.bf16.xpose.msra.mxu0 0
    %758 = vmatprep.subr.bf16.mxu0 0
    %759 = vmatpush1.bf16.xpose.msra.mxu0 0
    %760 = vmatprep.subr.bf16.mxu0 0
    %761 = vmatpush1.bf16.xpose.msra.mxu0 0
    %762 = vmatprep.subr.bf16.mxu0 0
    %763 = vmatpush1.bf16.xpose.msra.mxu0 0
    %764 = vmatprep.subr.bf16.mxu0 0
    %765 = vmatpush1.bf16.xpose.msra.mxu0 0
    %766 = vmatprep.subr.bf16.mxu0 0
    %767 = vmatpush1.bf16.xpose.msra.mxu0 0
    %768 = vmatprep.subr.bf16.mxu0 0
    %769 = vmatpush1.bf16.xpose.msra.mxu0 0
    %770 = vmatprep.subr.bf16.mxu0 0
    %771 = vmatpush1.bf16.xpose.msra.mxu0 0
    %772 = vmatprep.mubr.bf16.mxu0 0
    %773 = vmatmul.mubr.bf16.gmra.mrb[0].mxu0 %v735
    %v774 = vpop.f32.mrb[0].mxu0
    %v775 = vadd.f32 0.0, %v774
    %v776 = vpop.f32.mrb[0].mxu0
    %v777 = vpop.f32.mrb[0].mxu0
    %v778 = vadd.f32 0.0, %v777
    %v779 = vpop.f32.mrb[0].mxu0
    %780 = vdwg.mxu0
    %781 = vrot.lane.b32.xlu0 %v474, 32
    %v782 = vpop.permute.xlu0 %781
    %783 = vrot.lane.b32.xlu0 %v476, 32
    %v784 = vpop.permute.xlu0 %783
    %v786 = vsel %vm478, %v782, 0
    %v789 = vsel %vm478, %v784, 0
    %791 = vmatprep.subr.bf16.mxu0 0
    %792 = vmatpush1.bf16.xpose.msra.mxu0 %v789
    %793 = vmatprep.subr.bf16.mxu0 0
    %794 = vmatpush1.bf16.xpose.msra.mxu0 0
    %795 = vmatprep.subr.bf16.mxu0 0
    %796 = vmatpush1.bf16.xpose.msra.mxu0 0
    %797 = vmatprep.subr.bf16.mxu0 0
    %798 = vmatpush1.bf16.xpose.msra.mxu0 0
    %799 = vmatprep.subr.bf16.mxu0 0
    %800 = vmatpush1.bf16.xpose.msra.mxu0 0
    %801 = vmatprep.subr.bf16.mxu0 0
    %802 = vmatpush1.bf16.xpose.msra.mxu0 0
    %803 = vmatprep.subr.bf16.mxu0 0
    %804 = vmatpush1.bf16.xpose.msra.mxu0 0
    %805 = vmatprep.subr.bf16.mxu0 0
    %806 = vmatpush1.bf16.xpose.msra.mxu0 0
    %807 = vmatprep.subr.bf16.mxu0 0
    %808 = vmatpush1.bf16.xpose.msra.mxu0 0
    %809 = vmatprep.subr.bf16.mxu0 0
    %810 = vmatpush1.bf16.xpose.msra.mxu0 0
    %811 = vmatprep.subr.bf16.mxu0 0
    %812 = vmatpush1.bf16.xpose.msra.mxu0 0
    %813 = vmatprep.subr.bf16.mxu0 0
    %814 = vmatpush1.bf16.xpose.msra.mxu0 0
    %815 = vmatprep.subr.bf16.mxu0 0
    %816 = vmatpush1.bf16.xpose.msra.mxu0 0
    %817 = vmatprep.subr.bf16.mxu0 0
    %818 = vmatpush1.bf16.xpose.msra.mxu0 0
    %819 = vmatprep.subr.bf16.mxu0 0
    %820 = vmatpush1.bf16.xpose.msra.mxu0 0
    %821 = vmatprep.subr.bf16.mxu0 0
    %822 = vmatpush1.bf16.xpose.msra.mxu0 0
    %823 = vmatprep.mubr.bf16.mxu0 0
    %824 = vmatmul.mubr.bf16.gmra.mrb[0].mxu0 %v786
    %v825 = vpop.f32.mrb[0].mxu0
    %v826 = vadd.f32 0.0, %v825
    %v827 = vpop.f32.mrb[0].mxu0
    %v828 = vpop.f32.mrb[0].mxu0
    %v829 = vadd.f32 0.0, %v828
    %v830 = vpop.f32.mrb[0].mxu0
    %831 = vdwg.mxu0
    %832 = vrot.lane.b32.xlu0 %v475, 32
    %v833 = vpop.permute.xlu0 %832
    %834 = vrot.lane.b32.xlu0 %v477, 32
    %v835 = vpop.permute.xlu0 %834
    %v837 = vsel %vm478, %v833, 0
    %v840 = vsel %vm478, %v835, 0
    %842 = vmatprep.subr.bf16.mxu0 0
    %843 = vmatpush1.bf16.xpose.msra.mxu0 %v840
    %844 = vmatprep.subr.bf16.mxu0 0
    %845 = vmatpush1.bf16.xpose.msra.mxu0 0
    %846 = vmatprep.subr.bf16.mxu0 0
    %847 = vmatpush1.bf16.xpose.msra.mxu0 0
    %848 = vmatprep.subr.bf16.mxu0 0
    %849 = vmatpush1.bf16.xpose.msra.mxu0 0
    %850 = vmatprep.subr.bf16.mxu0 0
    %851 = vmatpush1.bf16.xpose.msra.mxu0 0
    %852 = vmatprep.subr.bf16.mxu0 0
    %853 = vmatpush1.bf16.xpose.msra.mxu0 0
    %854 = vmatprep.subr.bf16.mxu0 0
    %855 = vmatpush1.bf16.xpose.msra.mxu0 0
    %856 = vmatprep.subr.bf16.mxu0 0
    %857 = vmatpush1.bf16.xpose.msra.mxu0 0
    %858 = vmatprep.subr.bf16.mxu0 0
    %859 = vmatpush1.bf16.xpose.msra.mxu0 0
    %860 = vmatprep.subr.bf16.mxu0 0
    %861 = vmatpush1.bf16.xpose.msra.mxu0 0
    %862 = vmatprep.subr.bf16.mxu0 0
    %863 = vmatpush1.bf16.xpose.msra.mxu0 0
    %864 = vmatprep.subr.bf16.mxu0 0
    %865 = vmatpush1.bf16.xpose.msra.mxu0 0
    %866 = vmatprep.subr.bf16.mxu0 0
    %867 = vmatpush1.bf16.xpose.msra.mxu0 0
    %868 = vmatprep.subr.bf16.mxu0 0
    %869 = vmatpush1.bf16.xpose.msra.mxu0 0
    %870 = vmatprep.subr.bf16.mxu0 0
    %871 = vmatpush1.bf16.xpose.msra.mxu0 0
    %872 = vmatprep.subr.bf16.mxu0 0
    %873 = vmatpush1.bf16.xpose.msra.mxu0 0
    %874 = vmatprep.mubr.bf16.mxu0 0
    %875 = vmatmul.mubr.bf16.gmra.mrb[0].mxu0 %v837
    %v876 = vpop.f32.mrb[0].mxu0
    %v877 = vadd.f32 0.0, %v876
    %v878 = vpop.f32.mrb[0].mxu0
    %v879 = vpop.f32.mrb[0].mxu0
    %v880 = vadd.f32 0.0, %v879
    %v881 = vpop.f32.mrb[0].mxu0
    %882 = vdwg.mxu0
    %vm883 = vcmask 130048
    %v884 = vsel %vm883, %v520, -inf
    %885 = vmax.xlane.f32.xlu0 %v884
    %v886 = vpop.xlane.xlu0 %885
    %v887 = vsel %vm883, %v523, -inf
    %888 = vmax.xlane.f32.xlu0 %v887
    %v889 = vpop.xlane.xlu0 %888
    %v890 = vsel %vm883, %v567, -inf
    %891 = vmax.xlane.f32.xlu0 %v890
    %v892 = vpop.xlane.xlu0 %891
    %v893 = vsel %vm883, %v570, -inf
    %894 = vmax.xlane.f32.xlu0 %v893
    %v895 = vpop.xlane.xlu0 %894
    %v896 = vsel %vm883, %v620, -inf
    %897 = vmax.xlane.f32.xlu0 %v896
    %v898 = vpop.xlane.xlu0 %897
    %v899 = vsel %vm883, %v623, -inf
    %900 = vmax.xlane.f32.xlu0 %v899
    %v901 = vpop.xlane.xlu0 %900
    %v902 = vsel %vm883, %v673, -inf
    %903 = vmax.xlane.f32.xlu0 %v902
    %v904 = vpop.xlane.xlu0 %903
    %v905 = vsel %vm883, %v676, -inf
    %906 = vmax.xlane.f32.xlu0 %v905
    %v907 = vpop.xlane.xlu0 %906
    %v908 = vsel %vm883, %v724, -inf
    %909 = vmax.xlane.f32.xlu0 %v908
    %v910 = vpop.xlane.xlu0 %909
    %v911 = vsel %vm883, %v727, -inf
    %912 = vmax.xlane.f32.xlu0 %v911
    %v913 = vpop.xlane.xlu0 %912
    %v914 = vsel %vm883, %v775, -inf
    %915 = vmax.xlane.f32.xlu0 %v914
    %v916 = vpop.xlane.xlu0 %915
    %v917 = vsel %vm883, %v778, -inf
    %918 = vmax.xlane.f32.xlu0 %v917
    %v919 = vpop.xlane.xlu0 %918
    %v920 = vsel %vm883, %v826, -inf
    %921 = vmax.xlane.f32.xlu0 %v920
    %v922 = vpop.xlane.xlu0 %921
    %v923 = vsel %vm883, %v829, -inf
    %924 = vmax.xlane.f32.xlu0 %v923
    %v925 = vpop.xlane.xlu0 %924
    %v926 = vsel %vm883, %v877, -inf
    %927 = vmax.xlane.f32.xlu0 %v926
    %v928 = vpop.xlane.xlu0 %927
    %v929 = vsel %vm883, %v880, -inf
    %930 = vmax.xlane.f32.xlu0 %v929
    %v931 = vpop.xlane.xlu0 %930
    %v932 = vsub.f32 %v520, %v886
    %v933 = vsub.f32 %v523, %v889
    %v934 = vsub.f32 %v567, %v892
    %v935 = vsub.f32 %v570, %v895
    %v936 = vsub.f32 %v620, %v898
    %v937 = vsub.f32 %v623, %v901
    %v938 = vsub.f32 %v673, %v904
    %v939 = vsub.f32 %v676, %v907
    %v940 = vsub.f32 %v724, %v910
    %v941 = vsub.f32 %v727, %v913
    %v942 = vsub.f32 %v775, %v916
    %v943 = vsub.f32 %v778, %v919
    %v944 = vsub.f32 %v826, %v922
    %v945 = vsub.f32 %v829, %v925
    %v946 = vsub.f32 %v877, %v928
    %v947 = vsub.f32 %v880, %v931
    %v948 = vmul.f32 %v932, 1.442695
    %v949 = vpow.pop %v948
    %v950 = vmul.f32 %v933, 1.442695
    %v951 = vpow.pop %v950
    %v952 = vmul.f32 %v934, 1.442695
    %v953 = vpow.pop %v952
    %v954 = vmul.f32 %v935, 1.442695
    %v955 = vpow.pop %v954
    %v956 = vmul.f32 %v936, 1.442695
    %v957 = vpow.pop %v956
    %v958 = vmul.f32 %v937, 1.442695
    %v959 = vpow.pop %v958
    %v960 = vmul.f32 %v938, 1.442695
    %v961 = vpow.pop %v960
    %v962 = vmul.f32 %v939, 1.442695
    %v963 = vpow.pop %v962
    %v964 = vmul.f32 %v940, 1.442695
    %v965 = vpow.pop %v964
    %v966 = vmul.f32 %v941, 1.442695
    %v967 = vpow.pop %v966
    %v968 = vmul.f32 %v942, 1.442695
    %v969 = vpow.pop %v968
    %v970 = vmul.f32 %v943, 1.442695
    %v971 = vpow.pop %v970
    %v972 = vmul.f32 %v944, 1.442695
    %v973 = vpow.pop %v972
    %v974 = vmul.f32 %v945, 1.442695
    %v975 = vpow.pop %v974
    %v976 = vmul.f32 %v946, 1.442695
    %v977 = vpow.pop %v976
    %v978 = vmul.f32 %v947, 1.442695
    %v979 = vpow.pop %v978
    %v980 = vsel %vm883, %v949, 0.0
    %981 = vadd.xlane.f32.xlu0 %v980
    %v982 = vpop.xlane.xlu0 %981
    %v983 = vsel %vm883, %v951, 0.0
    %984 = vadd.xlane.f32.xlu0 %v983
    %v985 = vpop.xlane.xlu0 %984
    %v986 = vsel %vm883, %v953, 0.0
    %987 = vadd.xlane.f32.xlu0 %v986
    %v988 = vpop.xlane.xlu0 %987
    %v989 = vsel %vm883, %v955, 0.0
    %990 = vadd.xlane.f32.xlu0 %v989
    %v991 = vpop.xlane.xlu0 %990
    %v992 = vsel %vm883, %v957, 0.0
    %993 = vadd.xlane.f32.xlu0 %v992
    %v994 = vpop.xlane.xlu0 %993
    %v995 = vsel %vm883, %v959, 0.0
    %996 = vadd.xlane.f32.xlu0 %v995
    %v997 = vpop.xlane.xlu0 %996
    %v998 = vsel %vm883, %v961, 0.0
    %999 = vadd.xlane.f32.xlu0 %v998
    %v1000 = vpop.xlane.xlu0 %999
    %v1001 = vsel %vm883, %v963, 0.0
    %1002 = vadd.xlane.f32.xlu0 %v1001
    %v1003 = vpop.xlane.xlu0 %1002
    %v1004 = vsel %vm883, %v965, 0.0
    %1005 = vadd.xlane.f32.xlu0 %v1004
    %v1006 = vpop.xlane.xlu0 %1005
    %v1007 = vsel %vm883, %v967, 0.0
    %1008 = vadd.xlane.f32.xlu0 %v1007
    %v1009 = vpop.xlane.xlu0 %1008
    %v1010 = vsel %vm883, %v969, 0.0
    %1011 = vadd.xlane.f32.xlu0 %v1010
    %v1012 = vpop.xlane.xlu0 %1011
    %v1013 = vsel %vm883, %v971, 0.0
    %1014 = vadd.xlane.f32.xlu0 %v1013
    %v1015 = vpop.xlane.xlu0 %1014
    %v1016 = vsel %vm883, %v973, 0.0
    %1017 = vadd.xlane.f32.xlu0 %v1016
    %v1018 = vpop.xlane.xlu0 %1017
    %v1019 = vsel %vm883, %v975, 0.0
    %1020 = vadd.xlane.f32.xlu0 %v1019
    %v1021 = vpop.xlane.xlu0 %1020
    %v1022 = vsel %vm883, %v977, 0.0
    %1023 = vadd.xlane.f32.xlu0 %v1022
    %v1024 = vpop.xlane.xlu0 %1023
    %v1025 = vsel %vm883, %v979, 0.0
    %1026 = vadd.xlane.f32.xlu0 %v1025
    %v1027 = vpop.xlane.xlu0 %1026
    %v1028 = vrcp.pop %v982
    %v1029 = vrcp.pop %v985
    %v1030 = vrcp.pop %v988
    %v1031 = vrcp.pop %v991
    %v1032 = vrcp.pop %v994
    %v1033 = vrcp.pop %v997
    %v1034 = vrcp.pop %v1000
    %v1035 = vrcp.pop %v1003
    %v1036 = vrcp.pop %v1006
    %v1037 = vrcp.pop %v1009
    %v1038 = vrcp.pop %v1012
    %v1039 = vrcp.pop %v1015
    %v1040 = vrcp.pop %v1018
    %v1041 = vrcp.pop %v1021
    %v1042 = vrcp.pop %v1024
    %v1043 = vrcp.pop %v1027
    %v1044 = vmul.f32 %v949, %v1028
    %v1045 = vmul.f32 %v951, %v1029
    %v1046 = vmul.f32 %v953, %v1030
    %v1047 = vmul.f32 %v955, %v1031
    %v1048 = vmul.f32 %v957, %v1032
    %v1049 = vmul.f32 %v959, %v1033
    %v1050 = vmul.f32 %v961, %v1034
    %v1051 = vmul.f32 %v963, %v1035
    %v1052 = vmul.f32 %v965, %v1036
    %v1053 = vmul.f32 %v967, %v1037
    %v1054 = vmul.f32 %v969, %v1038
    %v1055 = vmul.f32 %v971, %v1039
    %v1056 = vmul.f32 %v973, %v1040
    %v1057 = vmul.f32 %v975, %v1041
    %v1058 = vmul.f32 %v977, %v1042
    %v1059 = vmul.f32 %v979, %v1043
    %v1060 = vpack.c.bf16 %v1045, %v1044
    %v1061 = vpack.c.bf16 %v1047, %v1046
    %v1062 = vpack.c.bf16 %v1049, %v1048
    %v1063 = vpack.c.bf16 %v1051, %v1050
    %v1064 = vpack.c.bf16 %v1053, %v1052
    %v1065 = vpack.c.bf16 %v1055, %v1054
    %v1066 = vpack.c.bf16 %v1057, %v1056
    %v1067 = vpack.c.bf16 %v1059, %v1058
    %v1068 = vld [vmem:[#allocation7] sm:$0xf]
    %v1069 = vld [vmem:[#allocation7 + $0x4] sm:$0xf]
    %v1070 = vld [vmem:[#allocation7 + $0x8] sm:$0xf]
    %v1071 = vld [vmem:[#allocation7 + $0xc] sm:$0xf]
    %v1072 = vld [vmem:[#allocation7 + $0x10] sm:$0xf]
    %v1073 = vld [vmem:[#allocation7 + $0x14] sm:$0xf]
    %v1074 = vld [vmem:[#allocation7 + $0x18] sm:$0xf]
    %v1075 = vld [vmem:[#allocation7 + $0x1c] sm:$0xf]
    %v1076 = vld [vmem:[#allocation7 + $0x20] sm:$0xf]
    %v1077 = vld [vmem:[#allocation7 + $0x24] sm:$0xf]
    %v1078 = vld [vmem:[#allocation7 + $0x28] sm:$0xf]
    %v1079 = vld [vmem:[#allocation7 + $0x2c] sm:$0xf]
    %v1080 = vld [vmem:[#allocation7 + $0x30] sm:$0xf]
    %v1081 = vld [vmem:[#allocation7 + $0x34] sm:$0xf]
    %v1082 = vld [vmem:[#allocation7 + $0x38] sm:$0xf]
    %v1083 = vld [vmem:[#allocation7 + $0x3c] sm:$0xf]
    %v1084 = vpack.c.bf16 %v463, %v460
    %v1085 = vpack.c.bf16 %v471, %v468
    %v1087 = vsel %vm883, %v1060, 0
    %1089 = vmatprep.subr.bf16.mxu0 0
    %1090 = vmatpush1.bf16.msra.mxu0 %v1084
    %1091 = vmatprep.subr.bf16.mxu0 0
    %1092 = vmatpush1.bf16.msra.mxu0 0
    %1093 = vmatprep.subr.bf16.mxu0 0
    %1094 = vmatpush1.bf16.msra.mxu0 0
    %1095 = vmatprep.subr.bf16.mxu0 0
    %1096 = vmatpush1.bf16.msra.mxu0 0
    %1097 = vmatprep.subr.bf16.mxu0 0
    %1098 = vmatpush1.bf16.msra.mxu0 0
    %1099 = vmatprep.subr.bf16.mxu0 0
    %1100 = vmatpush1.bf16.msra.mxu0 0
    %1101 = vmatprep.subr.bf16.mxu0 0
    %1102 = vmatpush1.bf16.msra.mxu0 0
    %1103 = vmatprep.subr.bf16.mxu0 0
    %1104 = vmatpush1.bf16.msra.mxu0 0
    %1105 = vmatprep.subr.bf16.mxu0 0
    %1106 = vmatpush1.bf16.msra.mxu0 0
    %1107 = vmatprep.subr.bf16.mxu0 0
    %1108 = vmatpush1.bf16.msra.mxu0 0
    %1109 = vmatprep.subr.bf16.mxu0 0
    %1110 = vmatpush1.bf16.msra.mxu0 0
    %1111 = vmatprep.subr.bf16.mxu0 0
    %1112 = vmatpush1.bf16.msra.mxu0 0
    %1113 = vmatprep.subr.bf16.mxu0 0
    %1114 = vmatpush1.bf16.msra.mxu0 0
    %1115 = vmatprep.subr.bf16.mxu0 0
    %1116 = vmatpush1.bf16.msra.mxu0 0
    %1117 = vmatprep.subr.bf16.mxu0 0
    %1118 = vmatpush1.bf16.msra.mxu0 0
    %1119 = vmatprep.subr.bf16.mxu0 0
    %1120 = vmatpush1.bf16.msra.mxu0 0
    %1121 = vmatprep.mubr.bf16.mxu0 0
    %1122 = vmatmul.mubr.bf16.gmra.mrb[0].mxu0 %v1087
    %v1123 = vpop.f32.mrb[0].mxu0
    %v1124 = vadd.f32 0.0, %v1123
    %v1125 = vpop.f32.mrb[0].mxu0
    %v1126 = vpop.f32.mrb[0].mxu0
    %v1127 = vadd.f32 0.0, %v1126
    %v1128 = vpop.f32.mrb[0].mxu0
    %1129 = vdwg.mxu0
    %v1131 = vsel %vm883, %v1061, 0
    %1133 = vmatprep.subr.bf16.mxu0 0
    %1134 = vmatpush1.bf16.msra.mxu0 %v1085
    %1135 = vmatprep.subr.bf16.mxu0 0
    %1136 = vmatpush1.bf16.msra.mxu0 0
    %1137 = vmatprep.subr.bf16.mxu0 0
    %1138 = vmatpush1.bf16.msra.mxu0 0
    %1139 = vmatprep.subr.bf16.mxu0 0
    %1140 = vmatpush1.bf16.msra.mxu0 0
    %1141 = vmatprep.subr.bf16.mxu0 0
    %1142 = vmatpush1.bf16.msra.mxu0 0
    %1143 = vmatprep.subr.bf16.mxu0 0
    %1144 = vmatpush1.bf16.msra.mxu0 0
    %1145 = vmatprep.subr.bf16.mxu0 0
    %1146 = vmatpush1.bf16.msra.mxu0 0
    %1147 = vmatprep.subr.bf16.mxu0 0
    %1148 = vmatpush1.bf16.msra.mxu0 0
    %1149 = vmatprep.subr.bf16.mxu0 0
    %1150 = vmatpush1.bf16.msra.mxu0 0
    %1151 = vmatprep.subr.bf16.mxu0 0
    %1152 = vmatpush1.bf16.msra.mxu0 0
    %1153 = vmatprep.subr.bf16.mxu0 0
    %1154 = vmatpush1.bf16.msra.mxu0 0
    %1155 = vmatprep.subr.bf16.mxu0 0
    %1156 = vmatpush1.bf16.msra.mxu0 0
    %1157 = vmatprep.subr.bf16.mxu0 0
    %1158 = vmatpush1.bf16.msra.mxu0 0
    %1159 = vmatprep.subr.bf16.mxu0 0
    %1160 = vmatpush1.bf16.msra.mxu0 0
    %1161 = vmatprep.subr.bf16.mxu0 0
    %1162 = vmatpush1.bf16.msra.mxu0 0
    %1163 = vmatprep.subr.bf16.mxu0 0
    %1164 = vmatpush1.bf16.msra.mxu0 0
    %1165 = vmatprep.mubr.bf16.mxu0 0
    %1166 = vmatmul.mubr.bf16.gmra.mrb[0].mxu0 %v1131
    %v1167 = vpop.f32.mrb[0].mxu0
    %v1168 = vadd.f32 0.0, %v1167
    %v1169 = vpop.f32.mrb[0].mxu0
    %v1170 = vpop.f32.mrb[0].mxu0
    %v1171 = vadd.f32 0.0, %v1170
    %v1172 = vpop.f32.mrb[0].mxu0
    %1173 = vdwg.mxu0
    %v1174 = vpack.c.bf16 %v1127, %v1124
    %v1175 = vpack.c.bf16 %v1171, %v1168
    %1177 = vrot.lane.b32.xlu0 %v1084, 96
    %v1178 = vpop.permute.xlu0 %1177
    %v1181 = vsel %vm883, %v1062, 0
    %1183 = vmatprep.subr.bf16.mxu0 0
    %1184 = vmatpush1.bf16.msra.mxu0 %v1178
    %1185 = vmatprep.subr.bf16.mxu0 0
    %1186 = vmatpush1.bf16.msra.mxu0 0
    %1187 = vmatprep.subr.bf16.mxu0 0
    %1188 = vmatpush1.bf16.msra.mxu0 0
    %1189 = vmatprep.subr.bf16.mxu0 0
    %1190 = vmatpush1.bf16.msra.mxu0 0
    %1191 = vmatprep.subr.bf16.mxu0 0
    %1192 = vmatpush1.bf16.msra.mxu0 0
    %1193 = vmatprep.subr.bf16.mxu0 0
    %1194 = vmatpush1.bf16.msra.mxu0 0
    %1195 = vmatprep.subr.bf16.mxu0 0
    %1196 = vmatpush1.bf16.msra.mxu0 0
    %1197 = vmatprep.subr.bf16.mxu0 0
    %1198 = vmatpush1.bf16.msra.mxu0 0
    %1199 = vmatprep.subr.bf16.mxu0 0
    %1200 = vmatpush1.bf16.msra.mxu0 0
    %1201 = vmatprep.subr.bf16.mxu0 0
    %1202 = vmatpush1.bf16.msra.mxu0 0
    %1203 = vmatprep.subr.bf16.mxu0 0
    %1204 = vmatpush1.bf16.msra.mxu0 0
    %1205 = vmatprep.subr.bf16.mxu0 0
    %1206 = vmatpush1.bf16.msra.mxu0 0
    %1207 = vmatprep.subr.bf16.mxu0 0
    %1208 = vmatpush1.bf16.msra.mxu0 0
    %1209 = vmatprep.subr.bf16.mxu0 0
    %1210 = vmatpush1.bf16.msra.mxu0 0
    %1211 = vmatprep.subr.bf16.mxu0 0
    %1212 = vmatpush1.bf16.msra.mxu0 0
    %1213 = vmatprep.subr.bf16.mxu0 0
    %1214 = vmatpush1.bf16.msra.mxu0 0
    %1215 = vmatprep.mubr.bf16.mxu0 0
    %1216 = vmatmul.mubr.bf16.gmra.mrb[0].mxu0 %v1181
    %v1217 = vpop.f32.mrb[0].mxu0
    %v1218 = vadd.f32 0.0, %v1217
    %v1219 = vpop.f32.mrb[0].mxu0
    %v1220 = vpop.f32.mrb[0].mxu0
    %v1221 = vadd.f32 0.0, %v1220
    %v1222 = vpop.f32.mrb[0].mxu0
    %1223 = vdwg.mxu0
    %1225 = vrot.lane.b32.xlu0 %v1085, 96
    %v1226 = vpop.permute.xlu0 %1225
    %v1229 = vsel %vm883, %v1063, 0
    %1231 = vmatprep.subr.bf16.mxu0 0
    %1232 = vmatpush1.bf16.msra.mxu0 %v1226
    %1233 = vmatprep.subr.bf16.mxu0 0
    %1234 = vmatpush1.bf16.msra.mxu0 0
    %1235 = vmatprep.subr.bf16.mxu0 0
    %1236 = vmatpush1.bf16.msra.mxu0 0
    %1237 = vmatprep.subr.bf16.mxu0 0
    %1238 = vmatpush1.bf16.msra.mxu0 0
    %1239 = vmatprep.subr.bf16.mxu0 0
    %1240 = vmatpush1.bf16.msra.mxu0 0
    %1241 = vmatprep.subr.bf16.mxu0 0
    %1242 = vmatpush1.bf16.msra.mxu0 0
    %1243 = vmatprep.subr.bf16.mxu0 0
    %1244 = vmatpush1.bf16.msra.mxu0 0
    %1245 = vmatprep.subr.bf16.mxu0 0
    %1246 = vmatpush1.bf16.msra.mxu0 0
    %1247 = vmatprep.subr.bf16.mxu0 0
    %1248 = vmatpush1.bf16.msra.mxu0 0
    %1249 = vmatprep.subr.bf16.mxu0 0
    %1250 = vmatpush1.bf16.msra.mxu0 0
    %1251 = vmatprep.subr.bf16.mxu0 0
    %1252 = vmatpush1.bf16.msra.mxu0 0
    %1253 = vmatprep.subr.bf16.mxu0 0
    %1254 = vmatpush1.bf16.msra.mxu0 0
    %1255 = vmatprep.subr.bf16.mxu0 0
    %1256 = vmatpush1.bf16.msra.mxu0 0
    %1257 = vmatprep.subr.bf16.mxu0 0
    %1258 = vmatpush1.bf16.msra.mxu0 0
    %1259 = vmatprep.subr.bf16.mxu0 0
    %1260 = vmatpush1.bf16.msra.mxu0 0
    %1261 = vmatprep.subr.bf16.mxu0 0
    %1262 = vmatpush1.bf16.msra.mxu0 0
    %1263 = vmatprep.mubr.bf16.mxu0 0
    %1264 = vmatmul.mubr.bf16.gmra.mrb[0].mxu0 %v1229
    %v1265 = vpop.f32.mrb[0].mxu0
    %v1266 = vadd.f32 0.0, %v1265
    %v1267 = vpop.f32.mrb[0].mxu0
    %v1268 = vpop.f32.mrb[0].mxu0
    %v1269 = vadd.f32 0.0, %v1268
    %v1270 = vpop.f32.mrb[0].mxu0
    %1271 = vdwg.mxu0
    %v1272 = vpack.c.bf16 %v1221, %v1218
    %v1273 = vpack.c.bf16 %v1269, %v1266
    %v1278 = vunpack.c.l.b16 %v1072
    %v1279 = vunpack.c.l.b16 %v1073
    %v1280 = vunpack.c.l.b16 %v1074
    %v1281 = vunpack.c.l.b16 %v1075
    %v1282 = vpack.c.b16 %v1279, %v1278
    %v1283 = vpack.c.b16 %v1281, %v1280
    %v1287 = vsel %vm478, %v1272, 0
    %v1290 = vsel %vm478, %v1273, 0
    %1292 = vmatprep.subr.bf16.mxu0 0
    %1293 = vmatpush1.bf16.msra.mxu0 %v1282
    %1294 = vmatprep.subr.bf16.mxu0 0
    %1295 = vmatpush1.bf16.msra.mxu0 %v1283
    %1296 = vmatprep.subr.bf16.mxu0 0
    %1297 = vmatpush1.bf16.msra.mxu0 0
    %1298 = vmatprep.subr.bf16.mxu0 0
    %1299 = vmatpush1.bf16.msra.mxu0 0
    %1300 = vmatprep.subr.bf16.mxu0 0
    %1301 = vmatpush1.bf16.msra.mxu0 0
    %1302 = vmatprep.subr.bf16.mxu0 0
    %1303 = vmatpush1.bf16.msra.mxu0 0
    %1304 = vmatprep.subr.bf16.mxu0 0
    %1305 = vmatpush1.bf16.msra.mxu0 0
    %1306 = vmatprep.subr.bf16.mxu0 0
    %1307 = vmatpush1.bf16.msra.mxu0 0
    %1308 = vmatprep.subr.bf16.mxu0 0
    %1309 = vmatpush1.bf16.msra.mxu0 0
    %1310 = vmatprep.subr.bf16.mxu0 0
    %1311 = vmatpush1.bf16.msra.mxu0 0
    %1312 = vmatprep.subr.bf16.mxu0 0
    %1313 = vmatpush1.bf16.msra.mxu0 0
    %1314 = vmatprep.subr.bf16.mxu0 0
    %1315 = vmatpush1.bf16.msra.mxu0 0
    %1316 = vmatprep.subr.bf16.mxu0 0
    %1317 = vmatpush1.bf16.msra.mxu0 0
    %1318 = vmatprep.subr.bf16.mxu0 0
    %1319 = vmatpush1.bf16.msra.mxu0 0
    %1320 = vmatprep.subr.bf16.mxu0 0
    %1321 = vmatpush1.bf16.msra.mxu0 0
    %1322 = vmatprep.subr.bf16.mxu0 0
    %1323 = vmatpush1.bf16.msra.mxu0 0
    %1324 = vmatprep.mubr.bf16.mxu0 0
    %1325 = vmatmul.mubr.bf16.gmra.mrb[0].mxu0 %v1287
    %v1326 = vpop.f32.mrb[0].mxu0
    %v1327 = vadd.f32 0.0, %v1326
    %v1328 = vpop.f32.mrb[0].mxu0
    %v1329 = vpop.f32.mrb[0].mxu0
    %v1330 = vadd.f32 0.0, %v1329
    %v1331 = vpop.f32.mrb[0].mxu0
    %1332 = vmatprep.mubr.bf16.mxu0 0
    %1333 = vmatmul.mubr.bf16.gmra.mrb[0].mxu0 %v1290
    %v1334 = vpop.f32.mrb[0].mxu0
    %v1335 = vadd.f32 0.0, %v1334
    %v1336 = vpop.f32.mrb[0].mxu0
    %v1337 = vpop.f32.mrb[0].mxu0
    %v1338 = vadd.f32 0.0, %v1337
    %v1339 = vpop.f32.mrb[0].mxu0
    %1340 = vdwg.mxu0
    %v1345 = vunpack.c.l.b16 %v1068
    %v1346 = vunpack.c.l.b16 %v1069
    %v1347 = vunpack.c.l.b16 %v1070
    %v1348 = vunpack.c.l.b16 %v1071
    %v1349 = vpack.c.b16 %v1346, %v1345
    %v1350 = vpack.c.b16 %v1348, %v1347
    %v1354 = vsel %vm478, %v1174, 0
    %v1357 = vsel %vm478, %v1175, 0
    %1359 = vmatprep.subr.bf16.mxu0 0
    %1360 = vmatpush1.bf16.msra.mxu0 %v1349
    %1361 = vmatprep.subr.bf16.mxu0 0
    %1362 = vmatpush1.bf16.msra.mxu0 %v1350
    %1363 = vmatprep.subr.bf16.mxu0 0
    %1364 = vmatpush1.bf16.msra.mxu0 0
    %1365 = vmatprep.subr.bf16.mxu0 0
    %1366 = vmatpush1.bf16.msra.mxu0 0
    %1367 = vmatprep.subr.bf16.mxu0 0
    %1368 = vmatpush1.bf16.msra.mxu0 0
    %1369 = vmatprep.subr.bf16.mxu0 0
    %1370 = vmatpush1.bf16.msra.mxu0 0
    %1371 = vmatprep.subr.bf16.mxu0 0
    %1372 = vmatpush1.bf16.msra.mxu0 0
    %1373 = vmatprep.subr.bf16.mxu0 0
    %1374 = vmatpush1.bf16.msra.mxu0 0
    %1375 = vmatprep.subr.bf16.mxu0 0
    %1376 = vmatpush1.bf16.msra.mxu0 0
    %1377 = vmatprep.subr.bf16.mxu0 0
    %1378 = vmatpush1.bf16.msra.mxu0 0
    %1379 = vmatprep.subr.bf16.mxu0 0
    %1380 = vmatpush1.bf16.msra.mxu0 0
    %1381 = vmatprep.subr.bf16.mxu0 0
    %1382 = vmatpush1.bf16.msra.mxu0 0
    %1383 = vmatprep.subr.bf16.mxu0 0
    %1384 = vmatpush1.bf16.msra.mxu0 0
    %1385 = vmatprep.subr.bf16.mxu0 0
    %1386 = vmatpush1.bf16.msra.mxu0 0
    %1387 = vmatprep.subr.bf16.mxu0 0
    %1388 = vmatpush1.bf16.msra.mxu0 0
    %1389 = vmatprep.subr.bf16.mxu0 0
    %1390 = vmatpush1.bf16.msra.mxu0 0
    %1391 = vmatprep.mubr.bf16.mxu0 0
    %1392 = vmatmul.mubr.bf16.gmra.mrb[0].mxu0 %v1354
    %v1393 = vpop.f32.mrb[0].mxu0
    %v1394 = vadd.f32 %v1327, %v1393
    %v1395 = vpop.f32.mrb[0].mxu0
    %v1396 = vpop.f32.mrb[0].mxu0
    %v1397 = vadd.f32 %v1330, %v1396
    %v1398 = vpop.f32.mrb[0].mxu0
    %1399 = vmatprep.mubr.bf16.mxu0 0
    %1400 = vmatmul.mubr.bf16.gmra.mrb[0].mxu0 %v1357
    %v1401 = vpop.f32.mrb[0].mxu0
    %v1402 = vadd.f32 %v1335, %v1401
    %v1403 = vpop.f32.mrb[0].mxu0
    %v1404 = vpop.f32.mrb[0].mxu0
    %v1405 = vadd.f32 %v1338, %v1404
    %v1406 = vpop.f32.mrb[0].mxu0
    %1407 = vdwg.mxu0
    %1408 = vrot.lane.b32.xlu0 %v1084, 64
    %v1409 = vpop.permute.xlu0 %1408
    %v1412 = vsel %vm883, %v1064, 0
    %1414 = vmatprep.subr.bf16.mxu0 0
    %1415 = vmatpush1.bf16.msra.mxu0 %v1409
    %1416 = vmatprep.subr.bf16.mxu0 0
    %1417 = vmatpush1.bf16.msra.mxu0 0
    %1418 = vmatprep.subr.bf16.mxu0 0
    %1419 = vmatpush1.bf16.msra.mxu0 0
    %1420 = vmatprep.subr.bf16.mxu0 0
    %1421 = vmatpush1.bf16.msra.mxu0 0
    %1422 = vmatprep.subr.bf16.mxu0 0
    %1423 = vmatpush1.bf16.msra.mxu0 0
    %1424 = vmatprep.subr.bf16.mxu0 0
    %1425 = vmatpush1.bf16.msra.mxu0 0
    %1426 = vmatprep.subr.bf16.mxu0 0
    %1427 = vmatpush1.bf16.msra.mxu0 0
    %1428 = vmatprep.subr.bf16.mxu0 0
    %1429 = vmatpush1.bf16.msra.mxu0 0
    %1430 = vmatprep.subr.bf16.mxu0 0
    %1431 = vmatpush1.bf16.msra.mxu0 0
    %1432 = vmatprep.subr.bf16.mxu0 0
    %1433 = vmatpush1.bf16.msra.mxu0 0
    %1434 = vmatprep.subr.bf16.mxu0 0
    %1435 = vmatpush1.bf16.msra.mxu0 0
    %1436 = vmatprep.subr.bf16.mxu0 0
    %1437 = vmatpush1.bf16.msra.mxu0 0
    %1438 = vmatprep.subr.bf16.mxu0 0
    %1439 = vmatpush1.bf16.msra.mxu0 0
    %1440 = vmatprep.subr.bf16.mxu0 0
    %1441 = vmatpush1.bf16.msra.mxu0 0
    %1442 = vmatprep.subr.bf16.mxu0 0
    %1443 = vmatpush1.bf16.msra.mxu0 0
    %1444 = vmatprep.subr.bf16.mxu0 0
    %1445 = vmatpush1.bf16.msra.mxu0 0
    %1446 = vmatprep.mubr.bf16.mxu0 0
    %1447 = vmatmul.mubr.bf16.gmra.mrb[0].mxu0 %v1412
    %v1448 = vpop.f32.mrb[0].mxu0
    %v1449 = vadd.f32 0.0, %v1448
    %v1450 = vpop.f32.mrb[0].mxu0
    %v1451 = vpop.f32.mrb[0].mxu0
    %v1452 = vadd.f32 0.0, %v1451
    %v1453 = vpop.f32.mrb[0].mxu0
    %1454 = vdwg.mxu0
    %1455 = vrot.lane.b32.xlu0 %v1085, 64
    %v1456 = vpop.permute.xlu0 %1455
    %v1459 = vsel %vm883, %v1065, 0
    %1461 = vmatprep.subr.bf16.mxu0 0
    %1462 = vmatpush1.bf16.msra.mxu0 %v1456
    %1463 = vmatprep.subr.bf16.mxu0 0
    %1464 = vmatpush1.bf16.msra.mxu0 0
    %1465 = vmatprep.subr.bf16.mxu0 0
    %1466 = vmatpush1.bf16.msra.mxu0 0
    %1467 = vmatprep.subr.bf16.mxu0 0
    %1468 = vmatpush1.bf16.msra.mxu0 0
    %1469 = vmatprep.subr.bf16.mxu0 0
    %1470 = vmatpush1.bf16.msra.mxu0 0
    %1471 = vmatprep.subr.bf16.mxu0 0
    %1472 = vmatpush1.bf16.msra.mxu0 0
    %1473 = vmatprep.subr.bf16.mxu0 0
    %1474 = vmatpush1.bf16.msra.mxu0 0
    %1475 = vmatprep.subr.bf16.mxu0 0
    %1476 = vmatpush1.bf16.msra.mxu0 0
    %1477 = vmatprep.subr.bf16.mxu0 0
    %1478 = vmatpush1.bf16.msra.mxu0 0
    %1479 = vmatprep.subr.bf16.mxu0 0
    %1480 = vmatpush1.bf16.msra.mxu0 0
    %1481 = vmatprep.subr.bf16.mxu0 0
    %1482 = vmatpush1.bf16.msra.mxu0 0
    %1483 = vmatprep.subr.bf16.mxu0 0
    %1484 = vmatpush1.bf16.msra.mxu0 0
    %1485 = vmatprep.subr.bf16.mxu0 0
    %1486 = vmatpush1.bf16.msra.mxu0 0
    %1487 = vmatprep.subr.bf16.mxu0 0
    %1488 = vmatpush1.bf16.msra.mxu0 0
    %1489 = vmatprep.subr.bf16.mxu0 0
    %1490 = vmatpush1.bf16.msra.mxu0 0
    %1491 = vmatprep.subr.bf16.mxu0 0
    %1492 = vmatpush1.bf16.msra.mxu0 0
    %1493 = vmatprep.mubr.bf16.mxu0 0
    %1494 = vmatmul.mubr.bf16.gmra.mrb[0].mxu0 %v1459
    %v1495 = vpop.f32.mrb[0].mxu0
    %v1496 = vadd.f32 0.0, %v1495
    %v1497 = vpop.f32.mrb[0].mxu0
    %v1498 = vpop.f32.mrb[0].mxu0
    %v1499 = vadd.f32 0.0, %v1498
    %v1500 = vpop.f32.mrb[0].mxu0
    %1501 = vdwg.mxu0
    %v1502 = vpack.c.bf16 %v1452, %v1449
    %v1503 = vpack.c.bf16 %v1499, %v1496
    %v1508 = vunpack.c.l.b16 %v1076
    %v1509 = vunpack.c.l.b16 %v1077
    %v1510 = vunpack.c.l.b16 %v1078
    %v1511 = vunpack.c.l.b16 %v1079
    %v1512 = vpack.c.b16 %v1509, %v1508
    %v1513 = vpack.c.b16 %v1511, %v1510
    %v1517 = vsel %vm478, %v1502, 0
    %v1520 = vsel %vm478, %v1503, 0
    %1522 = vmatprep.subr.bf16.mxu0 0
    %1523 = vmatpush1.bf16.msra.mxu0 %v1512
    %1524 = vmatprep.subr.bf16.mxu0 0
    %1525 = vmatpush1.bf16.msra.mxu0 %v1513
    %1526 = vmatprep.subr.bf16.mxu0 0
    %1527 = vmatpush1.bf16.msra.mxu0 0
    %1528 = vmatprep.subr.bf16.mxu0 0
    %1529 = vmatpush1.bf16.msra.mxu0 0
    %1530 = vmatprep.subr.bf16.mxu0 0
    %1531 = vmatpush1.bf16.msra.mxu0 0
    %1532 = vmatprep.subr.bf16.mxu0 0
    %1533 = vmatpush1.bf16.msra.mxu0 0
    %1534 = vmatprep.subr.bf16.mxu0 0
    %1535 = vmatpush1.bf16.msra.mxu0 0
    %1536 = vmatprep.subr.bf16.mxu0 0
    %1537 = vmatpush1.bf16.msra.mxu0 0
    %1538 = vmatprep.subr.bf16.mxu0 0
    %1539 = vmatpush1.bf16.msra.mxu0 0
    %1540 = vmatprep.subr.bf16.mxu0 0
    %1541 = vmatpush1.bf16.msra.mxu0 0
    %1542 = vmatprep.subr.bf16.mxu0 0
    %1543 = vmatpush1.bf16.msra.mxu0 0
    %1544 = vmatprep.subr.bf16.mxu0 0
    %1545 = vmatpush1.bf16.msra.mxu0 0
    %1546 = vmatprep.subr.bf16.mxu0 0
    %1547 = vmatpush1.bf16.msra.mxu0 0
    %1548 = vmatprep.subr.bf16.mxu0 0
    %1549 = vmatpush1.bf16.msra.mxu0 0
    %1550 = vmatprep.subr.bf16.mxu0 0
    %1551 = vmatpush1.bf16.msra.mxu0 0
    %1552 = vmatprep.subr.bf16.mxu0 0
    %1553 = vmatpush1.bf16.msra.mxu0 0
    %1554 = vmatprep.mubr.bf16.mxu0 0
    %1555 = vmatmul.mubr.bf16.gmra.mrb[0].mxu0 %v1517
    %v1556 = vpop.f32.mrb[0].mxu0
    %v1557 = vadd.f32 0.0, %v1556
    %v1558 = vpop.f32.mrb[0].mxu0
    %v1559 = vpop.f32.mrb[0].mxu0
    %v1560 = vadd.f32 0.0, %v1559
    %v1561 = vpop.f32.mrb[0].mxu0
    %1562 = vmatprep.mubr.bf16.mxu0 0
    %1563 = vmatmul.mubr.bf16.gmra.mrb[0].mxu0 %v1520
    %v1564 = vpop.f32.mrb[0].mxu0
    %v1565 = vadd.f32 0.0, %v1564
    %v1566 = vpop.f32.mrb[0].mxu0
    %v1567 = vpop.f32.mrb[0].mxu0
    %v1568 = vadd.f32 0.0, %v1567
    %v1569 = vpop.f32.mrb[0].mxu0
    %1570 = vdwg.mxu0
    %v1571 = vadd.f32 %v1394, %v1557
    %v1572 = vadd.f32 %v1397, %v1560
    %v1573 = vadd.f32 %v1402, %v1565
    %v1574 = vadd.f32 %v1405, %v1568
    %1575 = vrot.lane.b32.xlu0 %v1084, 32
    %v1576 = vpop.permute.xlu0 %1575
    %v1579 = vsel %vm883, %v1066, 0
    %1581 = vmatprep.subr.bf16.mxu0 0
    %1582 = vmatpush1.bf16.msra.mxu0 %v1576
    %1583 = vmatprep.subr.bf16.mxu0 0
    %1584 = vmatpush1.bf16.msra.mxu0 0
    %1585 = vmatprep.subr.bf16.mxu0 0
    %1586 = vmatpush1.bf16.msra.mxu0 0
    %1587 = vmatprep.subr.bf16.mxu0 0
    %1588 = vmatpush1.bf16.msra.mxu0 0
    %1589 = vmatprep.subr.bf16.mxu0 0
    %1590 = vmatpush1.bf16.msra.mxu0 0
    %1591 = vmatprep.subr.bf16.mxu0 0
    %1592 = vmatpush1.bf16.msra.mxu0 0
    %1593 = vmatprep.subr.bf16.mxu0 0
    %1594 = vmatpush1.bf16.msra.mxu0 0
    %1595 = vmatprep.subr.bf16.mxu0 0
    %1596 = vmatpush1.bf16.msra.mxu0 0
    %1597 = vmatprep.subr.bf16.mxu0 0
    %1598 = vmatpush1.bf16.msra.mxu0 0
    %1599 = vmatprep.subr.bf16.mxu0 0
    %1600 = vmatpush1.bf16.msra.mxu0 0
    %1601 = vmatprep.subr.bf16.mxu0 0
    %1602 = vmatpush1.bf16.msra.mxu0 0
    %1603 = vmatprep.subr.bf16.mxu0 0
    %1604 = vmatpush1.bf16.msra.mxu0 0
    %1605 = vmatprep.subr.bf16.mxu0 0
    %1606 = vmatpush1.bf16.msra.mxu0 0
    %1607 = vmatprep.subr.bf16.mxu0 0
    %1608 = vmatpush1.bf16.msra.mxu0 0
    %1609 = vmatprep.subr.bf16.mxu0 0
    %1610 = vmatpush1.bf16.msra.mxu0 0
    %1611 = vmatprep.subr.bf16.mxu0 0
    %1612 = vmatpush1.bf16.msra.mxu0 0
    %1613 = vmatprep.mubr.bf16.mxu0 0
    %1614 = vmatmul.mubr.bf16.gmra.mrb[0].mxu0 %v1579
    %v1615 = vpop.f32.mrb[0].mxu0
    %v1616 = vadd.f32 0.0, %v1615
    %v1617 = vpop.f32.mrb[0].mxu0
    %v1618 = vpop.f32.mrb[0].mxu0
    %v1619 = vadd.f32 0.0, %v1618
    %v1620 = vpop.f32.mrb[0].mxu0
    %1621 = vdwg.mxu0
    %1622 = vrot.lane.b32.xlu0 %v1085, 32
    %v1623 = vpop.permute.xlu0 %1622
    %v1626 = vsel %vm883, %v1067, 0
    %1628 = vmatprep.subr.bf16.mxu0 0
    %1629 = vmatpush1.bf16.msra.mxu0 %v1623
    %1630 = vmatprep.subr.bf16.mxu0 0
    %1631 = vmatpush1.bf16.msra.mxu0 0
    %1632 = vmatprep.subr.bf16.mxu0 0
    %1633 = vmatpush1.bf16.msra.mxu0 0
    %1634 = vmatprep.subr.bf16.mxu0 0
    %1635 = vmatpush1.bf16.msra.mxu0 0
    %1636 = vmatprep.subr.bf16.mxu0 0
    %1637 = vmatpush1.bf16.msra.mxu0 0
    %1638 = vmatprep.subr.bf16.mxu0 0
    %1639 = vmatpush1.bf16.msra.mxu0 0
    %1640 = vmatprep.subr.bf16.mxu0 0
    %1641 = vmatpush1.bf16.msra.mxu0 0
    %1642 = vmatprep.subr.bf16.mxu0 0
    %1643 = vmatpush1.bf16.msra.mxu0 0
    %1644 = vmatprep.subr.bf16.mxu0 0
    %1645 = vmatpush1.bf16.msra.mxu0 0
    %1646 = vmatprep.subr.bf16.mxu0 0
    %1647 = vmatpush1.bf16.msra.mxu0 0
    %1648 = vmatprep.subr.bf16.mxu0 0
    %1649 = vmatpush1.bf16.msra.mxu0 0
    %1650 = vmatprep.subr.bf16.mxu0 0
    %1651 = vmatpush1.bf16.msra.mxu0 0
    %1652 = vmatprep.subr.bf16.mxu0 0
    %1653 = vmatpush1.bf16.msra.mxu0 0
    %1654 = vmatprep.subr.bf16.mxu0 0
    %1655 = vmatpush1.bf16.msra.mxu0 0
    %1656 = vmatprep.subr.bf16.mxu0 0
    %1657 = vmatpush1.bf16.msra.mxu0 0
    %1658 = vmatprep.subr.bf16.mxu0 0
    %1659 = vmatpush1.bf16.msra.mxu0 0
    %1660 = vmatprep.mubr.bf16.mxu0 0
    %1661 = vmatmul.mubr.bf16.gmra.mrb[0].mxu0 %v1626
    %v1662 = vpop.f32.mrb[0].mxu0
    %v1663 = vadd.f32 0.0, %v1662
    %v1664 = vpop.f32.mrb[0].mxu0
    %v1665 = vpop.f32.mrb[0].mxu0
    %v1666 = vadd.f32 0.0, %v1665
    %v1667 = vpop.f32.mrb[0].mxu0
    %1668 = vdwg.mxu0
    %v1669 = vpack.c.bf16 %v1619, %v1616
    %v1670 = vpack.c.bf16 %v1666, %v1663
    %v1675 = vunpack.c.l.b16 %v1080
    %v1676 = vunpack.c.l.b16 %v1081
    %v1677 = vunpack.c.l.b16 %v1082
    %v1678 = vunpack.c.l.b16 %v1083
    %v1679 = vpack.c.b16 %v1676, %v1675
    %v1680 = vpack.c.b16 %v1678, %v1677
    %v1684 = vsel %vm478, %v1669, 0
    %v1687 = vsel %vm478, %v1670, 0
    %1689 = vmatprep.subr.bf16.mxu0 0
    %1690 = vmatpush1.bf16.msra.mxu0 %v1679
    %1691 = vmatprep.subr.bf16.mxu0 0
    %1692 = vmatpush1.bf16.msra.mxu0 %v1680
    %1693 = vmatprep.subr.bf16.mxu0 0
    %1694 = vmatpush1.bf16.msra.mxu0 0
    %1695 = vmatprep.subr.bf16.mxu0 0
    %1696 = vmatpush1.bf16.msra.mxu0 0
    %1697 = vmatprep.subr.bf16.mxu0 0
    %1698 = vmatpush1.bf16.msra.mxu0 0
    %1699 = vmatprep.subr.bf16.mxu0 0
    %1700 = vmatpush1.bf16.msra.mxu0 0
    %1701 = vmatprep.subr.bf16.mxu0 0
    %1702 = vmatpush1.bf16.msra.mxu0 0
    %1703 = vmatprep.subr.bf16.mxu0 0
    %1704 = vmatpush1.bf16.msra.mxu0 0
    %1705 = vmatprep.subr.bf16.mxu0 0
    %1706 = vmatpush1.bf16.msra.mxu0 0
    %1707 = vmatprep.subr.bf16.mxu0 0
    %1708 = vmatpush1.bf16.msra.mxu0 0
    %1709 = vmatprep.subr.bf16.mxu0 0
    %1710 = vmatpush1.bf16.msra.mxu0 0
    %1711 = vmatprep.subr.bf16.mxu0 0
    %1712 = vmatpush1.bf16.msra.mxu0 0
    %1713 = vmatprep.subr.bf16.mxu0 0
    %1714 = vmatpush1.bf16.msra.mxu0 0
    %1715 = vmatprep.subr.bf16.mxu0 0
    %1716 = vmatpush1.bf16.msra.mxu0 0
    %1717 = vmatprep.subr.bf16.mxu0 0
    %1718 = vmatpush1.bf16.msra.mxu0 0
    %1719 = vmatprep.subr.bf16.mxu0 0
    %1720 = vmatpush1.bf16.msra.mxu0 0
    %1721 = vmatprep.mubr.bf16.mxu0 0
    %1722 = vmatmul.mubr.bf16.gmra.mrb[0].mxu0 %v1684
    %v1723 = vpop.f32.mrb[0].mxu0
    %v1724 = vadd.f32 0.0, %v1723
    %v1725 = vpop.f32.mrb[0].mxu0
    %v1726 = vpop.f32.mrb[0].mxu0
    %v1727 = vadd.f32 0.0, %v1726
    %v1728 = vpop.f32.mrb[0].mxu0
    %1729 = vmatprep.mubr.bf16.mxu0 0
    %1730 = vmatmul.mubr.bf16.gmra.mrb[0].mxu0 %v1687
    %v1731 = vpop.f32.mrb[0].mxu0
    %v1732 = vadd.f32 0.0, %v1731
    %v1733 = vpop.f32.mrb[0].mxu0
    %v1734 = vpop.f32.mrb[0].mxu0
    %v1735 = vadd.f32 0.0, %v1734
    %v1736 = vpop.f32.mrb[0].mxu0
    %1737 = vdwg.mxu0
    %v1738 = vadd.f32 %v1571, %v1724
    %v1739 = vadd.f32 %v1572, %v1727
    %v1740 = vadd.f32 %v1573, %v1732
    %v1741 = vadd.f32 %v1574, %v1735
    %v1742 = vld [vmem:[%s6] sm:$0x1]
    %v1744 = vlaneseq
    %v1745 = vshrl.u32 %v1744, 7
    %v1746 = vsub.s32 0, %v1745
    %v1747 = vrot.slane %v1742, %v1746
    %v1749 = vadd.f32 %v1738, %v1747
    %v1750 = vadd.f32 %v1739, %v1747
    %v1751 = vadd.f32 %v1740, %v1747
    %v1752 = vadd.f32 %v1741, %v1747
    %v1753 = vadd.f32 %v114, %v1749
    %v1754 = vadd.f32 %v115, %v1750
    %v1755 = vadd.f32 %v116, %v1751
    %v1756 = vadd.f32 %v117, %v1752
    %v1757 = vld [vmem:[%s7] sm:$0x1]
    %v1758 = vld [vmem:[%s8] sm:$0x1]
    %1759 = vadd.xlane.f32.xlu0 %v1753
    %v1760 = vpop.xlane.xlu0 %1759
    %1761 = vadd.xlane.f32.xlu0 %v1754
    %v1762 = vpop.xlane.xlu0 %1761
    %1763 = vadd.xlane.f32.xlu0 %v1755
    %v1764 = vpop.xlane.xlu0 %1763
    %1765 = vadd.xlane.f32.xlu0 %v1756
    %v1766 = vpop.xlane.xlu0 %1765
    %v1767 = vmul.f32 %v1760, %v128
    %v1768 = vmul.f32 %v1762, %v128
    %v1769 = vmul.f32 %v1764, %v128
    %v1770 = vmul.f32 %v1766, %v128
    %v1771 = vmul.f32 %v1753, %v1753
    %v1772 = vmul.f32 %v1754, %v1754
    %v1773 = vmul.f32 %v1755, %v1755
    %v1774 = vmul.f32 %v1756, %v1756
    %1775 = vadd.xlane.f32.xlu0 %v1771
    %v1776 = vpop.xlane.xlu0 %1775
    %1777 = vadd.xlane.f32.xlu0 %v1772
    %v1778 = vpop.xlane.xlu0 %1777
    %1779 = vadd.xlane.f32.xlu0 %v1773
    %v1780 = vpop.xlane.xlu0 %1779
    %1781 = vadd.xlane.f32.xlu0 %v1774
    %v1782 = vpop.xlane.xlu0 %1781
    %v1783 = vmul.f32 %v1776, %v128
    %v1784 = vmul.f32 %v1778, %v128
    %v1785 = vmul.f32 %v1780, %v128
    %v1786 = vmul.f32 %v1782, %v128
    %v1787 = vmul.f32 %v1767, %v1767
    %v1788 = vmul.f32 %v1768, %v1768
    %v1789 = vmul.f32 %v1769, %v1769
    %v1790 = vmul.f32 %v1770, %v1770
    %v1791 = vsub.f32 %v1783, %v1787
    %v1792 = vsub.f32 %v1784, %v1788
    %v1793 = vsub.f32 %v1785, %v1789
    %v1794 = vsub.f32 %v1786, %v1790
    %v1795 = vsub.f32 %v1753, %v1767
    %v1796 = vsub.f32 %v1754, %v1768
    %v1797 = vsub.f32 %v1755, %v1769
    %v1798 = vsub.f32 %v1756, %v1770
    %v1799 = vadd.f32 %v1791, 1e-06
    %v1800 = vadd.f32 %v1792, 1e-06
    %v1801 = vadd.f32 %v1793, 1e-06
    %v1802 = vadd.f32 %v1794, 1e-06
    %v1803 = vrsqrt.pop %v1799
    %v1804 = vrsqrt.pop %v1800
    %v1805 = vrsqrt.pop %v1801
    %v1806 = vrsqrt.pop %v1802
    %v1807 = vmul.f32 %v1795, %v1803
    %v1808 = vmul.f32 %v1796, %v1804
    %v1809 = vmul.f32 %v1797, %v1805
    %v1810 = vmul.f32 %v1798, %v1806
    %v1812 = vlaneseq
    %v1813 = vshrl.u32 %v1812, 7
    %v1814 = vsub.s32 0, %v1813
    %v1815 = vrot.slane %v1757, %v1814
    %v1817 = vmul.f32 %v1807, %v1815
    %v1818 = vmul.f32 %v1808, %v1815
    %v1819 = vmul.f32 %v1809, %v1815
    %v1820 = vmul.f32 %v1810, %v1815
    %v1822 = vlaneseq
    %v1823 = vshrl.u32 %v1822, 7
    %v1824 = vsub.s32 0, %v1823
    %v1825 = vrot.slane %v1758, %v1824
    %v1827 = vadd.f32 %v1817, %v1825
    %v1828 = vadd.f32 %v1818, %v1825
    %v1829 = vadd.f32 %v1819, %v1825
    %v1830 = vadd.f32 %v1820, %v1825
    %v1831 = vpack.c.bf16 %v1828, %v1827
    %v1832 = vpack.c.bf16 %v1830, %v1829
    %v1833 = vld [vmem:[#allocation8] sm:$0xff]
    %v1834 = vld [vmem:[#allocation8 + $0x8] sm:$0xff]
    %v1835 = vld [vmem:[#allocation8 + $0x10] sm:$0xff]
    %v1836 = vld [vmem:[#allocation8 + $0x18] sm:$0xff]
    %v1837 = vld [vmem:[#allocation8 + $0x20] sm:$0xff]
    %v1838 = vld [vmem:[#allocation8 + $0x28] sm:$0xff]
    %v1839 = vld [vmem:[#allocation8 + $0x30] sm:$0xff]
    %v1840 = vld [vmem:[#allocation8 + $0x38] sm:$0xff]
    %v1841 = vld [vmem:[#allocation8 + $0x40] sm:$0xff]
    %v1842 = vld [vmem:[#allocation8 + $0x48] sm:$0xff]
    %v1843 = vld [vmem:[#allocation8 + $0x50] sm:$0xff]
    %v1844 = vld [vmem:[#allocation8 + $0x58] sm:$0xff]
    %v1845 = vld [vmem:[#allocation8 + $0x60] sm:$0xff]
    %v1846 = vld [vmem:[#allocation8 + $0x68] sm:$0xff]
    %v1847 = vld [vmem:[#allocation8 + $0x70] sm:$0xff]
    %v1848 = vld [vmem:[#allocation8 + $0x78] sm:$0xff]
    %v1849 = vld [vmem:[%s10] sm:$0x3]
    %v1851 = vlaneseq
    %v1852 = vshrl.u32 %v1851, 7
    %v1853 = vsub.s32 0, %v1852
    %v1854 = vrot.slane %v1849, %v1853
    %v1855 = vlaneseq
    %v1856 = vshrl.u32 %v1855, 7
    %v1857 = vsub.s32 1, %v1856
    %v1858 = vrot.slane %v1849, %v1857
    %v1877 = vunpack.c.l.b16 %v1833
    %v1878 = vunpack.c.h.b16 %v1833
    %v1879 = vunpack.c.l.b16 %v1834
    %v1880 = vunpack.c.h.b16 %v1834
    %v1881 = vunpack.c.l.b16 %v1835
    %v1882 = vunpack.c.h.b16 %v1835
    %v1883 = vunpack.c.l.b16 %v1836
    %v1884 = vunpack.c.h.b16 %v1836
    %v1885 = vunpack.c.l.b16 %v1837
    %v1886 = vunpack.c.h.b16 %v1837
    %v1887 = vunpack.c.l.b16 %v1838
    %v1888 = vunpack.c.h.b16 %v1838
    %v1889 = vunpack.c.l.b16 %v1839
    %v1890 = vunpack.c.h.b16 %v1839
    %v1891 = vunpack.c.l.b16 %v1840
    %v1892 = vunpack.c.h.b16 %v1840
    %v1893 = vunpack.c.l.b16 %v1841
    %v1894 = vunpack.c.h.b16 %v1841
    %v1895 = vunpack.c.l.b16 %v1842
    %v1896 = vunpack.c.h.b16 %v1842
    %v1897 = vunpack.c.l.b16 %v1843
    %v1898 = vunpack.c.h.b16 %v1843
    %v1899 = vunpack.c.l.b16 %v1844
    %v1900 = vunpack.c.h.b16 %v1844
    %v1901 = vunpack.c.l.b16 %v1845
    %v1902 = vunpack.c.h.b16 %v1845
    %v1903 = vunpack.c.l.b16 %v1846
    %v1904 = vunpack.c.h.b16 %v1846
    %v1905 = vunpack.c.l.b16 %v1847
    %v1906 = vunpack.c.h.b16 %v1847
    %v1907 = vunpack.c.l.b16 %v1848
    %v1908 = vunpack.c.h.b16 %v1848
    %v1909 = vpack.c.b16 %v1879, %v1877
    %v1910 = vpack.c.b16 %v1880, %v1878
    %v1911 = vpack.c.b16 %v1883, %v1881
    %v1912 = vpack.c.b16 %v1884, %v1882
    %v1913 = vpack.c.b16 %v1887, %v1885
    %v1914 = vpack.c.b16 %v1888, %v1886
    %v1915 = vpack.c.b16 %v1891, %v1889
    %v1916 = vpack.c.b16 %v1892, %v1890
    %v1917 = vpack.c.b16 %v1895, %v1893
    %v1918 = vpack.c.b16 %v1896, %v1894
    %v1919 = vpack.c.b16 %v1899, %v1897
    %v1920 = vpack.c.b16 %v1900, %v1898
    %v1921 = vpack.c.b16 %v1903, %v1901
    %v1922 = vpack.c.b16 %v1904, %v1902
    %v1923 = vpack.c.b16 %v1907, %v1905
    %v1924 = vpack.c.b16 %v1908, %v1906
    %1941 = vmatprep.subr.bf16.mxu0 %v1910
    %1942 = vmatpush1.bf16.msra.mxu0 %v1909
    %1943 = vmatprep.subr.bf16.mxu0 %v1912
    %1944 = vmatpush1.bf16.msra.mxu0 %v1911
    %1945 = vmatprep.subr.bf16.mxu0 %v1914
    %1946 = vmatpush1.bf16.msra.mxu0 %v1913
    %1947 = vmatprep.subr.bf16.mxu0 %v1916
    %1948 = vmatpush1.bf16.msra.mxu0 %v1915
    %1949 = vmatprep.subr.bf16.mxu0 %v1918
    %1950 = vmatpush1.bf16.msra.mxu0 %v1917
    %1951 = vmatprep.subr.bf16.mxu0 %v1920
    %1952 = vmatpush1.bf16.msra.mxu0 %v1919
    %1953 = vmatprep.subr.bf16.mxu0 %v1922
    %1954 = vmatpush1.bf16.msra.mxu0 %v1921
    %1955 = vmatprep.subr.bf16.mxu0 %v1924
    %1956 = vmatpush1.bf16.msra.mxu0 %v1923
    %1957 = vmatprep.subr.bf16.mxu0 0
    %1958 = vmatpush1.bf16.msra.mxu0 0
    %1959 = vmatprep.subr.bf16.mxu0 0
    %1960 = vmatpush1.bf16.msra.mxu0 0
    %1961 = vmatprep.subr.bf16.mxu0 0
    %1962 = vmatpush1.bf16.msra.mxu0 0
    %1963 = vmatprep.subr.bf16.mxu0 0
    %1964 = vmatpush1.bf16.msra.mxu0 0
    %1965 = vmatprep.subr.bf16.mxu0 0
    %1966 = vmatpush1.bf16.msra.mxu0 0
    %1967 = vmatprep.subr.bf16.mxu0 0
    %1968 = vmatpush1.bf16.msra.mxu0 0
    %1969 = vmatprep.subr.bf16.mxu0 0
    %1970 = vmatpush1.bf16.msra.mxu0 0
    %1971 = vmatprep.subr.bf16.mxu0 0
    %1972 = vmatpush1.bf16.msra.mxu0 0
    %1973 = vmatprep.mubr.bf16.mxu0 0
    %1974 = vmatmul.mubr.bf16.gmra.mrb[0].mxu0 %v1831
    %v1975 = vpop.f32.mrb[0].mxu0
    %v1976 = vadd.f32 %v1854, %v1975
    %v1977 = vpop.f32.mrb[0].mxu0
    %v1978 = vadd.f32 %v1858, %v1977
    %v1979 = vpop.f32.mrb[0].mxu0
    %v1980 = vadd.f32 %v1854, %v1979
    %v1981 = vpop.f32.mrb[0].mxu0
    %v1982 = vadd.f32 %v1858, %v1981
    %1983 = vmatprep.mubr.bf16.mxu0 0
    %1984 = vmatmul.mubr.bf16.gmra.mrb[0].mxu0 %v1832
    %v1985 = vpop.f32.mrb[0].mxu0
    %v1986 = vadd.f32 %v1854, %v1985
    %v1987 = vpop.f32.mrb[0].mxu0
    %v1988 = vadd.f32 %v1858, %v1987
    %v1989 = vpop.f32.mrb[0].mxu0
    %v1990 = vadd.f32 %v1854, %v1989
    %v1991 = vpop.f32.mrb[0].mxu0
    %v1992 = vadd.f32 %v1858, %v1991
    %1993 = vdwg.mxu0
    %v1994 = vmul.f32 %v1976, %v1976
    %v1995 = vmul.f32 %v1978, %v1978
    %v1996 = vmul.f32 %v1980, %v1980
    %v1997 = vmul.f32 %v1982, %v1982
    %v1998 = vmul.f32 %v1986, %v1986
    %v1999 = vmul.f32 %v1988, %v1988
    %v2000 = vmul.f32 %v1990, %v1990
    %v2001 = vmul.f32 %v1992, %v1992
    %v2002 = vmul.f32 %v1976, %v1994
    %v2003 = vmul.f32 %v1978, %v1995
    %v2004 = vmul.f32 %v1980, %v1996
    %v2005 = vmul.f32 %v1982, %v1997
    %v2006 = vmul.f32 %v1986, %v1998
    %v2007 = vmul.f32 %v1988, %v1999
    %v2008 = vmul.f32 %v1990, %v2000
    %v2009 = vmul.f32 %v1992, %v2001
    %v2010 = vmul.f32 %v2002, 0.044715
    %v2011 = vmul.f32 %v2003, 0.044715
    %v2012 = vmul.f32 %v2004, 0.044715
    %v2013 = vmul.f32 %v2005, 0.044715
    %v2014 = vmul.f32 %v2006, 0.044715
    %v2015 = vmul.f32 %v2007, 0.044715
    %v2016 = vmul.f32 %v2008, 0.044715
    %v2017 = vmul.f32 %v2009, 0.044715
    %v2018 = vadd.f32 %v1976, %v2010
    %v2019 = vadd.f32 %v1978, %v2011
    %v2020 = vadd.f32 %v1980, %v2012
    %v2021 = vadd.f32 %v1982, %v2013
    %v2022 = vadd.f32 %v1986, %v2014
    %v2023 = vadd.f32 %v1988, %v2015
    %v2024 = vadd.f32 %v1990, %v2016
    %v2025 = vadd.f32 %v1992, %v2017
    %v2026 = vmul.f32 %v2018, 0.7978846
    %v2027 = vmul.f32 %v2019, 0.7978846
    %v2028 = vmul.f32 %v2020, 0.7978846
    %v2029 = vmul.f32 %v2021, 0.7978846
    %v2030 = vmul.f32 %v2022, 0.7978846
    %v2031 = vmul.f32 %v2023, 0.7978846
    %v2032 = vmul.f32 %v2024, 0.7978846
    %v2033 = vmul.f32 %v2025, 0.7978846
    %v2034 = vtanh.pop %v2026
    %v2035 = vtanh.pop %v2027
    %v2036 = vtanh.pop %v2028
    %v2037 = vtanh.pop %v2029
    %v2038 = vtanh.pop %v2030
    %v2039 = vtanh.pop %v2031
    %v2040 = vtanh.pop %v2032
    %v2041 = vtanh.pop %v2033
    %v2042 = vadd.f32 %v2034, 1.0
    %v2043 = vadd.f32 %v2035, 1.0
    %v2044 = vadd.f32 %v2036, 1.0
    %v2045 = vadd.f32 %v2037, 1.0
    %v2046 = vadd.f32 %v2038, 1.0
    %v2047 = vadd.f32 %v2039, 1.0
    %v2048 = vadd.f32 %v2040, 1.0
    %v2049 = vadd.f32 %v2041, 1.0
    %v2050 = vmul.f32 %v2042, 0.5
    %v2051 = vmul.f32 %v2043, 0.5
    %v2052 = vmul.f32 %v2044, 0.5
    %v2053 = vmul.f32 %v2045, 0.5
    %v2054 = vmul.f32 %v2046, 0.5
    %v2055 = vmul.f32 %v2047, 0.5
    %v2056 = vmul.f32 %v2048, 0.5
    %v2057 = vmul.f32 %v2049, 0.5
    %v2058 = vmul.f32 %v1976, %v2050
    %v2059 = vmul.f32 %v1978, %v2051
    %v2060 = vmul.f32 %v1980, %v2052
    %v2061 = vmul.f32 %v1982, %v2053
    %v2062 = vmul.f32 %v1986, %v2054
    %v2063 = vmul.f32 %v1988, %v2055
    %v2064 = vmul.f32 %v1990, %v2056
    %v2065 = vmul.f32 %v1992, %v2057
    %v2066 = vpack.c.bf16 %v2060, %v2058
    %v2067 = vpack.c.bf16 %v2061, %v2059
    %v2068 = vpack.c.bf16 %v2064, %v2062
    %v2069 = vpack.c.bf16 %v2065, %v2063
    %v2070 = vld [vmem:[#allocation10] sm:$0xf]
    %v2071 = vld [vmem:[#allocation10 + $0x4] sm:$0xf]
    %v2072 = vld [vmem:[#allocation10 + $0x8] sm:$0xf]
    %v2073 = vld [vmem:[#allocation10 + $0xc] sm:$0xf]
    %v2074 = vld [vmem:[#allocation10 + $0x10] sm:$0xf]
    %v2075 = vld [vmem:[#allocation10 + $0x14] sm:$0xf]
    %v2076 = vld [vmem:[#allocation10 + $0x18] sm:$0xf]
    %v2077 = vld [vmem:[#allocation10 + $0x1c] sm:$0xf]
    %v2078 = vld [vmem:[#allocation10 + $0x20] sm:$0xf]
    %v2079 = vld [vmem:[#allocation10 + $0x24] sm:$0xf]
    %v2080 = vld [vmem:[#allocation10 + $0x28] sm:$0xf]
    %v2081 = vld [vmem:[#allocation10 + $0x2c] sm:$0xf]
    %v2082 = vld [vmem:[#allocation10 + $0x30] sm:$0xf]
    %v2083 = vld [vmem:[#allocation10 + $0x34] sm:$0xf]
    %v2084 = vld [vmem:[#allocation10 + $0x38] sm:$0xf]
    %v2085 = vld [vmem:[#allocation10 + $0x3c] sm:$0xf]
    %v2086 = vld [vmem:[#allocation10 + $0x40] sm:$0xf]
    %v2087 = vld [vmem:[#allocation10 + $0x44] sm:$0xf]
    %v2088 = vld [vmem:[#allocation10 + $0x48] sm:$0xf]
    %v2089 = vld [vmem:[#allocation10 + $0x4c] sm:$0xf]
    %v2090 = vld [vmem:[#allocation10 + $0x50] sm:$0xf]
    %v2091 = vld [vmem:[#allocation10 + $0x54] sm:$0xf]
    %v2092 = vld [vmem:[#allocation10 + $0x58] sm:$0xf]
    %v2093 = vld [vmem:[#allocation10 + $0x5c] sm:$0xf]
    %v2094 = vld [vmem:[#allocation10 + $0x60] sm:$0xf]
    %v2095 = vld [vmem:[#allocation10 + $0x64] sm:$0xf]
    %v2096 = vld [vmem:[#allocation10 + $0x68] sm:$0xf]
    %v2097 = vld [vmem:[#allocation10 + $0x6c] sm:$0xf]
    %v2098 = vld [vmem:[#allocation10 + $0x70] sm:$0xf]
    %v2099 = vld [vmem:[#allocation10 + $0x74] sm:$0xf]
    %v2100 = vld [vmem:[#allocation10 + $0x78] sm:$0xf]
    %v2101 = vld [vmem:[#allocation10 + $0x7c] sm:$0xf]
    %v2102 = vld [vmem:[%s12] sm:$0x1]
    %v2104 = vlaneseq
    %v2105 = vshrl.u32 %v2104, 7
    %v2106 = vsub.s32 0, %v2105
    %v2107 = vrot.slane %v2102, %v2106
    %v2141 = vunpack.c.l.b16 %v2070
    %v2142 = vunpack.c.l.b16 %v2071
    %v2143 = vunpack.c.l.b16 %v2072
    %v2144 = vunpack.c.l.b16 %v2073
    %v2145 = vunpack.c.l.b16 %v2074
    %v2146 = vunpack.c.l.b16 %v2075
    %v2147 = vunpack.c.l.b16 %v2076
    %v2148 = vunpack.c.l.b16 %v2077
    %v2149 = vunpack.c.l.b16 %v2078
    %v2150 = vunpack.c.l.b16 %v2079
    %v2151 = vunpack.c.l.b16 %v2080
    %v2152 = vunpack.c.l.b16 %v2081
    %v2153 = vunpack.c.l.b16 %v2082
    %v2154 = vunpack.c.l.b16 %v2083
    %v2155 = vunpack.c.l.b16 %v2084
    %v2156 = vunpack.c.l.b16 %v2085
    %v2157 = vunpack.c.l.b16 %v2086
    %v2158 = vunpack.c.l.b16 %v2087
    %v2159 = vunpack.c.l.b16 %v2088
    %v2160 = vunpack.c.l.b16 %v2089
    %v2161 = vunpack.c.l.b16 %v2090
    %v2162 = vunpack.c.l.b16 %v2091
    %v2163 = vunpack.c.l.b16 %v2092
    %v2164 = vunpack.c.l.b16 %v2093
    %v2165 = vunpack.c.l.b16 %v2094
    %v2166 = vunpack.c.l.b16 %v2095
    %v2167 = vunpack.c.l.b16 %v2096
    %v2168 = vunpack.c.l.b16 %v2097
    %v2169 = vunpack.c.l.b16 %v2098
    %v2170 = vunpack.c.l.b16 %v2099
    %v2171 = vunpack.c.l.b16 %v2100
    %v2172 = vunpack.c.l.b16 %v2101
    %v2173 = vpack.c.b16 %v2142, %v2141
    %v2174 = vpack.c.b16 %v2144, %v2143
    %v2175 = vpack.c.b16 %v2146, %v2145
    %v2176 = vpack.c.b16 %v2148, %v2147
    %v2177 = vpack.c.b16 %v2150, %v2149
    %v2178 = vpack.c.b16 %v2152, %v2151
    %v2179 = vpack.c.b16 %v2154, %v2153
    %v2180 = vpack.c.b16 %v2156, %v2155
    %v2181 = vpack.c.b16 %v2158, %v2157
    %v2182 = vpack.c.b16 %v2160, %v2159
    %v2183 = vpack.c.b16 %v2162, %v2161
    %v2184 = vpack.c.b16 %v2164, %v2163
    %v2185 = vpack.c.b16 %v2166, %v2165
    %v2186 = vpack.c.b16 %v2168, %v2167
    %v2187 = vpack.c.b16 %v2170, %v2169
    %v2188 = vpack.c.b16 %v2172, %v2171
    %2205 = vmatprep.subr.bf16.mxu0 0
    %2206 = vmatpush1.bf16.msra.mxu0 %v2173
    %2207 = vmatprep.subr.bf16.mxu0 0
    %2208 = vmatpush1.bf16.msra.mxu0 %v2174
    %2209 = vmatprep.subr.bf16.mxu0 0
    %2210 = vmatpush1.bf16.msra.mxu0 %v2175
    %2211 = vmatprep.subr.bf16.mxu0 0
    %2212 = vmatpush1.bf16.msra.mxu0 %v2176
    %2213 = vmatprep.subr.bf16.mxu0 0
    %2214 = vmatpush1.bf16.msra.mxu0 %v2177
    %2215 = vmatprep.subr.bf16.mxu0 0
    %2216 = vmatpush1.bf16.msra.mxu0 %v2178
    %2217 = vmatprep.subr.bf16.mxu0 0
    %2218 = vmatpush1.bf16.msra.mxu0 %v2179
    %2219 = vmatprep.subr.bf16.mxu0 0
    %2220 = vmatpush1.bf16.msra.mxu0 %v2180
    %2221 = vmatprep.subr.bf16.mxu0 0
    %2222 = vmatpush1.bf16.msra.mxu0 %v2181
    %2223 = vmatprep.subr.bf16.mxu0 0
    %2224 = vmatpush1.bf16.msra.mxu0 %v2182
    %2225 = vmatprep.subr.bf16.mxu0 0
    %2226 = vmatpush1.bf16.msra.mxu0 %v2183
    %2227 = vmatprep.subr.bf16.mxu0 0
    %2228 = vmatpush1.bf16.msra.mxu0 %v2184
    %2229 = vmatprep.subr.bf16.mxu0 0
    %2230 = vmatpush1.bf16.msra.mxu0 %v2185
    %2231 = vmatprep.subr.bf16.mxu0 0
    %2232 = vmatpush1.bf16.msra.mxu0 %v2186
    %2233 = vmatprep.subr.bf16.mxu0 0
    %2234 = vmatpush1.bf16.msra.mxu0 %v2187
    %2235 = vmatprep.subr.bf16.mxu0 0
    %2236 = vmatpush1.bf16.msra.mxu0 %v2188
    %2237 = vmatprep.mubr.bf16.mxu0 %v2067
    %2238 = vmatmul.mubr.bf16.gmra.mrb[0].mxu0 %v2066
    %v2239 = vpop.f32.mrb[0].mxu0
    %v2240 = vadd.f32 %v2107, %v2239
    %v2241 = vpop.f32.mrb[0].mxu0
    %v2242 = vpop.f32.mrb[0].mxu0
    %v2243 = vadd.f32 %v2107, %v2242
    %v2244 = vpop.f32.mrb[0].mxu0
    %2245 = vmatprep.mubr.bf16.mxu0 %v2069
    %2246 = vmatmul.mubr.bf16.gmra.mrb[0].mxu0 %v2068
    %v2247 = vpop.f32.mrb[0].mxu0
    %v2248 = vadd.f32 %v2107, %v2247
    %v2249 = vpop.f32.mrb[0].mxu0
    %v2250 = vpop.f32.mrb[0].mxu0
    %v2251 = vadd.f32 %v2107, %v2250
    %v2252 = vpop.f32.mrb[0].mxu0
    %2253 = vdwg.mxu0
    %v2254 = vadd.f32 %v1753, %v2240
    %v2255 = vadd.f32 %v1754, %v2243
    %v2256 = vadd.f32 %v1755, %v2248
    %v2257 = vadd.f32 %v1756, %v2251
    %2258 = vst [vmem:[#allocation11] sm:$0xff] %v2254
    %2259 = vst [vmem:[#allocation11 + $0x8] sm:$0xff] %v2255
    %2260 = vst [vmem:[#allocation11 + $0x10] sm:$0xff] %v2256
    %2261 = vst [vmem:[#allocation11 + $0x18] sm:$0xff] %v2257
    // Predicated region
    $region74: #{tpu_custom_call.1} parent=1 // pred_check
      _
    $region75: #{tpu_custom_call.1} parent=1 // pred_check_branch
      %2263 = sbr.rel (0) target = $region77
    $region76: #{tpu_custom_call.1} parent=1 // pred_region
      %s2265 = ssub.s32 512, 512
      %2266 = vsyncadd [#allocation4], %s2265
      %s2267 = sshll.u32 [#allocation11], 4
      %s2268 = int_to_ptr.vmem [resolvable:$true] %s2267
      %2273 = dma.vmem_to_hbm [thread:$0]  %s2268, 512, %s13, [#allocation4], 128, 128, 8
    $region77: #{tpu_custom_call.1} parent=1 // pred_fallthru
      _
    // Predicated region
    $region78: #{tpu_custom_call.1} parent=1 // pred_check
      _
    $region79: #{tpu_custom_call.1} parent=1 // pred_check_branch
      %2275 = sbr.rel (0) target = $region81
    $region80: #{tpu_custom_call.1} parent=1 // pred_region
      %2276 = dma.done [#allocation4], 512
    $region81: #{tpu_custom_call.1} parent=1 // pred_fallthru
      _
    %2277 = vsyncpa [#allocation3], 1
    %2278 = vsyncpa [#allocation6], 1
    %2279 = vsyncpa [#allocation9], 1
    %2280 = vsyncpa [#allocation4], 1

// kernel: tpu_custom_call.1
$region0: #{tpu_custom_call.1}
  #allocation0 [shape = 'u32[]', space=smem, size = 0x4, offset = 0x4, fixed_abs, tag = 'smem constant byte address 0x4 - core index']
  #allocation1 [shape = 'u32[144,128]{1,0:T(1,128)}', space=vmem, size = 0x12000, scoped, tag = 'internal scratch']
  %s0 = inlined_call_operand.hbm [shape: f32[2,16,128], index: 0, kind: input, shape index: {}]
  %s1 = inlined_call_operand.vmem [shape: f32[1,128], index: 1, kind: input, shape index: {}]
  %s2 = inlined_call_operand.vmem [shape: f32[1,128], index: 2, kind: input, shape index: {}]
  %s3 = inlined_call_operand.hbm [shape: bf16[128,384], index: 3, kind: input, shape index: {}]
  %s4 = inlined_call_operand.vmem [shape: f32[1,384], index: 4, kind: input, shape index: {}]
  %s5 = inlined_call_operand.hbm [shape: bf16[128,128], index: 5, kind: input, shape index: {}]
  %s6 = inlined_call_operand.vmem [shape: f32[1,128], index: 6, kind: input, shape index: {}]
  %s7 = inlined_call_operand.vmem [shape: f32[1,128], index: 7, kind: input, shape index: {}]
  %s8 = inlined_call_operand.vmem [shape: f32[1,128], index: 8, kind: input, shape index: {}]
  %s9 = inlined_call_operand.hbm [shape: bf16[128,256], index: 9, kind: input, shape index: {}]
  %s10 = inlined_call_operand.vmem [shape: f32[1,256], index: 10, kind: input, shape index: {}]
  %s11 = inlined_call_operand.hbm [shape: bf16[256,128], index: 11, kind: input, shape index: {}]
  %s12 = inlined_call_operand.vmem [shape: f32[1,128], index: 12, kind: input, shape index: {}]
  %s13 = inlined_call_operand.hbm [shape: f32[2,16,128], index: 13, kind: output, shape index: {}]
  %s14 = sld [smem:[#allocation0]]
  $region82: #{tpu_custom_call.1} parent=0
    _
  %s16 = ssub.s32 1, %s14
  %s17 = scalar_select 0, %s16, %s14
  $region1: #{tpu_custom_call.1} parent=0
    #allocation2 [shape = 'u8[16384]{0}', space=vmem, size = 0x4000, scoped, tag = 'input window, operand 0, single buffered']
    #allocation3 [shape = 's32[1]{0}', space=sflag, size = 0x4, scoped, tag = 'scoped memory for tpu_custom_call.1']
    #allocation4 [shape = 's32[1]{0}', space=sflag, size = 0x4, scoped, tag = 'scoped memory for tpu_custom_call.1']
    #allocation5 [shape = 'u8[98304]{0}', space=vmem, size = 0x18000, scoped, tag = 'input window, operand 3, single buffered']
    #allocation6 [shape = 's32[1]{0}', space=sflag, size = 0x4, scoped, tag = 'scoped memory for tpu_custom_call.1']
    #allocation7 [shape = 'u8[32768]{0}', space=vmem, size = 0x8000, scoped, tag = 'input window, operand 5, single buffered']
    #allocation8 [shape = 'u8[65536]{0}', space=vmem, size = 0x10000, scoped, tag = 'input window, operand 9, single buffered']
    #allocation9 [shape = 's32[1]{0}', space=sflag, size = 0x4, scoped, tag = 'scoped memory for tpu_custom_call.1']
    #allocation10 [shape = 'u8[65536]{0}', space=vmem, size = 0x10000, scoped, tag = 'input window, operand 11, single buffered']
    #allocation11 [shape = 'u8[16384]{0}', space=vmem, size = 0x4000, scoped, tag = 'output window, operand 0, single buffered']
    %18 = vsyncpa [#allocation3], 0
    %19 = vsyncpa [#allocation6], 0
    %20 = vsyncpa [#allocation9], 0
    %21 = vsyncpa [#allocation4], 0
    // Predicated region
    $region2: #{tpu_custom_call.1} parent=1 // pred_check
      _
    $region3: #{tpu_custom_call.1} parent=1 // pred_check_branch
      %23 = sbr.rel (0) target = $region5
    $region4: #{tpu_custom_call.1} parent=1 // pred_region
      %s25 = ssub.s32 512, 512
      %26 = vsyncadd [#allocation3], %s25
      %s27 = sshll.u32 [#allocation2], 4
      %s28 = int_to_ptr.vmem [resolvable:$true] %s27
      %33 = dma.hbm_to_vmem [thread:$0]  %s0, 512, %s28, [#allocation3], 128, 128, 8
    $region5: #{tpu_custom_call.1} parent=1 // pred_fallthru
      _
    // Predicated region
    $region6: #{tpu_custom_call.1} parent=1 // pred_check
      _
    $region7: #{tpu_custom_call.1} parent=1 // pred_check_branch
      %35 = sbr.rel (0) target = $region9
    $region8: #{tpu_custom_call.1} parent=1 // pred_region
      _
    $region9: #{tpu_custom_call.1} parent=1 // pred_fallthru
      _
    // Predicated region
    $region10: #{tpu_custom_call.1} parent=1 // pred_check
      _
    $region11: #{tpu_custom_call.1} parent=1 // pred_check_branch
      %37 = sbr.rel (0) target = $region13
    $region12: #{tpu_custom_call.1} parent=1 // pred_region
      _
    $region13: #{tpu_custom_call.1} parent=1 // pred_fallthru
      _
    // Predicated region
    $region14: #{tpu_custom_call.1} parent=1 // pred_check
      _
    $region15: #{tpu_custom_call.1} parent=1 // pred_check_branch
      %39 = sbr.rel (0) target = $region17
    $region16: #{tpu_custom_call.1} parent=1 // pred_region
      %s41 = ssub.s32 3072, 3072
      %42 = vsyncadd [#allocation6], %s41
      %s43 = sshll.u32 [#allocation5], 4
      %s44 = int_to_ptr.vmem [resolvable:$true] %s43
      %49 = dma.hbm_to_vmem [thread:$0]  %s3, 3072, %s44, [#allocation6], 192, 192, 12
    $region17: #{tpu_custom_call.1} parent=1 // pred_fallthru
      _
    // Predicated region
    $region18: #{tpu_custom_call.1} parent=1 // pred_check
      _
    $region19: #{tpu_custom_call.1} parent=1 // pred_check_branch
      %51 = sbr.rel (0) target = $region21
    $region20: #{tpu_custom_call.1} parent=1 // pred_region
      _
    $region21: #{tpu_custom_call.1} parent=1 // pred_fallthru
      _
    // Predicated region
    $region22: #{tpu_custom_call.1} parent=1 // pred_check
      _
    $region23: #{tpu_custom_call.1} parent=1 // pred_check_branch
      %53 = sbr.rel (0) target = $region25
    $region24: #{tpu_custom_call.1} parent=1 // pred_region
      %s55 = ssub.s32 1024, 1024
      %56 = vsyncadd [#allocation6], %s55
      %s57 = sshll.u32 [#allocation7], 4
      %s58 = int_to_ptr.vmem [resolvable:$true] %s57
      %63 = dma.hbm_to_vmem [thread:$0]  %s5, 1024, %s58, [#allocation6], 64, 64, 4
    $region25: #{tpu_custom_call.1} parent=1 // pred_fallthru
      _
    // Predicated region
    $region26: #{tpu_custom_call.1} parent=1 // pred_check
      _
    $region27: #{tpu_custom_call.1} parent=1 // pred_check_branch
      %65 = sbr.rel (0) target = $region29
    $region28: #{tpu_custom_call.1} parent=1 // pred_region
      _
    $region29: #{tpu_custom_call.1} parent=1 // pred_fallthru
      _
    // Predicated region
    $region30: #{tpu_custom_call.1} parent=1 // pred_check
      _
    $region31: #{tpu_custom_call.1} parent=1 // pred_check_branch
      %67 = sbr.rel (0) target = $region33
    $region32: #{tpu_custom_call.1} parent=1 // pred_region
      _
    $region33: #{tpu_custom_call.1} parent=1 // pred_fallthru
      _
    // Predicated region
    $region34: #{tpu_custom_call.1} parent=1 // pred_check
      _
    $region35: #{tpu_custom_call.1} parent=1 // pred_check_branch
      %69 = sbr.rel (0) target = $region37
    $region36: #{tpu_custom_call.1} parent=1 // pred_region
      _
    $region37: #{tpu_custom_call.1} parent=1 // pred_fallthru
      _
    // Predicated region
    $region38: #{tpu_custom_call.1} parent=1 // pred_check
      _
    $region39: #{tpu_custom_call.1} parent=1 // pred_check_branch
      %71 = sbr.rel (0) target = $region41
    $region40: #{tpu_custom_call.1} parent=1 // pred_region
      %s73 = ssub.s32 2048, 2048
      %74 = vsyncadd [#allocation9], %s73
      %s75 = sshll.u32 [#allocation8], 4
      %s76 = int_to_ptr.vmem [resolvable:$true] %s75
      %81 = dma.hbm_to_vmem [thread:$0]  %s9, 2048, %s76, [#allocation9], 128, 128, 8
    $region41: #{tpu_custom_call.1} parent=1 // pred_fallthru
      _
    // Predicated region
    $region42: #{tpu_custom_call.1} parent=1 // pred_check
      _
    $region43: #{tpu_custom_call.1} parent=1 // pred_check_branch
      %83 = sbr.rel (0) target = $region45
    $region44: #{tpu_custom_call.1} parent=1 // pred_region
      _
    $region45: #{tpu_custom_call.1} parent=1 // pred_fallthru
      _
    // Predicated region
    $region46: #{tpu_custom_call.1} parent=1 // pred_check
      _
    $region47: #{tpu_custom_call.1} parent=1 // pred_check_branch
      %85 = sbr.rel (0) target = $region49
    $region48: #{tpu_custom_call.1} parent=1 // pred_region
      %s87 = ssub.s32 2048, 2048
      %88 = vsyncadd [#allocation9], %s87
      %s89 = sshll.u32 [#allocation10], 4
      %s90 = int_to_ptr.vmem [resolvable:$true] %s89
      %95 = dma.hbm_to_vmem [thread:$0]  %s11, 2048, %s90, [#allocation9], 64, 64, 4
    $region49: #{tpu_custom_call.1} parent=1 // pred_fallthru
      _
    // Predicated region
    $region50: #{tpu_custom_call.1} parent=1 // pred_check
      _
    $region51: #{tpu_custom_call.1} parent=1 // pred_check_branch
      %97 = sbr.rel (0) target = $region53
    $region52: #{tpu_custom_call.1} parent=1 // pred_region
      _
    $region53: #{tpu_custom_call.1} parent=1 // pred_fallthru
      _
    // Predicated region
    $region54: #{tpu_custom_call.1} parent=1 // pred_check
      _
    $region55: #{tpu_custom_call.1} parent=1 // pred_check_branch
      %99 = sbr.rel (0) target = $region57
    $region56: #{tpu_custom_call.1} parent=1 // pred_region
      %100 = dma.done [#allocation3], 512
    $region57: #{tpu_custom_call.1} parent=1 // pred_fallthru
      _
    // Predicated region
    $region58: #{tpu_custom_call.1} parent=1 // pred_check
      _
    $region59: #{tpu_custom_call.1} parent=1 // pred_check_branch
      %102 = sbr.rel (0) target = $region61
    $region60: #{tpu_custom_call.1} parent=1 // pred_region
      %103 = dma.done [#allocation6], 3072
    $region61: #{tpu_custom_call.1} parent=1 // pred_fallthru
      _
    // Predicated region
    $region62: #{tpu_custom_call.1} parent=1 // pred_check
      _
    $region63: #{tpu_custom_call.1} parent=1 // pred_check_branch
      %105 = sbr.rel (0) target = $region65
    $region64: #{tpu_custom_call.1} parent=1 // pred_region
      %106 = dma.done [#allocation6], 1024
    $region65: #{tpu_custom_call.1} parent=1 // pred_fallthru
      _
    // Predicated region
    $region66: #{tpu_custom_call.1} parent=1 // pred_check
      _
    $region67: #{tpu_custom_call.1} parent=1 // pred_check_branch
      %108 = sbr.rel (0) target = $region69
    $region68: #{tpu_custom_call.1} parent=1 // pred_region
      %109 = dma.done [#allocation9], 2048
    $region69: #{tpu_custom_call.1} parent=1 // pred_fallthru
      _
    // Predicated region
    $region70: #{tpu_custom_call.1} parent=1 // pred_check
      _
    $region71: #{tpu_custom_call.1} parent=1 // pred_check_branch
      %111 = sbr.rel (0) target = $region73
    $region72: #{tpu_custom_call.1} parent=1 // pred_region
      %112 = dma.done [#allocation9], 2048
    $region73: #{tpu_custom_call.1} parent=1 // pred_fallthru
      _
    %v114 = vld [vmem:[#allocation2] sm:$0xff]
    %v115 = vld [vmem:[#allocation2 + $0x8] sm:$0xff]
    %v116 = vld [vmem:[#allocation2 + $0x10] sm:$0xff]
    %v117 = vld [vmem:[#allocation2 + $0x18] sm:$0xff]
    %v118 = vld [vmem:[%s1] sm:$0x1]
    %v119 = vld [vmem:[%s2] sm:$0x1]
    %120 = vadd.xlane.f32.xlu0 %v114
    %v121 = vpop.xlane.xlu0 %120
    %122 = vadd.xlane.f32.xlu0 %v115
    %v123 = vpop.xlane.xlu0 %122
    %124 = vadd.xlane.f32.xlu0 %v116
    %v125 = vpop.xlane.xlu0 %124
    %126 = vadd.xlane.f32.xlu0 %v117
    %v127 = vpop.xlane.xlu0 %126
    %v128 = vrcp.pop 128.0
    %v129 = vmul.f32 %v121, %v128
    %v130 = vmul.f32 %v123, %v128
    %v131 = vmul.f32 %v125, %v128
    %v132 = vmul.f32 %v127, %v128
    %v133 = vmul.f32 %v114, %v114
    %v134 = vmul.f32 %v115, %v115
    %v135 = vmul.f32 %v116, %v116
    %v136 = vmul.f32 %v117, %v117
    %137 = vadd.xlane.f32.xlu0 %v133
    %v138 = vpop.xlane.xlu0 %137
    %139 = vadd.xlane.f32.xlu0 %v134
    %v140 = vpop.xlane.xlu0 %139
    %141 = vadd.xlane.f32.xlu0 %v135
    %v142 = vpop.xlane.xlu0 %141
    %143 = vadd.xlane.f32.xlu0 %v136
    %v144 = vpop.xlane.xlu0 %143
    %v145 = vmul.f32 %v138, %v128
    %v146 = vmul.f32 %v140, %v128
    %v147 = vmul.f32 %v142, %v128
    %v148 = vmul.f32 %v144, %v128
    %v149 = vmul.f32 %v129, %v129
    %v150 = vmul.f32 %v130, %v130
    %v151 = vmul.f32 %v131, %v131
    %v152 = vmul.f32 %v132, %v132
    %v153 = vsub.f32 %v145, %v149
    %v154 = vsub.f32 %v146, %v150
    %v155 = vsub.f32 %v147, %v151
    %v156 = vsub.f32 %v148, %v152
    %v157 = vsub.f32 %v114, %v129
    %v158 = vsub.f32 %v115, %v130
    %v159 = vsub.f32 %v116, %v131
    %v160 = vsub.f32 %v117, %v132
    %v161 = vadd.f32 %v153, 1e-06
    %v162 = vadd.f32 %v154, 1e-06
    %v163 = vadd.f32 %v155, 1e-06
    %v164 = vadd.f32 %v156, 1e-06
    %v165 = vrsqrt.pop %v161
    %v166 = vrsqrt.pop %v162
    %v167 = vrsqrt.pop %v163
    %v168 = vrsqrt.pop %v164
    %v169 = vmul.f32 %v157, %v165
    %v170 = vmul.f32 %v158, %v166
    %v171 = vmul.f32 %v159, %v167
    %v172 = vmul.f32 %v160, %v168
    %v174 = vlaneseq
    %v175 = vshrl.u32 %v174, 7
    %v176 = vsub.s32 0, %v175
    %v177 = vrot.slane %v118, %v176
    %v179 = vmul.f32 %v169, %v177
    %v180 = vmul.f32 %v170, %v177
    %v181 = vmul.f32 %v171, %v177
    %v182 = vmul.f32 %v172, %v177
    %v184 = vlaneseq
    %v185 = vshrl.u32 %v184, 7
    %v186 = vsub.s32 0, %v185
    %v187 = vrot.slane %v119, %v186
    %v189 = vadd.f32 %v179, %v187
    %v190 = vadd.f32 %v180, %v187
    %v191 = vadd.f32 %v181, %v187
    %v192 = vadd.f32 %v182, %v187
    %v193 = vpack.c.bf16 %v190, %v189
    %v194 = vpack.c.bf16 %v192, %v191
    %v195 = vld [vmem:[#allocation5] sm:$0xff]
    %v196 = vld [vmem:[#allocation5 + $0x8] sm:$0xf]
    %v197 = vld [vmem:[#allocation5 + $0xc] sm:$0xff]
    %v198 = vld [vmem:[#allocation5 + $0x14] sm:$0xf]
    %v199 = vld [vmem:[#allocation5 + $0x18] sm:$0xff]
    %v200 = vld [vmem:[#allocation5 + $0x20] sm:$0xf]
    %v201 = vld [vmem:[#allocation5 + $0x24] sm:$0xff]
    %v202 = vld [vmem:[#allocation5 + $0x2c] sm:$0xf]
    %v203 = vld [vmem:[#allocation5 + $0x30] sm:$0xff]
    %v204 = vld [vmem:[#allocation5 + $0x38] sm:$0xf]
    %v205 = vld [vmem:[#allocation5 + $0x3c] sm:$0xff]
    %v206 = vld [vmem:[#allocation5 + $0x44] sm:$0xf]
    %v207 = vld [vmem:[#allocation5 + $0x48] sm:$0xff]
    %v208 = vld [vmem:[#allocation5 + $0x50] sm:$0xf]
    %v209 = vld [vmem:[#allocation5 + $0x54] sm:$0xff]
    %v210 = vld [vmem:[#allocation5 + $0x5c] sm:$0xf]
    %v211 = vld [vmem:[#allocation5 + $0x60] sm:$0xff]
    %v212 = vld [vmem:[#allocation5 + $0x68] sm:$0xf]
    %v213 = vld [vmem:[#allocation5 + $0x6c] sm:$0xff]
    %v214 = vld [vmem:[#allocation5 + $0x74] sm:$0xf]
    %v215 = vld [vmem:[#allocation5 + $0x78] sm:$0xff]
    %v216 = vld [vmem:[#allocation5 + $0x80] sm:$0xf]
    %v217 = vld [vmem:[#allocation5 + $0x84] sm:$0xff]
    %v218 = vld [vmem:[#allocation5 + $0x8c] sm:$0xf]
    %v219 = vld [vmem:[#allocation5 + $0x90] sm:$0xff]
    %v220 = vld [vmem:[#allocation5 + $0x98] sm:$0xf]
    %v221 = vld [vmem:[#allocation5 + $0x9c] sm:$0xff]
    %v222 = vld [vmem:[#allocation5 + $0xa4] sm:$0xf]
    %v223 = vld [vmem:[#allocation5 + $0xa8] sm:$0xff]
    %v224 = vld [vmem:[#allocation5 + $0xb0] sm:$0xf]
    %v225 = vld [vmem:[#allocation5 + $0xb4] sm:$0xff]
    %v226 = vld [vmem:[#allocation5 + $0xbc] sm:$0xf]
    %v227 = vld [vmem:[%s4] sm:$0x7]
    %v229 = vlaneseq
    %v230 = vshrl.u32 %v229, 7
    %v231 = vsub.s32 0, %v230
    %v232 = vrot.slane %v227, %v231
    %v233 = vlaneseq
    %v234 = vshrl.u32 %v233, 7
    %v235 = vsub.s32 1, %v234
    %v236 = vrot.slane %v227, %v235
    %v237 = vlaneseq
    %v238 = vshrl.u32 %v237, 7
    %v239 = vsub.s32 2, %v238
    %v240 = vrot.slane %v227, %v239
    %v276 = vunpack.c.l.b16 %v195
    %v277 = vunpack.c.h.b16 %v195
    %v278 = vunpack.c.l.b16 %v196
    %v279 = vunpack.c.l.b16 %v197
    %v280 = vunpack.c.h.b16 %v197
    %v281 = vunpack.c.l.b16 %v198
    %v282 = vunpack.c.l.b16 %v199
    %v283 = vunpack.c.h.b16 %v199
    %v284 = vunpack.c.l.b16 %v200
    %v285 = vunpack.c.l.b16 %v201
    %v286 = vunpack.c.h.b16 %v201
    %v287 = vunpack.c.l.b16 %v202
    %v288 = vunpack.c.l.b16 %v203
    %v289 = vunpack.c.h.b16 %v203
    %v290 = vunpack.c.l.b16 %v204
    %v291 = vunpack.c.l.b16 %v205
    %v292 = vunpack.c.h.b16 %v205
    %v293 = vunpack.c.l.b16 %v206
    %v294 = vunpack.c.l.b16 %v207
    %v295 = vunpack.c.h.b16 %v207
    %v296 = vunpack.c.l.b16 %v208
    %v297 = vunpack.c.l.b16 %v209
    %v298 = vunpack.c.h.b16 %v209
    %v299 = vunpack.c.l.b16 %v210
    %v300 = vunpack.c.l.b16 %v211
    %v301 = vunpack.c.h.b16 %v211
    %v302 = vunpack.c.l.b16 %v212
    %v303 = vunpack.c.l.b16 %v213
    %v304 = vunpack.c.h.b16 %v213
    %v305 = vunpack.c.l.b16 %v214
    %v306 = vunpack.c.l.b16 %v215
    %v307 = vunpack.c.h.b16 %v215
    %v308 = vunpack.c.l.b16 %v216
    %v309 = vunpack.c.l.b16 %v217
    %v310 = vunpack.c.h.b16 %v217
    %v311 = vunpack.c.l.b16 %v218
    %v312 = vunpack.c.l.b16 %v219
    %v313 = vunpack.c.h.b16 %v219
    %v314 = vunpack.c.l.b16 %v220
    %v315 = vunpack.c.l.b16 %v221
    %v316 = vunpack.c.h.b16 %v221
    %v317 = vunpack.c.l.b16 %v222
    %v318 = vunpack.c.l.b16 %v223
    %v319 = vunpack.c.h.b16 %v223
    %v320 = vunpack.c.l.b16 %v224
    %v321 = vunpack.c.l.b16 %v225
    %v322 = vunpack.c.h.b16 %v225
    %v323 = vunpack.c.l.b16 %v226
    %v324 = vpack.c.b16 %v279, %v276
    %v325 = vpack.c.b16 %v280, %v277
    %v326 = vpack.c.b16 %v281, %v278
    %v327 = vpack.c.b16 %v285, %v282
    %v328 = vpack.c.b16 %v286, %v283
    %v329 = vpack.c.b16 %v287, %v284
    %v330 = vpack.c.b16 %v291, %v288
    %v331 = vpack.c.b16 %v292, %v289
    %v332 = vpack.c.b16 %v293, %v290
    %v333 = vpack.c.b16 %v297, %v294
    %v334 = vpack.c.b16 %v298, %v295
    %v335 = vpack.c.b16 %v299, %v296
    %v336 = vpack.c.b16 %v303, %v300
    %v337 = vpack.c.b16 %v304, %v301
    %v338 = vpack.c.b16 %v305, %v302
    %v339 = vpack.c.b16 %v309, %v306
    %v340 = vpack.c.b16 %v310, %v307
    %v341 = vpack.c.b16 %v311, %v308
    %v342 = vpack.c.b16 %v315, %v312
    %v343 = vpack.c.b16 %v316, %v313
    %v344 = vpack.c.b16 %v317, %v314
    %v345 = vpack.c.b16 %v321, %v318
    %v346 = vpack.c.b16 %v322, %v319
    %v347 = vpack.c.b16 %v323, %v320
    %372 = vmatprep.subr.bf16.mxu0 %v325
    %373 = vmatpush1.bf16.msra.mxu0 %v324
    %374 = vmatprep.subr.bf16.mxu0 %v328
    %375 = vmatpush1.bf16.msra.mxu0 %v327
    %376 = vmatprep.subr.bf16.mxu0 %v331
    %377 = vmatpush1.bf16.msra.mxu0 %v330
    %378 = vmatprep.subr.bf16.mxu0 %v334
    %379 = vmatpush1.bf16.msra.mxu0 %v333
    %380 = vmatprep.subr.bf16.mxu0 %v337
    %381 = vmatpush1.bf16.msra.mxu0 %v336
    %382 = vmatprep.subr.bf16.mxu0 %v340
    %383 = vmatpush1.bf16.msra.mxu0 %v339
    %384 = vmatprep.subr.bf16.mxu0 %v343
    %385 = vmatpush1.bf16.msra.mxu0 %v342
    %386 = vmatprep.subr.bf16.mxu0 %v346
    %387 = vmatpush1.bf16.msra.mxu0 %v345
    %388 = vmatprep.subr.bf16.mxu0 0
    %389 = vmatpush1.bf16.msra.mxu0 0
    %390 = vmatprep.subr.bf16.mxu0 0
    %391 = vmatpush1.bf16.msra.mxu0 0
    %392 = vmatprep.subr.bf16.mxu0 0
    %393 = vmatpush1.bf16.msra.mxu0 0
    %394 = vmatprep.subr.bf16.mxu0 0
    %395 = vmatpush1.bf16.msra.mxu0 0
    %396 = vmatprep.subr.bf16.mxu0 0
    %397 = vmatpush1.bf16.msra.mxu0 0
    %398 = vmatprep.subr.bf16.mxu0 0
    %399 = vmatpush1.bf16.msra.mxu0 0
    %400 = vmatprep.subr.bf16.mxu0 0
    %401 = vmatpush1.bf16.msra.mxu0 0
    %402 = vmatprep.subr.bf16.mxu0 0
    %403 = vmatpush1.bf16.msra.mxu0 0
    %404 = vmatprep.mubr.bf16.mxu0 0
    %405 = vmatmul.mubr.bf16.gmra.mrb[0].mxu0 %v193
    %v406 = vpop.f32.mrb[0].mxu0
    %v407 = vadd.f32 %v232, %v406
    %v408 = vpop.f32.mrb[0].mxu0
    %v409 = vadd.f32 %v236, %v408
    %v410 = vpop.f32.mrb[0].mxu0
    %v411 = vadd.f32 %v232, %v410
    %v412 = vpop.f32.mrb[0].mxu0
    %v413 = vadd.f32 %v236, %v412
    %414 = vmatprep.mubr.bf16.mxu0 0
    %415 = vmatmul.mubr.bf16.gmra.mrb[0].mxu0 %v194
    %v416 = vpop.f32.mrb[0].mxu0
    %v417 = vadd.f32 %v232, %v416
    %v418 = vpop.f32.mrb[0].mxu0
    %v419 = vadd.f32 %v236, %v418
    %v420 = vpop.f32.mrb[0].mxu0
    %v421 = vadd.f32 %v232, %v420
    %v422 = vpop.f32.mrb[0].mxu0
    %v423 = vadd.f32 %v236, %v422
    %424 = vdwg.mxu0
    %425 = vmatprep.subr.bf16.mxu0 0
    %426 = vmatpush1.bf16.msra.mxu0 %v326
    %427 = vmatprep.subr.bf16.mxu0 0
    %428 = vmatpush1.bf16.msra.mxu0 %v329
    %429 = vmatprep.subr.bf16.mxu0 0
    %430 = vmatpush1.bf16.msra.mxu0 %v332
    %431 = vmatprep.subr.bf16.mxu0 0
    %432 = vmatpush1.bf16.msra.mxu0 %v335
    %433 = vmatprep.subr.bf16.mxu0 0
    %434 = vmatpush1.bf16.msra.mxu0 %v338
    %435 = vmatprep.subr.bf16.mxu0 0
    %436 = vmatpush1.bf16.msra.mxu0 %v341
    %437 = vmatprep.subr.bf16.mxu0 0
    %438 = vmatpush1.bf16.msra.mxu0 %v344
    %439 = vmatprep.subr.bf16.mxu0 0
    %440 = vmatpush1.bf16.msra.mxu0 %v347
    %441 = vmatprep.subr.bf16.mxu0 0
    %442 = vmatpush1.bf16.msra.mxu0 0
    %443 = vmatprep.subr.bf16.mxu0 0
    %444 = vmatpush1.bf16.msra.mxu0 0
    %445 = vmatprep.subr.bf16.mxu0 0
    %446 = vmatpush1.bf16.msra.mxu0 0
    %447 = vmatprep.subr.bf16.mxu0 0
    %448 = vmatpush1.bf16.msra.mxu0 0
    %449 = vmatprep.subr.bf16.mxu0 0
    %450 = vmatpush1.bf16.msra.mxu0 0
    %451 = vmatprep.subr.bf16.mxu0 0
    %452 = vmatpush1.bf16.msra.mxu0 0
    %453 = vmatprep.subr.bf16.mxu0 0
    %454 = vmatpush1.bf16.msra.mxu0 0
    %455 = vmatprep.subr.bf16.mxu0 0
    %456 = vmatpush1.bf16.msra.mxu0 0
    %457 = vmatprep.mubr.bf16.mxu0 0
    %458 = vmatmul.mubr.bf16.gmra.mrb[0].mxu0 %v193
    %v459 = vpop.f32.mrb[0].mxu0
    %v460 = vadd.f32 %v240, %v459
    %v461 = vpop.f32.mrb[0].mxu0
    %v462 = vpop.f32.mrb[0].mxu0
    %v463 = vadd.f32 %v240, %v462
    %v464 = vpop.f32.mrb[0].mxu0
    %465 = vmatprep.mubr.bf16.mxu0 0
    %466 = vmatmul.mubr.bf16.gmra.mrb[0].mxu0 %v194
    %v467 = vpop.f32.mrb[0].mxu0
    %v468 = vadd.f32 %v240, %v467
    %v469 = vpop.f32.mrb[0].mxu0
    %v470 = vpop.f32.mrb[0].mxu0
    %v471 = vadd.f32 %v240, %v470
    %v472 = vpop.f32.mrb[0].mxu0
    %473 = vdwg.mxu0
    %v474 = vpack.c.bf16 %v411, %v407
    %v475 = vpack.c.bf16 %v421, %v417
    %v476 = vpack.c.bf16 %v413, %v409
    %v477 = vpack.c.bf16 %v423, %v419
    %vm478 = vcmask 261120
    %v480 = vsel %vm478, %v474, 0
    %v483 = vsel %vm478, %v476, 0
    %485 = vmatprep.subr.bf16.mxu0 0
    %486 = vmatpush1.bf16.xpose.msra.mxu0 %v483
    %487 = vmatprep.subr.bf16.mxu0 0
    %488 = vmatpush1.bf16.xpose.msra.mxu0 0
    %489 = vmatprep.subr.bf16.mxu0 0
    %490 = vmatpush1.bf16.xpose.msra.mxu0 0
    %491 = vmatprep.subr.bf16.mxu0 0
    %492 = vmatpush1.bf16.xpose.msra.mxu0 0
    %493 = vmatprep.subr.bf16.mxu0 0
    %494 = vmatpush1.bf16.xpose.msra.mxu0 0
    %495 = vmatprep.subr.bf16.mxu0 0
    %496 = vmatpush1.bf16.xpose.msra.mxu0 0
    %497 = vmatprep.subr.bf16.mxu0 0
    %498 = vmatpush1.bf16.xpose.msra.mxu0 0
    %499 = vmatprep.subr.bf16.mxu0 0
    %500 = vmatpush1.bf16.xpose.msra.mxu0 0
    %501 = vmatprep.subr.bf16.mxu0 0
    %502 = vmatpush1.bf16.xpose.msra.mxu0 0
    %503 = vmatprep.subr.bf16.mxu0 0
    %504 = vmatpush1.bf16.xpose.msra.mxu0 0
    %505 = vmatprep.subr.bf16.mxu0 0
    %506 = vmatpush1.bf16.xpose.msra.mxu0 0
    %507 = vmatprep.subr.bf16.mxu0 0
    %508 = vmatpush1.bf16.xpose.msra.mxu0 0
    %509 = vmatprep.subr.bf16.mxu0 0
    %510 = vmatpush1.bf16.xpose.msra.mxu0 0
    %511 = vmatprep.subr.bf16.mxu0 0
    %512 = vmatpush1.bf16.xpose.msra.mxu0 0
    %513 = vmatprep.subr.bf16.mxu0 0
    %514 = vmatpush1.bf16.xpose.msra.mxu0 0
    %515 = vmatprep.subr.bf16.mxu0 0
    %516 = vmatpush1.bf16.xpose.msra.mxu0 0
    %517 = vmatprep.mubr.bf16.mxu0 0
    %518 = vmatmul.mubr.bf16.gmra.mrb[0].mxu0 %v480
    %v519 = vpop.f32.mrb[0].mxu0
    %v520 = vadd.f32 0.0, %v519
    %v521 = vpop.f32.mrb[0].mxu0
    %v522 = vpop.f32.mrb[0].mxu0
    %v523 = vadd.f32 0.0, %v522
    %v524 = vpop.f32.mrb[0].mxu0
    %525 = vdwg.mxu0
    %v527 = vsel %vm478, %v475, 0
    %v530 = vsel %vm478, %v477, 0
    %532 = vmatprep.subr.bf16.mxu0 0
    %533 = vmatpush1.bf16.xpose.msra.mxu0 %v530
    %534 = vmatprep.subr.bf16.mxu0 0
    %535 = vmatpush1.bf16.xpose.msra.mxu0 0
    %536 = vmatprep.subr.bf16.mxu0 0
    %537 = vmatpush1.bf16.xpose.msra.mxu0 0
    %538 = vmatprep.subr.bf16.mxu0 0
    %539 = vmatpush1.bf16.xpose.msra.mxu0 0
    %540 = vmatprep.subr.bf16.mxu0 0
    %541 = vmatpush1.bf16.xpose.msra.mxu0 0
    %542 = vmatprep.subr.bf16.mxu0 0
    %543 = vmatpush1.bf16.xpose.msra.mxu0 0
    %544 = vmatprep.subr.bf16.mxu0 0
    %545 = vmatpush1.bf16.xpose.msra.mxu0 0
    %546 = vmatprep.subr.bf16.mxu0 0
    %547 = vmatpush1.bf16.xpose.msra.mxu0 0
    %548 = vmatprep.subr.bf16.mxu0 0
    %549 = vmatpush1.bf16.xpose.msra.mxu0 0
    %550 = vmatprep.subr.bf16.mxu0 0
    %551 = vmatpush1.bf16.xpose.msra.mxu0 0
    %552 = vmatprep.subr.bf16.mxu0 0
    %553 = vmatpush1.bf16.xpose.msra.mxu0 0
    %554 = vmatprep.subr.bf16.mxu0 0
    %555 = vmatpush1.bf16.xpose.msra.mxu0 0
    %556 = vmatprep.subr.bf16.mxu0 0
    %557 = vmatpush1.bf16.xpose.msra.mxu0 0
    %558 = vmatprep.subr.bf16.mxu0 0
    %559 = vmatpush1.bf16.xpose.msra.mxu0 0
    %560 = vmatprep.subr.bf16.mxu0 0
    %561 = vmatpush1.bf16.xpose.msra.mxu0 0
    %562 = vmatprep.subr.bf16.mxu0 0
    %563 = vmatpush1.bf16.xpose.msra.mxu0 0
    %564 = vmatprep.mubr.bf16.mxu0 0
    %565 = vmatmul.mubr.bf16.gmra.mrb[0].mxu0 %v527
    %v566 = vpop.f32.mrb[0].mxu0
    %v567 = vadd.f32 0.0, %v566
    %v568 = vpop.f32.mrb[0].mxu0
    %v569 = vpop.f32.mrb[0].mxu0
    %v570 = vadd.f32 0.0, %v569
    %v571 = vpop.f32.mrb[0].mxu0
    %572 = vdwg.mxu0
    %574 = vrot.lane.b32.xlu0 %v474, 96
    %v575 = vpop.permute.xlu0 %574
    %577 = vrot.lane.b32.xlu0 %v476, 96
    %v578 = vpop.permute.xlu0 %577
    %v580 = vsel %vm478, %v575, 0
    %v583 = vsel %vm478, %v578, 0
    %585 = vmatprep.subr.bf16.mxu0 0
    %586 = vmatpush1.bf16.xpose.msra.mxu0 %v583
    %587 = vmatprep.subr.bf16.mxu0 0
    %588 = vmatpush1.bf16.xpose.msra.mxu0 0
    %589 = vmatprep.subr.bf16.mxu0 0
    %590 = vmatpush1.bf16.xpose.msra.mxu0 0
    %591 = vmatprep.subr.bf16.mxu0 0
    %592 = vmatpush1.bf16.xpose.msra.mxu0 0
    %593 = vmatprep.subr.bf16.mxu0 0
    %594 = vmatpush1.bf16.xpose.msra.mxu0 0
    %595 = vmatprep.subr.bf16.mxu0 0
    %596 = vmatpush1.bf16.xpose.msra.mxu0 0
    %597 = vmatprep.subr.bf16.mxu0 0
    %598 = vmatpush1.bf16.xpose.msra.mxu0 0
    %599 = vmatprep.subr.bf16.mxu0 0
    %600 = vmatpush1.bf16.xpose.msra.mxu0 0
    %601 = vmatprep.subr.bf16.mxu0 0
    %602 = vmatpush1.bf16.xpose.msra.mxu0 0
    %603 = vmatprep.subr.bf16.mxu0 0
    %604 = vmatpush1.bf16.xpose.msra.mxu0 0
    %605 = vmatprep.subr.bf16.mxu0 0
    %606 = vmatpush1.bf16.xpose.msra.mxu0 0
    %607 = vmatprep.subr.bf16.mxu0 0
    %608 = vmatpush1.bf16.xpose.msra.mxu0 0
    %609 = vmatprep.subr.bf16.mxu0 0
    %610 = vmatpush1.bf16.xpose.msra.mxu0 0
    %611 = vmatprep.subr.bf16.mxu0 0
    %612 = vmatpush1.bf16.xpose.msra.mxu0 0
    %613 = vmatprep.subr.bf16.mxu0 0
    %614 = vmatpush1.bf16.xpose.msra.mxu0 0
    %615 = vmatprep.subr.bf16.mxu0 0
    %616 = vmatpush1.bf16.xpose.msra.mxu0 0
    %617 = vmatprep.mubr.bf16.mxu0 0
    %618 = vmatmul.mubr.bf16.gmra.mrb[0].mxu0 %v580
    %v619 = vpop.f32.mrb[0].mxu0
    %v620 = vadd.f32 0.0, %v619
    %v621 = vpop.f32.mrb[0].mxu0
    %v622 = vpop.f32.mrb[0].mxu0
    %v623 = vadd.f32 0.0, %v622
    %v624 = vpop.f32.mrb[0].mxu0
    %625 = vdwg.mxu0
    %627 = vrot.lane.b32.xlu0 %v475, 96
    %v628 = vpop.permute.xlu0 %627
    %630 = vrot.lane.b32.xlu0 %v477, 96
    %v631 = vpop.permute.xlu0 %630
    %v633 = vsel %vm478, %v628, 0
    %v636 = vsel %vm478, %v631, 0
    %638 = vmatprep.subr.bf16.mxu0 0
    %639 = vmatpush1.bf16.xpose.msra.mxu0 %v636
    %640 = vmatprep.subr.bf16.mxu0 0
    %641 = vmatpush1.bf16.xpose.msra.mxu0 0
    %642 = vmatprep.subr.bf16.mxu0 0
    %643 = vmatpush1.bf16.xpose.msra.mxu0 0
    %644 = vmatprep.subr.bf16.mxu0 0
    %645 = vmatpush1.bf16.xpose.msra.mxu0 0
    %646 = vmatprep.subr.bf16.mxu0 0
    %647 = vmatpush1.bf16.xpose.msra.mxu0 0
    %648 = vmatprep.subr.bf16.mxu0 0
    %649 = vmatpush1.bf16.xpose.msra.mxu0 0
    %650 = vmatprep.subr.bf16.mxu0 0
    %651 = vmatpush1.bf16.xpose.msra.mxu0 0
    %652 = vmatprep.subr.bf16.mxu0 0
    %653 = vmatpush1.bf16.xpose.msra.mxu0 0
    %654 = vmatprep.subr.bf16.mxu0 0
    %655 = vmatpush1.bf16.xpose.msra.mxu0 0
    %656 = vmatprep.subr.bf16.mxu0 0
    %657 = vmatpush1.bf16.xpose.msra.mxu0 0
    %658 = vmatprep.subr.bf16.mxu0 0
    %659 = vmatpush1.bf16.xpose.msra.mxu0 0
    %660 = vmatprep.subr.bf16.mxu0 0
    %661 = vmatpush1.bf16.xpose.msra.mxu0 0
    %662 = vmatprep.subr.bf16.mxu0 0
    %663 = vmatpush1.bf16.xpose.msra.mxu0 0
    %664 = vmatprep.subr.bf16.mxu0 0
    %665 = vmatpush1.bf16.xpose.msra.mxu0 0
    %666 = vmatprep.subr.bf16.mxu0 0
    %667 = vmatpush1.bf16.xpose.msra.mxu0 0
    %668 = vmatprep.subr.bf16.mxu0 0
    %669 = vmatpush1.bf16.xpose.msra.mxu0 0
    %670 = vmatprep.mubr.bf16.mxu0 0
    %671 = vmatmul.mubr.bf16.gmra.mrb[0].mxu0 %v633
    %v672 = vpop.f32.mrb[0].mxu0
    %v673 = vadd.f32 0.0, %v672
    %v674 = vpop.f32.mrb[0].mxu0
    %v675 = vpop.f32.mrb[0].mxu0
    %v676 = vadd.f32 0.0, %v675
    %v677 = vpop.f32.mrb[0].mxu0
    %678 = vdwg.mxu0
    %679 = vrot.lane.b32.xlu0 %v474, 64
    %v680 = vpop.permute.xlu0 %679
    %681 = vrot.lane.b32.xlu0 %v476, 64
    %v682 = vpop.permute.xlu0 %681
    %v684 = vsel %vm478, %v680, 0
    %v687 = vsel %vm478, %v682, 0
    %689 = vmatprep.subr.bf16.mxu0 0
    %690 = vmatpush1.bf16.xpose.msra.mxu0 %v687
    %691 = vmatprep.subr.bf16.mxu0 0
    %692 = vmatpush1.bf16.xpose.msra.mxu0 0
    %693 = vmatprep.subr.bf16.mxu0 0
    %694 = vmatpush1.bf16.xpose.msra.mxu0 0
    %695 = vmatprep.subr.bf16.mxu0 0
    %696 = vmatpush1.bf16.xpose.msra.mxu0 0
    %697 = vmatprep.subr.bf16.mxu0 0
    %698 = vmatpush1.bf16.xpose.msra.mxu0 0
    %699 = vmatprep.subr.bf16.mxu0 0
    %700 = vmatpush1.bf16.xpose.msra.mxu0 0
    %701 = vmatprep.subr.bf16.mxu0 0
    %702 = vmatpush1.bf16.xpose.msra.mxu0 0
    %703 = vmatprep.subr.bf16.mxu0 0
    %704 = vmatpush1.bf16.xpose.msra.mxu0 0
    %705 = vmatprep.subr.bf16.mxu0 0
    %706 = vmatpush1.bf16.xpose.msra.mxu0 0
    %707 = vmatprep.subr.bf16.mxu0 0
    %708 = vmatpush1.bf16.xpose.msra.mxu0 0
    %709 = vmatprep.subr.bf16.mxu0 0
    %710 = vmatpush1.bf16.xpose.msra.mxu0 0
    %711 = vmatprep.subr.bf16.mxu0 0
    %712 = vmatpush1.bf16.xpose.msra.mxu0 0
    %713 = vmatprep.subr.bf16.mxu0 0
    %714 = vmatpush1.bf16.xpose.msra.mxu0 0
    %715 = vmatprep.subr.bf16.mxu0 0
    %716 = vmatpush1.bf16.xpose.msra.mxu0 0
    %717 = vmatprep.subr.bf16.mxu0 0
    %718 = vmatpush1.bf16.xpose.msra.mxu0 0
    %719 = vmatprep.subr.bf16.mxu0 0
    %720 = vmatpush1.bf16.xpose.msra.mxu0 0
    %721 = vmatprep.mubr.bf16.mxu0 0
    %722 = vmatmul.mubr.bf16.gmra.mrb[0].mxu0 %v684
    %v723 = vpop.f32.mrb[0].mxu0
    %v724 = vadd.f32 0.0, %v723
    %v725 = vpop.f32.mrb[0].mxu0
    %v726 = vpop.f32.mrb[0].mxu0
    %v727 = vadd.f32 0.0, %v726
    %v728 = vpop.f32.mrb[0].mxu0
    %729 = vdwg.mxu0
    %730 = vrot.lane.b32.xlu0 %v475, 64
    %v731 = vpop.permute.xlu0 %730
    %732 = vrot.lane.b32.xlu0 %v477, 64
    %v733 = vpop.permute.xlu0 %732
    %v735 = vsel %vm478, %v731, 0
    %v738 = vsel %vm478, %v733, 0
    %740 = vmatprep.subr.bf16.mxu0 0
    %741 = vmatpush1.bf16.xpose.msra.mxu0 %v738
    %742 = vmatprep.subr.bf16.mxu0 0
    %743 = vmatpush1.bf16.xpose.msra.mxu0 0
    %744 = vmatprep.subr.bf16.mxu0 0
    %745 = vmatpush1.bf16.xpose.msra.mxu0 0
    %746 = vmatprep.subr.bf16.mxu0 0
    %747 = vmatpush1.bf16.xpose.msra.mxu0 0
    %748 = vmatprep.subr.bf16.mxu0 0
    %749 = vmatpush1.bf16.xpose.msra.mxu0 0
    %750 = vmatprep.subr.bf16.mxu0 0
    %751 = vmatpush1.bf16.xpose.msra.mxu0 0
    %752 = vmatprep.subr.bf16.mxu0 0
    %753 = vmatpush1.bf16.xpose.msra.mxu0 0
    %754 = vmatprep.subr.bf16.mxu0 0
    %755 = vmatpush1.bf16.xpose.msra.mxu0 0
    %756 = vmatprep.subr.bf16.mxu0 0
    %757 = vmatpush1.bf16.xpose.msra.mxu0 0
    %758 = vmatprep.subr.bf16.mxu0 0
    %759 = vmatpush1.bf16.xpose.msra.mxu0 0
    %760 = vmatprep.subr.bf16.mxu0 0
    %761 = vmatpush1.bf16.xpose.msra.mxu0 0
    %762 = vmatprep.subr.bf16.mxu0 0
    %763 = vmatpush1.bf16.xpose.msra.mxu0 0
    %764 = vmatprep.subr.bf16.mxu0 0
    %765 = vmatpush1.bf16.xpose.msra.mxu0 0
    %766 = vmatprep.subr.bf16.mxu0 0
    %767 = vmatpush1.bf16.xpose.msra.mxu0 0
    %768 = vmatprep.subr.bf16.mxu0 0
    %769 = vmatpush1.bf16.xpose.msra.mxu0 0
    %770 = vmatprep.subr.bf16.mxu0 0
    %771 = vmatpush1.bf16.xpose.msra.mxu0 0
    %772 = vmatprep.mubr.bf16.mxu0 0
    %773 = vmatmul.mubr.bf16.gmra.mrb[0].mxu0 %v735
    %v774 = vpop.f32.mrb[0].mxu0
    %v775 = vadd.f32 0.0, %v774
    %v776 = vpop.f32.mrb[0].mxu0
    %v777 = vpop.f32.mrb[0].mxu0
    %v778 = vadd.f32 0.0, %v777
    %v779 = vpop.f32.mrb[0].mxu0
    %780 = vdwg.mxu0
    %781 = vrot.lane.b32.xlu0 %v474, 32
    %v782 = vpop.permute.xlu0 %781
    %783 = vrot.lane.b32.xlu0 %v476, 32
    %v784 = vpop.permute.xlu0 %783
    %v786 = vsel %vm478, %v782, 0
    %v789 = vsel %vm478, %v784, 0
    %791 = vmatprep.subr.bf16.mxu0 0
    %792 = vmatpush1.bf16.xpose.msra.mxu0 %v789
    %793 = vmatprep.subr.bf16.mxu0 0
    %794 = vmatpush1.bf16.xpose.msra.mxu0 0
    %795 = vmatprep.subr.bf16.mxu0 0
    %796 = vmatpush1.bf16.xpose.msra.mxu0 0
    %797 = vmatprep.subr.bf16.mxu0 0
    %798 = vmatpush1.bf16.xpose.msra.mxu0 0
    %799 = vmatprep.subr.bf16.mxu0 0
    %800 = vmatpush1.bf16.xpose.msra.mxu0 0
    %801 = vmatprep.subr.bf16.mxu0 0
    %802 = vmatpush1.bf16.xpose.msra.mxu0 0
    %803 = vmatprep.subr.bf16.mxu0 0
    %804 = vmatpush1.bf16.xpose.msra.mxu0 0
    %805 = vmatprep.subr.bf16.mxu0 0
    %806 = vmatpush1.bf16.xpose.msra.mxu0 0
    %807 = vmatprep.subr.bf16.mxu0 0
    %808 = vmatpush1.bf16.xpose.msra.mxu0 0
    %809 = vmatprep.subr.bf16.mxu0 0
    %810 = vmatpush1.bf16.xpose.msra.mxu0 0
    %811 = vmatprep.subr.bf16.mxu0 0
    %812 = vmatpush1.bf16.xpose.msra.mxu0 0
    %813 = vmatprep.subr.bf16.mxu0 0
    %814 = vmatpush1.bf16.xpose.msra.mxu0 0
    %815 = vmatprep.subr.bf16.mxu0 0
    %816 = vmatpush1.bf16.xpose.msra.mxu0 0
    %817 = vmatprep.subr.bf16.mxu0 0
    %818 = vmatpush1.bf16.xpose.msra.mxu0 0
    %819 = vmatprep.subr.bf16.mxu0 0
    %820 = vmatpush1.bf16.xpose.msra.mxu0 0
    %821 = vmatprep.subr.bf16.mxu0 0
    %822 = vmatpush1.bf16.xpose.msra.mxu0 0
    %823 = vmatprep.mubr.bf16.mxu0 0
    %824 = vmatmul.mubr.bf16.gmra.mrb[0].mxu0 %v786
    %v825 = vpop.f32.mrb[0].mxu0
    %v826 = vadd.f32 0.0, %v825
    %v827 = vpop.f32.mrb[0].mxu0
    %v828 = vpop.f32.mrb[0].mxu0
    %v829 = vadd.f32 0.0, %v828
    %v830 = vpop.f32.mrb[0].mxu0
    %831 = vdwg.mxu0
    %832 = vrot.lane.b32.xlu0 %v475, 32
    %v833 = vpop.permute.xlu0 %832
    %834 = vrot.lane.b32.xlu0 %v477, 32
    %v835 = vpop.permute.xlu0 %834
    %v837 = vsel %vm478, %v833, 0
    %v840 = vsel %vm478, %v835, 0
    %842 = vmatprep.subr.bf16.mxu0 0
    %843 = vmatpush1.bf16.xpose.msra.mxu0 %v840
    %844 = vmatprep.subr.bf16.mxu0 0
    %845 = vmatpush1.bf16.xpose.msra.mxu0 0
    %846 = vmatprep.subr.bf16.mxu0 0
    %847 = vmatpush1.bf16.xpose.msra.mxu0 0
    %848 = vmatprep.subr.bf16.mxu0 0
    %849 = vmatpush1.bf16.xpose.msra.mxu0 0
    %850 = vmatprep.subr.bf16.mxu0 0
    %851 = vmatpush1.bf16.xpose.msra.mxu0 0
    %852 = vmatprep.subr.bf16.mxu0 0
    %853 = vmatpush1.bf16.xpose.msra.mxu0 0
    %854 = vmatprep.subr.bf16.mxu0 0
    %855 = vmatpush1.bf16.xpose.msra.mxu0 0
    %856 = vmatprep.subr.bf16.mxu0 0
    %857 = vmatpush1.bf16.xpose.msra.mxu0 0
    %858 = vmatprep.subr.bf16.mxu0 0
    %859 = vmatpush1.bf16.xpose.msra.mxu0 0
    %860 = vmatprep.subr.bf16.mxu0 0
    %861 = vmatpush1.bf16.xpose.msra.mxu0 0
    %862 = vmatprep.subr.bf16.mxu0 0
    %863 = vmatpush1.bf16.xpose.msra.mxu0 0
    %864 = vmatprep.subr.bf16.mxu0 0
    %865 = vmatpush1.bf16.xpose.msra.mxu0 0
    %866 = vmatprep.subr.bf16.mxu0 0
    %867 = vmatpush1.bf16.xpose.msra.mxu0 0
    %868 = vmatprep.subr.bf16.mxu0 0
    %869 = vmatpush1.bf16.xpose.msra.mxu0 0
    %870 = vmatprep.subr.bf16.mxu0 0
    %871 = vmatpush1.bf16.xpose.msra.mxu0 0
    %872 = vmatprep.subr.bf16.mxu0 0
    %873 = vmatpush1.bf16.xpose.msra.mxu0 0
    %874 = vmatprep.mubr.bf16.mxu0 0
    %875 = vmatmul.mubr.bf16.gmra.mrb[0].mxu0 %v837
    %v876 = vpop.f32.mrb[0].mxu0
    %v877 = vadd.f32 0.0, %v876
    %v878 = vpop.f32.mrb[0].mxu0
    %v879 = vpop.f32.mrb[0].mxu0
    %v880 = vadd.f32 0.0, %v879
    %v881 = vpop.f32.mrb[0].mxu0
    %882 = vdwg.mxu0
    %vm883 = vcmask 130048
    %v884 = vsel %vm883, %v520, -inf
    %885 = vmax.xlane.f32.xlu0 %v884
    %v886 = vpop.xlane.xlu0 %885
    %v887 = vsel %vm883, %v523, -inf
    %888 = vmax.xlane.f32.xlu0 %v887
    %v889 = vpop.xlane.xlu0 %888
    %v890 = vsel %vm883, %v567, -inf
    %891 = vmax.xlane.f32.xlu0 %v890
    %v892 = vpop.xlane.xlu0 %891
    %v893 = vsel %vm883, %v570, -inf
    %894 = vmax.xlane.f32.xlu0 %v893
    %v895 = vpop.xlane.xlu0 %894
    %v896 = vsel %vm883, %v620, -inf
    %897 = vmax.xlane.f32.xlu0 %v896
    %v898 = vpop.xlane.xlu0 %897
    %v899 = vsel %vm883, %v623, -inf
    %900 = vmax.xlane.f32.xlu0 %v899
    %v901 = vpop.xlane.xlu0 %900
    %v902 = vsel %vm883, %v673, -inf
    %903 = vmax.xlane.f32.xlu0 %v902
    %v904 = vpop.xlane.xlu0 %903
    %v905 = vsel %vm883, %v676, -inf
    %906 = vmax.xlane.f32.xlu0 %v905
    %v907 = vpop.xlane.xlu0 %906
    %v908 = vsel %vm883, %v724, -inf
    %909 = vmax.xlane.f32.xlu0 %v908
    %v910 = vpop.xlane.xlu0 %909
    %v911 = vsel %vm883, %v727, -inf
    %912 = vmax.xlane.f32.xlu0 %v911
    %v913 = vpop.xlane.xlu0 %912
    %v914 = vsel %vm883, %v775, -inf
    %915 = vmax.xlane.f32.xlu0 %v914
    %v916 = vpop.xlane.xlu0 %915
    %v917 = vsel %vm883, %v778, -inf
    %918 = vmax.xlane.f32.xlu0 %v917
    %v919 = vpop.xlane.xlu0 %918
    %v920 = vsel %vm883, %v826, -inf
    %921 = vmax.xlane.f32.xlu0 %v920
    %v922 = vpop.xlane.xlu0 %921
    %v923 = vsel %vm883, %v829, -inf
    %924 = vmax.xlane.f32.xlu0 %v923
    %v925 = vpop.xlane.xlu0 %924
    %v926 = vsel %vm883, %v877, -inf
    %927 = vmax.xlane.f32.xlu0 %v926
    %v928 = vpop.xlane.xlu0 %927
    %v929 = vsel %vm883, %v880, -inf
    %930 = vmax.xlane.f32.xlu0 %v929
    %v931 = vpop.xlane.xlu0 %930
    %v932 = vsub.f32 %v520, %v886
    %v933 = vsub.f32 %v523, %v889
    %v934 = vsub.f32 %v567, %v892
    %v935 = vsub.f32 %v570, %v895
    %v936 = vsub.f32 %v620, %v898
    %v937 = vsub.f32 %v623, %v901
    %v938 = vsub.f32 %v673, %v904
    %v939 = vsub.f32 %v676, %v907
    %v940 = vsub.f32 %v724, %v910
    %v941 = vsub.f32 %v727, %v913
    %v942 = vsub.f32 %v775, %v916
    %v943 = vsub.f32 %v778, %v919
    %v944 = vsub.f32 %v826, %v922
    %v945 = vsub.f32 %v829, %v925
    %v946 = vsub.f32 %v877, %v928
    %v947 = vsub.f32 %v880, %v931
    %v948 = vmul.f32 %v932, 1.442695
    %v949 = vpow.pop %v948
    %v950 = vmul.f32 %v933, 1.442695
    %v951 = vpow.pop %v950
    %v952 = vmul.f32 %v934, 1.442695
    %v953 = vpow.pop %v952
    %v954 = vmul.f32 %v935, 1.442695
    %v955 = vpow.pop %v954
    %v956 = vmul.f32 %v936, 1.442695
    %v957 = vpow.pop %v956
    %v958 = vmul.f32 %v937, 1.442695
    %v959 = vpow.pop %v958
    %v960 = vmul.f32 %v938, 1.442695
    %v961 = vpow.pop %v960
    %v962 = vmul.f32 %v939, 1.442695
    %v963 = vpow.pop %v962
    %v964 = vmul.f32 %v940, 1.442695
    %v965 = vpow.pop %v964
    %v966 = vmul.f32 %v941, 1.442695
    %v967 = vpow.pop %v966
    %v968 = vmul.f32 %v942, 1.442695
    %v969 = vpow.pop %v968
    %v970 = vmul.f32 %v943, 1.442695
    %v971 = vpow.pop %v970
    %v972 = vmul.f32 %v944, 1.442695
    %v973 = vpow.pop %v972
    %v974 = vmul.f32 %v945, 1.442695
    %v975 = vpow.pop %v974
    %v976 = vmul.f32 %v946, 1.442695
    %v977 = vpow.pop %v976
    %v978 = vmul.f32 %v947, 1.442695
    %v979 = vpow.pop %v978
    %v980 = vsel %vm883, %v949, 0.0
    %981 = vadd.xlane.f32.xlu0 %v980
    %v982 = vpop.xlane.xlu0 %981
    %v983 = vsel %vm883, %v951, 0.0
    %984 = vadd.xlane.f32.xlu0 %v983
    %v985 = vpop.xlane.xlu0 %984
    %v986 = vsel %vm883, %v953, 0.0
    %987 = vadd.xlane.f32.xlu0 %v986
    %v988 = vpop.xlane.xlu0 %987
    %v989 = vsel %vm883, %v955, 0.0
    %990 = vadd.xlane.f32.xlu0 %v989
    %v991 = vpop.xlane.xlu0 %990
    %v992 = vsel %vm883, %v957, 0.0
    %993 = vadd.xlane.f32.xlu0 %v992
    %v994 = vpop.xlane.xlu0 %993
    %v995 = vsel %vm883, %v959, 0.0
    %996 = vadd.xlane.f32.xlu0 %v995
    %v997 = vpop.xlane.xlu0 %996
    %v998 = vsel %vm883, %v961, 0.0
    %999 = vadd.xlane.f32.xlu0 %v998
    %v1000 = vpop.xlane.xlu0 %999
    %v1001 = vsel %vm883, %v963, 0.0
    %1002 = vadd.xlane.f32.xlu0 %v1001
    %v1003 = vpop.xlane.xlu0 %1002
    %v1004 = vsel %vm883, %v965, 0.0
    %1005 = vadd.xlane.f32.xlu0 %v1004
    %v1006 = vpop.xlane.xlu0 %1005
    %v1007 = vsel %vm883, %v967, 0.0
    %1008 = vadd.xlane.f32.xlu0 %v1007
    %v1009 = vpop.xlane.xlu0 %1008
    %v1010 = vsel %vm883, %v969, 0.0
    %1011 = vadd.xlane.f32.xlu0 %v1010
    %v1012 = vpop.xlane.xlu0 %1011
    %v1013 = vsel %vm883, %v971, 0.0
    %1014 = vadd.xlane.f32.xlu0 %v1013
    %v1015 = vpop.xlane.xlu0 %1014
    %v1016 = vsel %vm883, %v973, 0.0
    %1017 = vadd.xlane.f32.xlu0 %v1016
    %v1018 = vpop.xlane.xlu0 %1017
    %v1019 = vsel %vm883, %v975, 0.0
    %1020 = vadd.xlane.f32.xlu0 %v1019
    %v1021 = vpop.xlane.xlu0 %1020
    %v1022 = vsel %vm883, %v977, 0.0
    %1023 = vadd.xlane.f32.xlu0 %v1022
    %v1024 = vpop.xlane.xlu0 %1023
    %v1025 = vsel %vm883, %v979, 0.0
    %1026 = vadd.xlane.f32.xlu0 %v1025
    %v1027 = vpop.xlane.xlu0 %1026
    %v1028 = vrcp.pop %v982
    %v1029 = vrcp.pop %v985
    %v1030 = vrcp.pop %v988
    %v1031 = vrcp.pop %v991
    %v1032 = vrcp.pop %v994
    %v1033 = vrcp.pop %v997
    %v1034 = vrcp.pop %v1000
    %v1035 = vrcp.pop %v1003
    %v1036 = vrcp.pop %v1006
    %v1037 = vrcp.pop %v1009
    %v1038 = vrcp.pop %v1012
    %v1039 = vrcp.pop %v1015
    %v1040 = vrcp.pop %v1018
    %v1041 = vrcp.pop %v1021
    %v1042 = vrcp.pop %v1024
    %v1043 = vrcp.pop %v1027
    %v1044 = vmul.f32 %v949, %v1028
    %v1045 = vmul.f32 %v951, %v1029
    %v1046 = vmul.f32 %v953, %v1030
    %v1047 = vmul.f32 %v955, %v1031
    %v1048 = vmul.f32 %v957, %v1032
    %v1049 = vmul.f32 %v959, %v1033
    %v1050 = vmul.f32 %v961, %v1034
    %v1051 = vmul.f32 %v963, %v1035
    %v1052 = vmul.f32 %v965, %v1036
    %v1053 = vmul.f32 %v967, %v1037
    %v1054 = vmul.f32 %v969, %v1038
    %v1055 = vmul.f32 %v971, %v1039
    %v1056 = vmul.f32 %v973, %v1040
    %v1057 = vmul.f32 %v975, %v1041
    %v1058 = vmul.f32 %v977, %v1042
    %v1059 = vmul.f32 %v979, %v1043
    %v1060 = vpack.c.bf16 %v1045, %v1044
    %v1061 = vpack.c.bf16 %v1047, %v1046
    %v1062 = vpack.c.bf16 %v1049, %v1048
    %v1063 = vpack.c.bf16 %v1051, %v1050
    %v1064 = vpack.c.bf16 %v1053, %v1052
    %v1065 = vpack.c.bf16 %v1055, %v1054
    %v1066 = vpack.c.bf16 %v1057, %v1056
    %v1067 = vpack.c.bf16 %v1059, %v1058
    %v1068 = vld [vmem:[#allocation7] sm:$0xf]
    %v1069 = vld [vmem:[#allocation7 + $0x4] sm:$0xf]
    %v1070 = vld [vmem:[#allocation7 + $0x8] sm:$0xf]
    %v1071 = vld [vmem:[#allocation7 + $0xc] sm:$0xf]
    %v1072 = vld [vmem:[#allocation7 + $0x10] sm:$0xf]
    %v1073 = vld [vmem:[#allocation7 + $0x14] sm:$0xf]
    %v1074 = vld [vmem:[#allocation7 + $0x18] sm:$0xf]
    %v1075 = vld [vmem:[#allocation7 + $0x1c] sm:$0xf]
    %v1076 = vld [vmem:[#allocation7 + $0x20] sm:$0xf]
    %v1077 = vld [vmem:[#allocation7 + $0x24] sm:$0xf]
    %v1078 = vld [vmem:[#allocation7 + $0x28] sm:$0xf]
    %v1079 = vld [vmem:[#allocation7 + $0x2c] sm:$0xf]
    %v1080 = vld [vmem:[#allocation7 + $0x30] sm:$0xf]
    %v1081 = vld [vmem:[#allocation7 + $0x34] sm:$0xf]
    %v1082 = vld [vmem:[#allocation7 + $0x38] sm:$0xf]
    %v1083 = vld [vmem:[#allocation7 + $0x3c] sm:$0xf]
    %v1084 = vpack.c.bf16 %v463, %v460
    %v1085 = vpack.c.bf16 %v471, %v468
    %v1087 = vsel %vm883, %v1060, 0
    %1089 = vmatprep.subr.bf16.mxu0 0
    %1090 = vmatpush1.bf16.msra.mxu0 %v1084
    %1091 = vmatprep.subr.bf16.mxu0 0
    %1092 = vmatpush1.bf16.msra.mxu0 0
    %1093 = vmatprep.subr.bf16.mxu0 0
    %1094 = vmatpush1.bf16.msra.mxu0 0
    %1095 = vmatprep.subr.bf16.mxu0 0
    %1096 = vmatpush1.bf16.msra.mxu0 0
    %1097 = vmatprep.subr.bf16.mxu0 0
    %1098 = vmatpush1.bf16.msra.mxu0 0
    %1099 = vmatprep.subr.bf16.mxu0 0
    %1100 = vmatpush1.bf16.msra.mxu0 0
    %1101 = vmatprep.subr.bf16.mxu0 0
    %1102 = vmatpush1.bf16.msra.mxu0 0
    %1103 = vmatprep.subr.bf16.mxu0 0
    %1104 = vmatpush1.bf16.msra.mxu0 0
    %1105 = vmatprep.subr.bf16.mxu0 0
    %1106 = vmatpush1.bf16.msra.mxu0 0
    %1107 = vmatprep.subr.bf16.mxu0 0
    %1108 = vmatpush1.bf16.msra.mxu0 0
    %1109 = vmatprep.subr.bf16.mxu0 0
    %1110 = vmatpush1.bf16.msra.mxu0 0
    %1111 = vmatprep.subr.bf16.mxu0 0
    %1112 = vmatpush1.bf16.msra.mxu0 0
    %1113 = vmatprep.subr.bf16.mxu0 0
    %1114 = vmatpush1.bf16.msra.mxu0 0
    %1115 = vmatprep.subr.bf16.mxu0 0
    %1116 = vmatpush1.bf16.msra.mxu0 0
    %1117 = vmatprep.subr.bf16.mxu0 0
    %1118 = vmatpush1.bf16.msra.mxu0 0
    %1119 = vmatprep.subr.bf16.mxu0 0
    %1120 = vmatpush1.bf16.msra.mxu0 0
    %1121 = vmatprep.mubr.bf16.mxu0 0
    %1122 = vmatmul.mubr.bf16.gmra.mrb[0].mxu0 %v1087
    %v1123 = vpop.f32.mrb[0].mxu0
    %v1124 = vadd.f32 0.0, %v1123
    %v1125 = vpop.f32.mrb[0].mxu0
    %v1126 = vpop.f32.mrb[0].mxu0
    %v1127 = vadd.f32 0.0, %v1126
    %v1128 = vpop.f32.mrb[0].mxu0
    %1129 = vdwg.mxu0
    %v1131 = vsel %vm883, %v1061, 0
    %1133 = vmatprep.subr.bf16.mxu0 0
    %1134 = vmatpush1.bf16.msra.mxu0 %v1085
    %1135 = vmatprep.subr.bf16.mxu0 0
    %1136 = vmatpush1.bf16.msra.mxu0 0
    %1137 = vmatprep.subr.bf16.mxu0 0
    %1138 = vmatpush1.bf16.msra.mxu0 0
    %1139 = vmatprep.subr.bf16.mxu0 0
    %1140 = vmatpush1.bf16.msra.mxu0 0
    %1141 = vmatprep.subr.bf16.mxu0 0
    %1142 = vmatpush1.bf16.msra.mxu0 0
    %1143 = vmatprep.subr.bf16.mxu0 0
    %1144 = vmatpush1.bf16.msra.mxu0 0
    %1145 = vmatprep.subr.bf16.mxu0 0
    %1146 = vmatpush1.bf16.msra.mxu0 0
    %1147 = vmatprep.subr.bf16.mxu0 0
    %1148 = vmatpush1.bf16.msra.mxu0 0
    %1149 = vmatprep.subr.bf16.mxu0 0
    %1150 = vmatpush1.bf16.msra.mxu0 0
    %1151 = vmatprep.subr.bf16.mxu0 0
    %1152 = vmatpush1.bf16.msra.mxu0 0
    %1153 = vmatprep.subr.bf16.mxu0 0
    %1154 = vmatpush1.bf16.msra.mxu0 0
    %1155 = vmatprep.subr.bf16.mxu0 0
    %1156 = vmatpush1.bf16.msra.mxu0 0
    %1157 = vmatprep.subr.bf16.mxu0 0
    %1158 = vmatpush1.bf16.msra.mxu0 0
    %1159 = vmatprep.subr.bf16.mxu0 0
    %1160 = vmatpush1.bf16.msra.mxu0 0
    %1161 = vmatprep.subr.bf16.mxu0 0
    %1162 = vmatpush1.bf16.msra.mxu0 0
    %1163 = vmatprep.subr.bf16.mxu0 0
    %1164 = vmatpush1.bf16.msra.mxu0 0
    %1165 = vmatprep.mubr.bf16.mxu0 0
    %1166 = vmatmul.mubr.bf16.gmra.mrb[0].mxu0 %v1131
    %v1167 = vpop.f32.mrb[0].mxu0
    %v1168 = vadd.f32 0.0, %v1167
    %v1169 = vpop.f32.mrb[0].mxu0
    %v1170 = vpop.f32.mrb[0].mxu0
    %v1171 = vadd.f32 0.0, %v1170
    %v1172 = vpop.f32.mrb[0].mxu0
    %1173 = vdwg.mxu0
    %v1174 = vpack.c.bf16 %v1127, %v1124
    %v1175 = vpack.c.bf16 %v1171, %v1168
    %1177 = vrot.lane.b32.xlu0 %v1084, 96
    %v1178 = vpop.permute.xlu0 %1177
    %v1181 = vsel %vm883, %v1062, 0
    %1183 = vmatprep.subr.bf16.mxu0 0
    %1184 = vmatpush1.bf16.msra.mxu0 %v1178
    %1185 = vmatprep.subr.bf16.mxu0 0
    %1186 = vmatpush1.bf16.msra.mxu0 0
    %1187 = vmatprep.subr.bf16.mxu0 0
    %1188 = vmatpush1.bf16.msra.mxu0 0
    %1189 = vmatprep.subr.bf16.mxu0 0
    %1190 = vmatpush1.bf16.msra.mxu0 0
    %1191 = vmatprep.subr.bf16.mxu0 0
    %1192 = vmatpush1.bf16.msra.mxu0 0
    %1193 = vmatprep.subr.bf16.mxu0 0
    %1194 = vmatpush1.bf16.msra.mxu0 0
    %1195 = vmatprep.subr.bf16.mxu0 0
    %1196 = vmatpush1.bf16.msra.mxu0 0
    %1197 = vmatprep.subr.bf16.mxu0 0
    %1198 = vmatpush1.bf16.msra.mxu0 0
    %1199 = vmatprep.subr.bf16.mxu0 0
    %1200 = vmatpush1.bf16.msra.mxu0 0
    %1201 = vmatprep.subr.bf16.mxu0 0
    %1202 = vmatpush1.bf16.msra.mxu0 0
    %1203 = vmatprep.subr.bf16.mxu0 0
    %1204 = vmatpush1.bf16.msra.mxu0 0
    %1205 = vmatprep.subr.bf16.mxu0 0
    %1206 = vmatpush1.bf16.msra.mxu0 0
    %1207 = vmatprep.subr.bf16.mxu0 0
    %1208 = vmatpush1.bf16.msra.mxu0 0
    %1209 = vmatprep.subr.bf16.mxu0 0
    %1210 = vmatpush1.bf16.msra.mxu0 0
    %1211 = vmatprep.subr.bf16.mxu0 0
    %1212 = vmatpush1.bf16.msra.mxu0 0
    %1213 = vmatprep.subr.bf16.mxu0 0
    %1214 = vmatpush1.bf16.msra.mxu0 0
    %1215 = vmatprep.mubr.bf16.mxu0 0
    %1216 = vmatmul.mubr.bf16.gmra.mrb[0].mxu0 %v1181
    %v1217 = vpop.f32.mrb[0].mxu0
    %v1218 = vadd.f32 0.0, %v1217
    %v1219 = vpop.f32.mrb[0].mxu0
    %v1220 = vpop.f32.mrb[0].mxu0
    %v1221 = vadd.f32 0.0, %v1220
    %v1222 = vpop.f32.mrb[0].mxu0
    %1223 = vdwg.mxu0
    %1225 = vrot.lane.b32.xlu0 %v1085, 96
    %v1226 = vpop.permute.xlu0 %1225
    %v1229 = vsel %vm883, %v1063, 0
    %1231 = vmatprep.subr.bf16.mxu0 0
    %1232 = vmatpush1.bf16.msra.mxu0 %v1226
    %1233 = vmatprep.subr.bf16.mxu0 0
    %1234 = vmatpush1.bf16.msra.mxu0 0
    %1235 = vmatprep.subr.bf16.mxu0 0
    %1236 = vmatpush1.bf16.msra.mxu0 0
    %1237 = vmatprep.subr.bf16.mxu0 0
    %1238 = vmatpush1.bf16.msra.mxu0 0
    %1239 = vmatprep.subr.bf16.mxu0 0
    %1240 = vmatpush1.bf16.msra.mxu0 0
    %1241 = vmatprep.subr.bf16.mxu0 0
    %1242 = vmatpush1.bf16.msra.mxu0 0
    %1243 = vmatprep.subr.bf16.mxu0 0
    %1244 = vmatpush1.bf16.msra.mxu0 0
    %1245 = vmatprep.subr.bf16.mxu0 0
    %1246 = vmatpush1.bf16.msra.mxu0 0
    %1247 = vmatprep.subr.bf16.mxu0 0
    %1248 = vmatpush1.bf16.msra.mxu0 0
    %1249 = vmatprep.subr.bf16.mxu0 0
    %1250 = vmatpush1.bf16.msra.mxu0 0
    %1251 = vmatprep.subr.bf16.mxu0 0
    %1252 = vmatpush1.bf16.msra.mxu0 0
    %1253 = vmatprep.subr.bf16.mxu0 0
    %1254 = vmatpush1.bf16.msra.mxu0 0
    %1255 = vmatprep.subr.bf16.mxu0 0
    %1256 = vmatpush1.bf16.msra.mxu0 0
    %1257 = vmatprep.subr.bf16.mxu0 0
    %1258 = vmatpush1.bf16.msra.mxu0 0
    %1259 = vmatprep.subr.bf16.mxu0 0
    %1260 = vmatpush1.bf16.msra.mxu0 0
    %1261 = vmatprep.subr.bf16.mxu0 0
    %1262 = vmatpush1.bf16.msra.mxu0 0
    %1263 = vmatprep.mubr.bf16.mxu0 0
    %1264 = vmatmul.mubr.bf16.gmra.mrb[0].mxu0 %v1229
    %v1265 = vpop.f32.mrb[0].mxu0
    %v1266 = vadd.f32 0.0, %v1265
    %v1267 = vpop.f32.mrb[0].mxu0
    %v1268 = vpop.f32.mrb[0].mxu0
    %v1269 = vadd.f32 0.0, %v1268
    %v1270 = vpop.f32.mrb[0].mxu0
    %1271 = vdwg.mxu0
    %v1272 = vpack.c.bf16 %v1221, %v1218
    %v1273 = vpack.c.bf16 %v1269, %v1266
    %v1278 = vunpack.c.l.b16 %v1072
    %v1279 = vunpack.c.l.b16 %v1073
    %v1280 = vunpack.c.l.b16 %v1074
    %v1281 = vunpack.c.l.b16 %v1075
    %v1282 = vpack.c.b16 %v1279, %v1278
    %v1283 = vpack.c.b16 %v1281, %v1280
    %v1287 = vsel %vm478, %v1272, 0
    %v1290 = vsel %vm478, %v1273, 0
    %1292 = vmatprep.subr.bf16.mxu0 0
    %1293 = vmatpush1.bf16.msra.mxu0 %v1282
    %1294 = vmatprep.subr.bf16.mxu0 0
    %1295 = vmatpush1.bf16.msra.mxu0 %v1283
    %1296 = vmatprep.subr.bf16.mxu0 0
    %1297 = vmatpush1.bf16.msra.mxu0 0
    %1298 = vmatprep.subr.bf16.mxu0 0
    %1299 = vmatpush1.bf16.msra.mxu0 0
    %1300 = vmatprep.subr.bf16.mxu0 0
    %1301 = vmatpush1.bf16.msra.mxu0 0
    %1302 = vmatprep.subr.bf16.mxu0 0
    %1303 = vmatpush1.bf16.msra.mxu0 0
    %1304 = vmatprep.subr.bf16.mxu0 0
    %1305 = vmatpush1.bf16.msra.mxu0 0
    %1306 = vmatprep.subr.bf16.mxu0 0
    %1307 = vmatpush1.bf16.msra.mxu0 0
    %1308 = vmatprep.subr.bf16.mxu0 0
    %1309 = vmatpush1.bf16.msra.mxu0 0
    %1310 = vmatprep.subr.bf16.mxu0 0
    %1311 = vmatpush1.bf16.msra.mxu0 0
    %1312 = vmatprep.subr.bf16.mxu0 0
    %1313 = vmatpush1.bf16.msra.mxu0 0
    %1314 = vmatprep.subr.bf16.mxu0 0
    %1315 = vmatpush1.bf16.msra.mxu0 0
    %1316 = vmatprep.subr.bf16.mxu0 0
    %1317 = vmatpush1.bf16.msra.mxu0 0
    %1318 = vmatprep.subr.bf16.mxu0 0
    %1319 = vmatpush1.bf16.msra.mxu0 0
    %1320 = vmatprep.subr.bf16.mxu0 0
    %1321 = vmatpush1.bf16.msra.mxu0 0
    %1322 = vmatprep.subr.bf16.mxu0 0
    %1323 = vmatpush1.bf16.msra.mxu0 0
    %1324 = vmatprep.mubr.bf16.mxu0 0
    %1325 = vmatmul.mubr.bf16.gmra.mrb[0].mxu0 %v1287
    %v1326 = vpop.f32.mrb[0].mxu0
    %v1327 = vadd.f32 0.0, %v1326
    %v1328 = vpop.f32.mrb[0].mxu0
    %v1329 = vpop.f32.mrb[0].mxu0
    %v1330 = vadd.f32 0.0, %v1329
    %v1331 = vpop.f32.mrb[0].mxu0
    %1332 = vmatprep.mubr.bf16.mxu0 0
    %1333 = vmatmul.mubr.bf16.gmra.mrb[0].mxu0 %v1290
    %v1334 = vpop.f32.mrb[0].mxu0
    %v1335 = vadd.f32 0.0, %v1334
    %v1336 = vpop.f32.mrb[0].mxu0
    %v1337 = vpop.f32.mrb[0].mxu0
    %v1338 = vadd.f32 0.0, %v1337
    %v1339 = vpop.f32.mrb[0].mxu0
    %1340 = vdwg.mxu0
    %v1345 = vunpack.c.l.b16 %v1068
    %v1346 = vunpack.c.l.b16 %v1069
    %v1347 = vunpack.c.l.b16 %v1070
    %v1348 = vunpack.c.l.b16 %v1071
    %v1349 = vpack.c.b16 %v1346, %v1345
    %v1350 = vpack.c.b16 %v1348, %v1347
    %v1354 = vsel %vm478, %v1174, 0
    %v1357 = vsel %vm478, %v1175, 0
    %1359 = vmatprep.subr.bf16.mxu0 0
    %1360 = vmatpush1.bf16.msra.mxu0 %v1349
    %1361 = vmatprep.subr.bf16.mxu0 0
    %1362 = vmatpush1.bf16.msra.mxu0 %v1350
    %1363 = vmatprep.subr.bf16.mxu0 0
    %1364 = vmatpush1.bf16.msra.mxu0 0
    %1365 = vmatprep.subr.bf16.mxu0 0
    %1366 = vmatpush1.bf16.msra.mxu0 0
    %1367 = vmatprep.subr.bf16.mxu0 0
    %1368 = vmatpush1.bf16.msra.mxu0 0
    %1369 = vmatprep.subr.bf16.mxu0 0
    %1370 = vmatpush1.bf16.msra.mxu0 0
    %1371 = vmatprep.subr.bf16.mxu0 0
    %1372 = vmatpush1.bf16.msra.mxu0 0
    %1373 = vmatprep.subr.bf16.mxu0 0
    %1374 = vmatpush1.bf16.msra.mxu0 0
    %1375 = vmatprep.subr.bf16.mxu0 0
    %1376 = vmatpush1.bf16.msra.mxu0 0
    %1377 = vmatprep.subr.bf16.mxu0 0
    %1378 = vmatpush1.bf16.msra.mxu0 0
    %1379 = vmatprep.subr.bf16.mxu0 0
    %1380 = vmatpush1.bf16.msra.mxu0 0
    %1381 = vmatprep.subr.bf16.mxu0 0
    %1382 = vmatpush1.bf16.msra.mxu0 0
    %1383 = vmatprep.subr.bf16.mxu0 0
    %1384 = vmatpush1.bf16.msra.mxu0 0
    %1385 = vmatprep.subr.bf16.mxu0 0
    %1386 = vmatpush1.bf16.msra.mxu0 0
    %1387 = vmatprep.subr.bf16.mxu0 0
    %1388 = vmatpush1.bf16.msra.mxu0 0
    %1389 = vmatprep.subr.bf16.mxu0 0
    %1390 = vmatpush1.bf16.msra.mxu0 0
    %1391 = vmatprep.mubr.bf16.mxu0 0
    %1392 = vmatmul.mubr.bf16.gmra.mrb[0].mxu0 %v1354
    %v1393 = vpop.f32.mrb[0].mxu0
    %v1394 = vadd.f32 %v1327, %v1393
    %v1395 = vpop.f32.mrb[0].mxu0
    %v1396 = vpop.f32.mrb[0].mxu0
    %v1397 = vadd.f32 %v1330, %v1396
    %v1398 = vpop.f32.mrb[0].mxu0
    %1399 = vmatprep.mubr.bf16.mxu0 0
    %1400 = vmatmul.mubr.bf16.gmra.mrb[0].mxu0 %v1357
    %v1401 = vpop.f32.mrb[0].mxu0
    %v1402 = vadd.f32 %v1335, %v1401
    %v1403 = vpop.f32.mrb[0].mxu0
    %v1404 = vpop.f32.mrb[0].mxu0
    %v1405 = vadd.f32 %v1338, %v1404
    %v1406 = vpop.f32.mrb[0].mxu0
    %1407 = vdwg.mxu0
    %1408 = vrot.lane.b32.xlu0 %v1084, 64
    %v1409 = vpop.permute.xlu0 %1408
    %v1412 = vsel %vm883, %v1064, 0
    %1414 = vmatprep.subr.bf16.mxu0 0
    %1415 = vmatpush1.bf16.msra.mxu0 %v1409
    %1416 = vmatprep.subr.bf16.mxu0 0
    %1417 = vmatpush1.bf16.msra.mxu0 0
    %1418 = vmatprep.subr.bf16.mxu0 0
    %1419 = vmatpush1.bf16.msra.mxu0 0
    %1420 = vmatprep.subr.bf16.mxu0 0
    %1421 = vmatpush1.bf16.msra.mxu0 0
    %1422 = vmatprep.subr.bf16.mxu0 0
    %1423 = vmatpush1.bf16.msra.mxu0 0
    %1424 = vmatprep.subr.bf16.mxu0 0
    %1425 = vmatpush1.bf16.msra.mxu0 0
    %1426 = vmatprep.subr.bf16.mxu0 0
    %1427 = vmatpush1.bf16.msra.mxu0 0
    %1428 = vmatprep.subr.bf16.mxu0 0
    %1429 = vmatpush1.bf16.msra.mxu0 0
    %1430 = vmatprep.subr.bf16.mxu0 0
    %1431 = vmatpush1.bf16.msra.mxu0 0
    %1432 = vmatprep.subr.bf16.mxu0 0
    %1433 = vmatpush1.bf16.msra.mxu0 0
    %1434 = vmatprep.subr.bf16.mxu0 0
    %1435 = vmatpush1.bf16.msra.mxu0 0
    %1436 = vmatprep.subr.bf16.mxu0 0
    %1437 = vmatpush1.bf16.msra.mxu0 0
    %1438 = vmatprep.subr.bf16.mxu0 0
    %1439 = vmatpush1.bf16.msra.mxu0 0
    %1440 = vmatprep.subr.bf16.mxu0 0
    %1441 = vmatpush1.bf16.msra.mxu0 0
    %1442 = vmatprep.subr.bf16.mxu0 0
    %1443 = vmatpush1.bf16.msra.mxu0 0
    %1444 = vmatprep.subr.bf16.mxu0 0
    %1445 = vmatpush1.bf16.msra.mxu0 0
    %1446 = vmatprep.mubr.bf16.mxu0 0
    %1447 = vmatmul.mubr.bf16.gmra.mrb[0].mxu0 %v1412
    %v1448 = vpop.f32.mrb[0].mxu0
    %v1449 = vadd.f32 0.0, %v1448
    %v1450 = vpop.f32.mrb[0].mxu0
    %v1451 = vpop.f32.mrb[0].mxu0
    %v1452 = vadd.f32 0.0, %v1451
    %v1453 = vpop.f32.mrb[0].mxu0
    %1454 = vdwg.mxu0
    %1455 = vrot.lane.b32.xlu0 %v1085, 64
    %v1456 = vpop.permute.xlu0 %1455
    %v1459 = vsel %vm883, %v1065, 0
    %1461 = vmatprep.subr.bf16.mxu0 0
    %1462 = vmatpush1.bf16.msra.mxu0 %v1456
    %1463 = vmatprep.subr.bf16.mxu0 0
    %1464 = vmatpush1.bf16.msra.mxu0 0
    %1465 = vmatprep.subr.bf16.mxu0 0
    %1466 = vmatpush1.bf16.msra.mxu0 0
    %1467 = vmatprep.subr.bf16.mxu0 0
    %1468 = vmatpush1.bf16.msra.mxu0 0
    %1469 = vmatprep.subr.bf16.mxu0 0
    %1470 = vmatpush1.bf16.msra.mxu0 0
    %1471 = vmatprep.subr.bf16.mxu0 0
    %1472 = vmatpush1.bf16.msra.mxu0 0
    %1473 = vmatprep.subr.bf16.mxu0 0
    %1474 = vmatpush1.bf16.msra.mxu0 0
    %1475 = vmatprep.subr.bf16.mxu0 0
    %1476 = vmatpush1.bf16.msra.mxu0 0
    %1477 = vmatprep.subr.bf16.mxu0 0
    %1478 = vmatpush1.bf16.msra.mxu0 0
    %1479 = vmatprep.subr.bf16.mxu0 0
    %1480 = vmatpush1.bf16.msra.mxu0 0
    %1481 = vmatprep.subr.bf16.mxu0 0
    %1482 = vmatpush1.bf16.msra.mxu0 0
    %1483 = vmatprep.subr.bf16.mxu0 0
    %1484 = vmatpush1.bf16.msra.mxu0 0
    %1485 = vmatprep.subr.bf16.mxu0 0
    %1486 = vmatpush1.bf16.msra.mxu0 0
    %1487 = vmatprep.subr.bf16.mxu0 0
    %1488 = vmatpush1.bf16.msra.mxu0 0
    %1489 = vmatprep.subr.bf16.mxu0 0
    %1490 = vmatpush1.bf16.msra.mxu0 0
    %1491 = vmatprep.subr.bf16.mxu0 0
    %1492 = vmatpush1.bf16.msra.mxu0 0
    %1493 = vmatprep.mubr.bf16.mxu0 0
    %1494 = vmatmul.mubr.bf16.gmra.mrb[0].mxu0 %v1459
    %v1495 = vpop.f32.mrb[0].mxu0
    %v1496 = vadd.f32 0.0, %v1495
    %v1497 = vpop.f32.mrb[0].mxu0
    %v1498 = vpop.f32.mrb[0].mxu0
    %v1499 = vadd.f32 0.0, %v1498
    %v1500 = vpop.f32.mrb[0].mxu0
    %1501 = vdwg.mxu0
    %v1502 = vpack.c.bf16 %v1452, %v1449
    %v1503 = vpack.c.bf16 %v1499, %v1496
    %v1508 = vunpack.c.l.b16 %v1076
    %v1509 = vunpack.c.l.b16 %v1077
    %v1510 = vunpack.c.l.b16 %v1078
    %v1511 = vunpack.c.l.b16 %v1079
    %v1512 = vpack.c.b16 %v1509, %v1508
    %v1513 = vpack.c.b16 %v1511, %v1510
    %v1517 = vsel %vm478, %v1502, 0
    %v1520 = vsel %vm478, %v1503, 0
    %1522 = vmatprep.subr.bf16.mxu0 0
    %1523 = vmatpush1.bf16.msra.mxu0 %v1512
    %1524 = vmatprep.subr.bf16.mxu0 0
    %1525 = vmatpush1.bf16.msra.mxu0 %v1513
    %1526 = vmatprep.subr.bf16.mxu0 0
    %1527 = vmatpush1.bf16.msra.mxu0 0
    %1528 = vmatprep.subr.bf16.mxu0 0
    %1529 = vmatpush1.bf16.msra.mxu0 0
    %1530 = vmatprep.subr.bf16.mxu0 0
    %1531 = vmatpush1.bf16.msra.mxu0 0
    %1532 = vmatprep.subr.bf16.mxu0 0
    %1533 = vmatpush1.bf16.msra.mxu0 0
    %1534 = vmatprep.subr.bf16.mxu0 0
    %1535 = vmatpush1.bf16.msra.mxu0 0
    %1536 = vmatprep.subr.bf16.mxu0 0
    %1537 = vmatpush1.bf16.msra.mxu0 0
    %1538 = vmatprep.subr.bf16.mxu0 0
    %1539 = vmatpush1.bf16.msra.mxu0 0
    %1540 = vmatprep.subr.bf16.mxu0 0
    %1541 = vmatpush1.bf16.msra.mxu0 0
    %1542 = vmatprep.subr.bf16.mxu0 0
    %1543 = vmatpush1.bf16.msra.mxu0 0
    %1544 = vmatprep.subr.bf16.mxu0 0
    %1545 = vmatpush1.bf16.msra.mxu0 0
    %1546 = vmatprep.subr.bf16.mxu0 0
    %1547 = vmatpush1.bf16.msra.mxu0 0
    %1548 = vmatprep.subr.bf16.mxu0 0
    %1549 = vmatpush1.bf16.msra.mxu0 0
    %1550 = vmatprep.subr.bf16.mxu0 0
    %1551 = vmatpush1.bf16.msra.mxu0 0
    %1552 = vmatprep.subr.bf16.mxu0 0
    %1553 = vmatpush1.bf16.msra.mxu0 0
    %1554 = vmatprep.mubr.bf16.mxu0 0
    %1555 = vmatmul.mubr.bf16.gmra.mrb[0].mxu0 %v1517
    %v1556 = vpop.f32.mrb[0].mxu0
    %v1557 = vadd.f32 0.0, %v1556
    %v1558 = vpop.f32.mrb[0].mxu0
    %v1559 = vpop.f32.mrb[0].mxu0
    %v1560 = vadd.f32 0.0, %v1559
    %v1561 = vpop.f32.mrb[0].mxu0
    %1562 = vmatprep.mubr.bf16.mxu0 0
    %1563 = vmatmul.mubr.bf16.gmra.mrb[0].mxu0 %v1520
    %v1564 = vpop.f32.mrb[0].mxu0
    %v1565 = vadd.f32 0.0, %v1564
    %v1566 = vpop.f32.mrb[0].mxu0
    %v1567 = vpop.f32.mrb[0].mxu0
    %v1568 = vadd.f32 0.0, %v1567
    %v1569 = vpop.f32.mrb[0].mxu0
    %1570 = vdwg.mxu0
    %v1571 = vadd.f32 %v1394, %v1557
    %v1572 = vadd.f32 %v1397, %v1560
    %v1573 = vadd.f32 %v1402, %v1565
    %v1574 = vadd.f32 %v1405, %v1568
    %1575 = vrot.lane.b32.xlu0 %v1084, 32
    %v1576 = vpop.permute.xlu0 %1575
    %v1579 = vsel %vm883, %v1066, 0
    %1581 = vmatprep.subr.bf16.mxu0 0
    %1582 = vmatpush1.bf16.msra.mxu0 %v1576
    %1583 = vmatprep.subr.bf16.mxu0 0
    %1584 = vmatpush1.bf16.msra.mxu0 0
    %1585 = vmatprep.subr.bf16.mxu0 0
    %1586 = vmatpush1.bf16.msra.mxu0 0
    %1587 = vmatprep.subr.bf16.mxu0 0
    %1588 = vmatpush1.bf16.msra.mxu0 0
    %1589 = vmatprep.subr.bf16.mxu0 0
    %1590 = vmatpush1.bf16.msra.mxu0 0
    %1591 = vmatprep.subr.bf16.mxu0 0
    %1592 = vmatpush1.bf16.msra.mxu0 0
    %1593 = vmatprep.subr.bf16.mxu0 0
    %1594 = vmatpush1.bf16.msra.mxu0 0
    %1595 = vmatprep.subr.bf16.mxu0 0
    %1596 = vmatpush1.bf16.msra.mxu0 0
    %1597 = vmatprep.subr.bf16.mxu0 0
    %1598 = vmatpush1.bf16.msra.mxu0 0
    %1599 = vmatprep.subr.bf16.mxu0 0
    %1600 = vmatpush1.bf16.msra.mxu0 0
    %1601 = vmatprep.subr.bf16.mxu0 0
    %1602 = vmatpush1.bf16.msra.mxu0 0
    %1603 = vmatprep.subr.bf16.mxu0 0
    %1604 = vmatpush1.bf16.msra.mxu0 0
    %1605 = vmatprep.subr.bf16.mxu0 0
    %1606 = vmatpush1.bf16.msra.mxu0 0
    %1607 = vmatprep.subr.bf16.mxu0 0
    %1608 = vmatpush1.bf16.msra.mxu0 0
    %1609 = vmatprep.subr.bf16.mxu0 0
    %1610 = vmatpush1.bf16.msra.mxu0 0
    %1611 = vmatprep.subr.bf16.mxu0 0
    %1612 = vmatpush1.bf16.msra.mxu0 0
    %1613 = vmatprep.mubr.bf16.mxu0 0
    %1614 = vmatmul.mubr.bf16.gmra.mrb[0].mxu0 %v1579
    %v1615 = vpop.f32.mrb[0].mxu0
    %v1616 = vadd.f32 0.0, %v1615
    %v1617 = vpop.f32.mrb[0].mxu0
    %v1618 = vpop.f32.mrb[0].mxu0
    %v1619 = vadd.f32 0.0, %v1618
    %v1620 = vpop.f32.mrb[0].mxu0
    %1621 = vdwg.mxu0
    %1622 = vrot.lane.b32.xlu0 %v1085, 32
    %v1623 = vpop.permute.xlu0 %1622
    %v1626 = vsel %vm883, %v1067, 0
    %1628 = vmatprep.subr.bf16.mxu0 0
    %1629 = vmatpush1.bf16.msra.mxu0 %v1623
    %1630 = vmatprep.subr.bf16.mxu0 0
    %1631 = vmatpush1.bf16.msra.mxu0 0
    %1632 = vmatprep.subr.bf16.mxu0 0
    %1633 = vmatpush1.bf16.msra.mxu0 0
    %1634 = vmatprep.subr.bf16.mxu0 0
    %1635 = vmatpush1.bf16.msra.mxu0 0
    %1636 = vmatprep.subr.bf16.mxu0 0
    %1637 = vmatpush1.bf16.msra.mxu0 0
    %1638 = vmatprep.subr.bf16.mxu0 0
    %1639 = vmatpush1.bf16.msra.mxu0 0
    %1640 = vmatprep.subr.bf16.mxu0 0
    %1641 = vmatpush1.bf16.msra.mxu0 0
    %1642 = vmatprep.subr.bf16.mxu0 0
    %1643 = vmatpush1.bf16.msra.mxu0 0
    %1644 = vmatprep.subr.bf16.mxu0 0
    %1645 = vmatpush1.bf16.msra.mxu0 0
    %1646 = vmatprep.subr.bf16.mxu0 0
    %1647 = vmatpush1.bf16.msra.mxu0 0
    %1648 = vmatprep.subr.bf16.mxu0 0
    %1649 = vmatpush1.bf16.msra.mxu0 0
    %1650 = vmatprep.subr.bf16.mxu0 0
    %1651 = vmatpush1.bf16.msra.mxu0 0
    %1652 = vmatprep.subr.bf16.mxu0 0
    %1653 = vmatpush1.bf16.msra.mxu0 0
    %1654 = vmatprep.subr.bf16.mxu0 0
    %1655 = vmatpush1.bf16.msra.mxu0 0
    %1656 = vmatprep.subr.bf16.mxu0 0
    %1657 = vmatpush1.bf16.msra.mxu0 0
    %1658 = vmatprep.subr.bf16.mxu0 0
    %1659 = vmatpush1.bf16.msra.mxu0 0
    %1660 = vmatprep.mubr.bf16.mxu0 0
    %1661 = vmatmul.mubr.bf16.gmra.mrb[0].mxu0 %v1626
    %v1662 = vpop.f32.mrb[0].mxu0
    %v1663 = vadd.f32 0.0, %v1662
    %v1664 = vpop.f32.mrb[0].mxu0
    %v1665 = vpop.f32.mrb[0].mxu0
    %v1666 = vadd.f32 0.0, %v1665
    %v1667 = vpop.f32.mrb[0].mxu0
    %1668 = vdwg.mxu0
    %v1669 = vpack.c.bf16 %v1619, %v1616
    %v1670 = vpack.c.bf16 %v1666, %v1663
    %v1675 = vunpack.c.l.b16 %v1080
    %v1676 = vunpack.c.l.b16 %v1081
    %v1677 = vunpack.c.l.b16 %v1082
    %v1678 = vunpack.c.l.b16 %v1083
    %v1679 = vpack.c.b16 %v1676, %v1675
    %v1680 = vpack.c.b16 %v1678, %v1677
    %v1684 = vsel %vm478, %v1669, 0
    %v1687 = vsel %vm478, %v1670, 0
    %1689 = vmatprep.subr.bf16.mxu0 0
    %1690 = vmatpush1.bf16.msra.mxu0 %v1679
    %1691 = vmatprep.subr.bf16.mxu0 0
    %1692 = vmatpush1.bf16.msra.mxu0 %v1680
    %1693 = vmatprep.subr.bf16.mxu0 0
    %1694 = vmatpush1.bf16.msra.mxu0 0
    %1695 = vmatprep.subr.bf16.mxu0 0
    %1696 = vmatpush1.bf16.msra.mxu0 0
    %1697 = vmatprep.subr.bf16.mxu0 0
    %1698 = vmatpush1.bf16.msra.mxu0 0
    %1699 = vmatprep.subr.bf16.mxu0 0
    %1700 = vmatpush1.bf16.msra.mxu0 0
    %1701 = vmatprep.subr.bf16.mxu0 0
    %1702 = vmatpush1.bf16.msra.mxu0 0
    %1703 = vmatprep.subr.bf16.mxu0 0
    %1704 = vmatpush1.bf16.msra.mxu0 0
    %1705 = vmatprep.subr.bf16.mxu0 0
    %1706 = vmatpush1.bf16.msra.mxu0 0
    %1707 = vmatprep.subr.bf16.mxu0 0
    %1708 = vmatpush1.bf16.msra.mxu0 0
    %1709 = vmatprep.subr.bf16.mxu0 0
    %1710 = vmatpush1.bf16.msra.mxu0 0
    %1711 = vmatprep.subr.bf16.mxu0 0
    %1712 = vmatpush1.bf16.msra.mxu0 0
    %1713 = vmatprep.subr.bf16.mxu0 0
    %1714 = vmatpush1.bf16.msra.mxu0 0
    %1715 = vmatprep.subr.bf16.mxu0 0
    %1716 = vmatpush1.bf16.msra.mxu0 0
    %1717 = vmatprep.subr.bf16.mxu0 0
    %1718 = vmatpush1.bf16.msra.mxu0 0
    %1719 = vmatprep.subr.bf16.mxu0 0
    %1720 = vmatpush1.bf16.msra.mxu0 0
    %1721 = vmatprep.mubr.bf16.mxu0 0
    %1722 = vmatmul.mubr.bf16.gmra.mrb[0].mxu0 %v1684
    %v1723 = vpop.f32.mrb[0].mxu0
    %v1724 = vadd.f32 0.0, %v1723
    %v1725 = vpop.f32.mrb[0].mxu0
    %v1726 = vpop.f32.mrb[0].mxu0
    %v1727 = vadd.f32 0.0, %v1726
    %v1728 = vpop.f32.mrb[0].mxu0
    %1729 = vmatprep.mubr.bf16.mxu0 0
    %1730 = vmatmul.mubr.bf16.gmra.mrb[0].mxu0 %v1687
    %v1731 = vpop.f32.mrb[0].mxu0
    %v1732 = vadd.f32 0.0, %v1731
    %v1733 = vpop.f32.mrb[0].mxu0
    %v1734 = vpop.f32.mrb[0].mxu0
    %v1735 = vadd.f32 0.0, %v1734
    %v1736 = vpop.f32.mrb[0].mxu0
    %1737 = vdwg.mxu0
    %v1738 = vadd.f32 %v1571, %v1724
    %v1739 = vadd.f32 %v1572, %v1727
    %v1740 = vadd.f32 %v1573, %v1732
    %v1741 = vadd.f32 %v1574, %v1735
    %v1742 = vld [vmem:[%s6] sm:$0x1]
    %v1744 = vlaneseq
    %v1745 = vshrl.u32 %v1744, 7
    %v1746 = vsub.s32 0, %v1745
    %v1747 = vrot.slane %v1742, %v1746
    %v1749 = vadd.f32 %v1738, %v1747
    %v1750 = vadd.f32 %v1739, %v1747
    %v1751 = vadd.f32 %v1740, %v1747
    %v1752 = vadd.f32 %v1741, %v1747
    %v1753 = vadd.f32 %v114, %v1749
    %v1754 = vadd.f32 %v115, %v1750
    %v1755 = vadd.f32 %v116, %v1751
    %v1756 = vadd.f32 %v117, %v1752
    %v1757 = vld [vmem:[%s7] sm:$0x1]
    %v1758 = vld [vmem:[%s8] sm:$0x1]
    %1759 = vadd.xlane.f32.xlu0 %v1753
    %v1760 = vpop.xlane.xlu0 %1759
    %1761 = vadd.xlane.f32.xlu0 %v1754
    %v1762 = vpop.xlane.xlu0 %1761
    %1763 = vadd.xlane.f32.xlu0 %v1755
    %v1764 = vpop.xlane.xlu0 %1763
    %1765 = vadd.xlane.f32.xlu0 %v1756
    %v1766 = vpop.xlane.xlu0 %1765
    %v1767 = vmul.f32 %v1760, %v128
    %v1768 = vmul.f32 %v1762, %v128
    %v1769 = vmul.f32 %v1764, %v128
    %v1770 = vmul.f32 %v1766, %v128
    %v1771 = vmul.f32 %v1753, %v1753
    %v1772 = vmul.f32 %v1754, %v1754
    %v1773 = vmul.f32 %v1755, %v1755
    %v1774 = vmul.f32 %v1756, %v1756
    %1775 = vadd.xlane.f32.xlu0 %v1771
    %v1776 = vpop.xlane.xlu0 %1775
    %1777 = vadd.xlane.f32.xlu0 %v1772
    %v1778 = vpop.xlane.xlu0 %1777
    %1779 = vadd.xlane.f32.xlu0 %v1773
    %v1780 = vpop.xlane.xlu0 %1779
    %1781 = vadd.xlane.f32.xlu0 %v1774
    %v1782 = vpop.xlane.xlu0 %1781
    %v1783 = vmul.f32 %v1776, %v128
    %v1784 = vmul.f32 %v1778, %v128
    %v1785 = vmul.f32 %v1780, %v128
    %v1786 = vmul.f32 %v1782, %v128
    %v1787 = vmul.f32 %v1767, %v1767
    %v1788 = vmul.f32 %v1768, %v1768
    %v1789 = vmul.f32 %v1769, %v1769
    %v1790 = vmul.f32 %v1770, %v1770
    %v1791 = vsub.f32 %v1783, %v1787
    %v1792 = vsub.f32 %v1784, %v1788
    %v1793 = vsub.f32 %v1785, %v1789
    %v1794 = vsub.f32 %v1786, %v1790
    %v1795 = vsub.f32 %v1753, %v1767
    %v1796 = vsub.f32 %v1754, %v1768
    %v1797 = vsub.f32 %v1755, %v1769
    %v1798 = vsub.f32 %v1756, %v1770
    %v1799 = vadd.f32 %v1791, 1e-06
    %v1800 = vadd.f32 %v1792, 1e-06
    %v1801 = vadd.f32 %v1793, 1e-06
    %v1802 = vadd.f32 %v1794, 1e-06
    %v1803 = vrsqrt.pop %v1799
    %v1804 = vrsqrt.pop %v1800
    %v1805 = vrsqrt.pop %v1801
    %v1806 = vrsqrt.pop %v1802
    %v1807 = vmul.f32 %v1795, %v1803
    %v1808 = vmul.f32 %v1796, %v1804
    %v1809 = vmul.f32 %v1797, %v1805
    %v1810 = vmul.f32 %v1798, %v1806
    %v1812 = vlaneseq
    %v1813 = vshrl.u32 %v1812, 7
    %v1814 = vsub.s32 0, %v1813
    %v1815 = vrot.slane %v1757, %v1814
    %v1817 = vmul.f32 %v1807, %v1815
    %v1818 = vmul.f32 %v1808, %v1815
    %v1819 = vmul.f32 %v1809, %v1815
    %v1820 = vmul.f32 %v1810, %v1815
    %v1822 = vlaneseq
    %v1823 = vshrl.u32 %v1822, 7
    %v1824 = vsub.s32 0, %v1823
    %v1825 = vrot.slane %v1758, %v1824
    %v1827 = vadd.f32 %v1817, %v1825
    %v1828 = vadd.f32 %v1818, %v1825
    %v1829 = vadd.f32 %v1819, %v1825
    %v1830 = vadd.f32 %v1820, %v1825
    %v1831 = vpack.c.bf16 %v1828, %v1827
    %v1832 = vpack.c.bf16 %v1830, %v1829
    %v1833 = vld [vmem:[#allocation8] sm:$0xff]
    %v1834 = vld [vmem:[#allocation8 + $0x8] sm:$0xff]
    %v1835 = vld [vmem:[#allocation8 + $0x10] sm:$0xff]
    %v1836 = vld [vmem:[#allocation8 + $0x18] sm:$0xff]
    %v1837 = vld [vmem:[#allocation8 + $0x20] sm:$0xff]
    %v1838 = vld [vmem:[#allocation8 + $0x28] sm:$0xff]
    %v1839 = vld [vmem:[#allocation8 + $0x30] sm:$0xff]
    %v1840 = vld [vmem:[#allocation8 + $0x38] sm:$0xff]
    %v1841 = vld [vmem:[#allocation8 + $0x40] sm:$0xff]
    %v1842 = vld [vmem:[#allocation8 + $0x48] sm:$0xff]
    %v1843 = vld [vmem:[#allocation8 + $0x50] sm:$0xff]
    %v1844 = vld [vmem:[#allocation8 + $0x58] sm:$0xff]
    %v1845 = vld [vmem:[#allocation8 + $0x60] sm:$0xff]
    %v1846 = vld [vmem:[#allocation8 + $0x68] sm:$0xff]
    %v1847 = vld [vmem:[#allocation8 + $0x70] sm:$0xff]
    %v1848 = vld [vmem:[#allocation8 + $0x78] sm:$0xff]
    %v1849 = vld [vmem:[%s10] sm:$0x3]
    %v1851 = vlaneseq
    %v1852 = vshrl.u32 %v1851, 7
    %v1853 = vsub.s32 0, %v1852
    %v1854 = vrot.slane %v1849, %v1853
    %v1855 = vlaneseq
    %v1856 = vshrl.u32 %v1855, 7
    %v1857 = vsub.s32 1, %v1856
    %v1858 = vrot.slane %v1849, %v1857
    %v1877 = vunpack.c.l.b16 %v1833
    %v1878 = vunpack.c.h.b16 %v1833
    %v1879 = vunpack.c.l.b16 %v1834
    %v1880 = vunpack.c.h.b16 %v1834
    %v1881 = vunpack.c.l.b16 %v1835
    %v1882 = vunpack.c.h.b16 %v1835
    %v1883 = vunpack.c.l.b16 %v1836
    %v1884 = vunpack.c.h.b16 %v1836
    %v1885 = vunpack.c.l.b16 %v1837
    %v1886 = vunpack.c.h.b16 %v1837
    %v1887 = vunpack.c.l.b16 %v1838
    %v1888 = vunpack.c.h.b16 %v1838
    %v1889 = vunpack.c.l.b16 %v1839
    %v1890 = vunpack.c.h.b16 %v1839
    %v1891 = vunpack.c.l.b16 %v1840
    %v1892 = vunpack.c.h.b16 %v1840
    %v1893 = vunpack.c.l.b16 %v1841
    %v1894 = vunpack.c.h.b16 %v1841
    %v1895 = vunpack.c.l.b16 %v1842
    %v1896 = vunpack.c.h.b16 %v1842
    %v1897 = vunpack.c.l.b16 %v1843
    %v1898 = vunpack.c.h.b16 %v1843
    %v1899 = vunpack.c.l.b16 %v1844
    %v1900 = vunpack.c.h.b16 %v1844
    %v1901 = vunpack.c.l.b16 %v1845
    %v1902 = vunpack.c.h.b16 %v1845
    %v1903 = vunpack.c.l.b16 %v1846
    %v1904 = vunpack.c.h.b16 %v1846
    %v1905 = vunpack.c.l.b16 %v1847
    %v1906 = vunpack.c.h.b16 %v1847
    %v1907 = vunpack.c.l.b16 %v1848
    %v1908 = vunpack.c.h.b16 %v1848
    %v1909 = vpack.c.b16 %v1879, %v1877
    %v1910 = vpack.c.b16 %v1880, %v1878
    %v1911 = vpack.c.b16 %v1883, %v1881
    %v1912 = vpack.c.b16 %v1884, %v1882
    %v1913 = vpack.c.b16 %v1887, %v1885
    %v1914 = vpack.c.b16 %v1888, %v1886
    %v1915 = vpack.c.b16 %v1891, %v1889
    %v1916 = vpack.c.b16 %v1892, %v1890
    %v1917 = vpack.c.b16 %v1895, %v1893
    %v1918 = vpack.c.b16 %v1896, %v1894
    %v1919 = vpack.c.b16 %v1899, %v1897
    %v1920 = vpack.c.b16 %v1900, %v1898
    %v1921 = vpack.c.b16 %v1903, %v1901
    %v1922 = vpack.c.b16 %v1904, %v1902
    %v1923 = vpack.c.b16 %v1907, %v1905
    %v1924 = vpack.c.b16 %v1908, %v1906
    %1941 = vmatprep.subr.bf16.mxu0 %v1910
    %1942 = vmatpush1.bf16.msra.mxu0 %v1909
    %1943 = vmatprep.subr.bf16.mxu0 %v1912
    %1944 = vmatpush1.bf16.msra.mxu0 %v1911
    %1945 = vmatprep.subr.bf16.mxu0 %v1914
    %1946 = vmatpush1.bf16.msra.mxu0 %v1913
    %1947 = vmatprep.subr.bf16.mxu0 %v1916
    %1948 = vmatpush1.bf16.msra.mxu0 %v1915
    %1949 = vmatprep.subr.bf16.mxu0 %v1918
    %1950 = vmatpush1.bf16.msra.mxu0 %v1917
    %1951 = vmatprep.subr.bf16.mxu0 %v1920
    %1952 = vmatpush1.bf16.msra.mxu0 %v1919
    %1953 = vmatprep.subr.bf16.mxu0 %v1922
    %1954 = vmatpush1.bf16.msra.mxu0 %v1921
    %1955 = vmatprep.subr.bf16.mxu0 %v1924
    %1956 = vmatpush1.bf16.msra.mxu0 %v1923
    %1957 = vmatprep.subr.bf16.mxu0 0
    %1958 = vmatpush1.bf16.msra.mxu0 0
    %1959 = vmatprep.subr.bf16.mxu0 0
    %1960 = vmatpush1.bf16.msra.mxu0 0
    %1961 = vmatprep.subr.bf16.mxu0 0
    %1962 = vmatpush1.bf16.msra.mxu0 0
    %1963 = vmatprep.subr.bf16.mxu0 0
    %1964 = vmatpush1.bf16.msra.mxu0 0
    %1965 = vmatprep.subr.bf16.mxu0 0
    %1966 = vmatpush1.bf16.msra.mxu0 0
    %1967 = vmatprep.subr.bf16.mxu0 0
    %1968 = vmatpush1.bf16.msra.mxu0 0
    %1969 = vmatprep.subr.bf16.mxu0 0
    %1970 = vmatpush1.bf16.msra.mxu0 0
    %1971 = vmatprep.subr.bf16.mxu0 0
    %1972 = vmatpush1.bf16.msra.mxu0 0
    %1973 = vmatprep.mubr.bf16.mxu0 0
    %1974 = vmatmul.mubr.bf16.gmra.mrb[0].mxu0 %v1831
    %v1975 = vpop.f32.mrb[0].mxu0
    %v1976 = vadd.f32 %v1854, %v1975
    %v1977 = vpop.f32.mrb[0].mxu0
    %v1978 = vadd.f32 %v1858, %v1977
    %v1979 = vpop.f32.mrb[0].mxu0
    %v1980 = vadd.f32 %v1854, %v1979
    %v1981 = vpop.f32.mrb[0].mxu0
    %v1982 = vadd.f32 %v1858, %v1981
    %1983 = vmatprep.mubr.bf16.mxu0 0
    %1984 = vmatmul.mubr.bf16.gmra.mrb[0].mxu0 %v1832
    %v1985 = vpop.f32.mrb[0].mxu0
    %v1986 = vadd.f32 %v1854, %v1985
    %v1987 = vpop.f32.mrb[0].mxu0
    %v1988 = vadd.f32 %v1858, %v1987
    %v1989 = vpop.f32.mrb[0].mxu0
    %v1990 = vadd.f32 %v1854, %v1989
    %v1991 = vpop.f32.mrb[0].mxu0
    %v1992 = vadd.f32 %v1858, %v1991
    %1993 = vdwg.mxu0
    %v1994 = vmul.f32 %v1976, %v1976
    %v1995 = vmul.f32 %v1978, %v1978
    %v1996 = vmul.f32 %v1980, %v1980
    %v1997 = vmul.f32 %v1982, %v1982
    %v1998 = vmul.f32 %v1986, %v1986
    %v1999 = vmul.f32 %v1988, %v1988
    %v2000 = vmul.f32 %v1990, %v1990
    %v2001 = vmul.f32 %v1992, %v1992
    %v2002 = vmul.f32 %v1976, %v1994
    %v2003 = vmul.f32 %v1978, %v1995
    %v2004 = vmul.f32 %v1980, %v1996
    %v2005 = vmul.f32 %v1982, %v1997
    %v2006 = vmul.f32 %v1986, %v1998
    %v2007 = vmul.f32 %v1988, %v1999
    %v2008 = vmul.f32 %v1990, %v2000
    %v2009 = vmul.f32 %v1992, %v2001
    %v2010 = vmul.f32 %v2002, 0.044715
    %v2011 = vmul.f32 %v2003, 0.044715
    %v2012 = vmul.f32 %v2004, 0.044715
    %v2013 = vmul.f32 %v2005, 0.044715
    %v2014 = vmul.f32 %v2006, 0.044715
    %v2015 = vmul.f32 %v2007, 0.044715
    %v2016 = vmul.f32 %v2008, 0.044715
    %v2017 = vmul.f32 %v2009, 0.044715
    %v2018 = vadd.f32 %v1976, %v2010
    %v2019 = vadd.f32 %v1978, %v2011
    %v2020 = vadd.f32 %v1980, %v2012
    %v2021 = vadd.f32 %v1982, %v2013
    %v2022 = vadd.f32 %v1986, %v2014
    %v2023 = vadd.f32 %v1988, %v2015
    %v2024 = vadd.f32 %v1990, %v2016
    %v2025 = vadd.f32 %v1992, %v2017
    %v2026 = vmul.f32 %v2018, 0.7978846
    %v2027 = vmul.f32 %v2019, 0.7978846
    %v2028 = vmul.f32 %v2020, 0.7978846
    %v2029 = vmul.f32 %v2021, 0.7978846
    %v2030 = vmul.f32 %v2022, 0.7978846
    %v2031 = vmul.f32 %v2023, 0.7978846
    %v2032 = vmul.f32 %v2024, 0.7978846
    %v2033 = vmul.f32 %v2025, 0.7978846
    %v2034 = vtanh.pop %v2026
    %v2035 = vtanh.pop %v2027
    %v2036 = vtanh.pop %v2028
    %v2037 = vtanh.pop %v2029
    %v2038 = vtanh.pop %v2030
    %v2039 = vtanh.pop %v2031
    %v2040 = vtanh.pop %v2032
    %v2041 = vtanh.pop %v2033
    %v2042 = vadd.f32 %v2034, 1.0
    %v2043 = vadd.f32 %v2035, 1.0
    %v2044 = vadd.f32 %v2036, 1.0
    %v2045 = vadd.f32 %v2037, 1.0
    %v2046 = vadd.f32 %v2038, 1.0
    %v2047 = vadd.f32 %v2039, 1.0
    %v2048 = vadd.f32 %v2040, 1.0
    %v2049 = vadd.f32 %v2041, 1.0
    %v2050 = vmul.f32 %v2042, 0.5
    %v2051 = vmul.f32 %v2043, 0.5
    %v2052 = vmul.f32 %v2044, 0.5
    %v2053 = vmul.f32 %v2045, 0.5
    %v2054 = vmul.f32 %v2046, 0.5
    %v2055 = vmul.f32 %v2047, 0.5
    %v2056 = vmul.f32 %v2048, 0.5
    %v2057 = vmul.f32 %v2049, 0.5
    %v2058 = vmul.f32 %v1976, %v2050
    %v2059 = vmul.f32 %v1978, %v2051
    %v2060 = vmul.f32 %v1980, %v2052
    %v2061 = vmul.f32 %v1982, %v2053
    %v2062 = vmul.f32 %v1986, %v2054
    %v2063 = vmul.f32 %v1988, %v2055
    %v2064 = vmul.f32 %v1990, %v2056
    %v2065 = vmul.f32 %v1992, %v2057
    %v2066 = vpack.c.bf16 %v2060, %v2058
    %v2067 = vpack.c.bf16 %v2061, %v2059
    %v2068 = vpack.c.bf16 %v2064, %v2062
    %v2069 = vpack.c.bf16 %v2065, %v2063
    %v2070 = vld [vmem:[#allocation10] sm:$0xf]
    %v2071 = vld [vmem:[#allocation10 + $0x4] sm:$0xf]
    %v2072 = vld [vmem:[#allocation10 + $0x8] sm:$0xf]
    %v2073 = vld [vmem:[#allocation10 + $0xc] sm:$0xf]
    %v2074 = vld [vmem:[#allocation10 + $0x10] sm:$0xf]
    %v2075 = vld [vmem:[#allocation10 + $0x14] sm:$0xf]
    %v2076 = vld [vmem:[#allocation10 + $0x18] sm:$0xf]
    %v2077 = vld [vmem:[#allocation10 + $0x1c] sm:$0xf]
    %v2078 = vld [vmem:[#allocation10 + $0x20] sm:$0xf]
    %v2079 = vld [vmem:[#allocation10 + $0x24] sm:$0xf]
    %v2080 = vld [vmem:[#allocation10 + $0x28] sm:$0xf]
    %v2081 = vld [vmem:[#allocation10 + $0x2c] sm:$0xf]
    %v2082 = vld [vmem:[#allocation10 + $0x30] sm:$0xf]
    %v2083 = vld [vmem:[#allocation10 + $0x34] sm:$0xf]
    %v2084 = vld [vmem:[#allocation10 + $0x38] sm:$0xf]
    %v2085 = vld [vmem:[#allocation10 + $0x3c] sm:$0xf]
    %v2086 = vld [vmem:[#allocation10 + $0x40] sm:$0xf]
    %v2087 = vld [vmem:[#allocation10 + $0x44] sm:$0xf]
    %v2088 = vld [vmem:[#allocation10 + $0x48] sm:$0xf]
    %v2089 = vld [vmem:[#allocation10 + $0x4c] sm:$0xf]
    %v2090 = vld [vmem:[#allocation10 + $0x50] sm:$0xf]
    %v2091 = vld [vmem:[#allocation10 + $0x54] sm:$0xf]
    %v2092 = vld [vmem:[#allocation10 + $0x58] sm:$0xf]
    %v2093 = vld [vmem:[#allocation10 + $0x5c] sm:$0xf]
    %v2094 = vld [vmem:[#allocation10 + $0x60] sm:$0xf]
    %v2095 = vld [vmem:[#allocation10 + $0x64] sm:$0xf]
    %v2096 = vld [vmem:[#allocation10 + $0x68] sm:$0xf]
    %v2097 = vld [vmem:[#allocation10 + $0x6c] sm:$0xf]
    %v2098 = vld [vmem:[#allocation10 + $0x70] sm:$0xf]
    %v2099 = vld [vmem:[#allocation10 + $0x74] sm:$0xf]
    %v2100 = vld [vmem:[#allocation10 + $0x78] sm:$0xf]
    %v2101 = vld [vmem:[#allocation10 + $0x7c] sm:$0xf]
    %v2102 = vld [vmem:[%s12] sm:$0x1]
    %v2104 = vlaneseq
    %v2105 = vshrl.u32 %v2104, 7
    %v2106 = vsub.s32 0, %v2105
    %v2107 = vrot.slane %v2102, %v2106
    %v2141 = vunpack.c.l.b16 %v2070
    %v2142 = vunpack.c.l.b16 %v2071
    %v2143 = vunpack.c.l.b16 %v2072
    %v2144 = vunpack.c.l.b16 %v2073
    %v2145 = vunpack.c.l.b16 %v2074
    %v2146 = vunpack.c.l.b16 %v2075
    %v2147 = vunpack.c.l.b16 %v2076
    %v2148 = vunpack.c.l.b16 %v2077
    %v2149 = vunpack.c.l.b16 %v2078
    %v2150 = vunpack.c.l.b16 %v2079
    %v2151 = vunpack.c.l.b16 %v2080
    %v2152 = vunpack.c.l.b16 %v2081
    %v2153 = vunpack.c.l.b16 %v2082
    %v2154 = vunpack.c.l.b16 %v2083
    %v2155 = vunpack.c.l.b16 %v2084
    %v2156 = vunpack.c.l.b16 %v2085
    %v2157 = vunpack.c.l.b16 %v2086
    %v2158 = vunpack.c.l.b16 %v2087
    %v2159 = vunpack.c.l.b16 %v2088
    %v2160 = vunpack.c.l.b16 %v2089
    %v2161 = vunpack.c.l.b16 %v2090
    %v2162 = vunpack.c.l.b16 %v2091
    %v2163 = vunpack.c.l.b16 %v2092
    %v2164 = vunpack.c.l.b16 %v2093
    %v2165 = vunpack.c.l.b16 %v2094
    %v2166 = vunpack.c.l.b16 %v2095
    %v2167 = vunpack.c.l.b16 %v2096
    %v2168 = vunpack.c.l.b16 %v2097
    %v2169 = vunpack.c.l.b16 %v2098
    %v2170 = vunpack.c.l.b16 %v2099
    %v2171 = vunpack.c.l.b16 %v2100
    %v2172 = vunpack.c.l.b16 %v2101
    %v2173 = vpack.c.b16 %v2142, %v2141
    %v2174 = vpack.c.b16 %v2144, %v2143
    %v2175 = vpack.c.b16 %v2146, %v2145
    %v2176 = vpack.c.b16 %v2148, %v2147
    %v2177 = vpack.c.b16 %v2150, %v2149
    %v2178 = vpack.c.b16 %v2152, %v2151
    %v2179 = vpack.c.b16 %v2154, %v2153
    %v2180 = vpack.c.b16 %v2156, %v2155
    %v2181 = vpack.c.b16 %v2158, %v2157
    %v2182 = vpack.c.b16 %v2160, %v2159
    %v2183 = vpack.c.b16 %v2162, %v2161
    %v2184 = vpack.c.b16 %v2164, %v2163
    %v2185 = vpack.c.b16 %v2166, %v2165
    %v2186 = vpack.c.b16 %v2168, %v2167
    %v2187 = vpack.c.b16 %v2170, %v2169
    %v2188 = vpack.c.b16 %v2172, %v2171
    %2205 = vmatprep.subr.bf16.mxu0 0
    %2206 = vmatpush1.bf16.msra.mxu0 %v2173
    %2207 = vmatprep.subr.bf16.mxu0 0
    %2208 = vmatpush1.bf16.msra.mxu0 %v2174
    %2209 = vmatprep.subr.bf16.mxu0 0
    %2210 = vmatpush1.bf16.msra.mxu0 %v2175
    %2211 = vmatprep.subr.bf16.mxu0 0
    %2212 = vmatpush1.bf16.msra.mxu0 %v2176
    %2213 = vmatprep.subr.bf16.mxu0 0
    %2214 = vmatpush1.bf16.msra.mxu0 %v2177
    %2215 = vmatprep.subr.bf16.mxu0 0
    %2216 = vmatpush1.bf16.msra.mxu0 %v2178
    %2217 = vmatprep.subr.bf16.mxu0 0
    %2218 = vmatpush1.bf16.msra.mxu0 %v2179
    %2219 = vmatprep.subr.bf16.mxu0 0
    %2220 = vmatpush1.bf16.msra.mxu0 %v2180
    %2221 = vmatprep.subr.bf16.mxu0 0
    %2222 = vmatpush1.bf16.msra.mxu0 %v2181
    %2223 = vmatprep.subr.bf16.mxu0 0
    %2224 = vmatpush1.bf16.msra.mxu0 %v2182
    %2225 = vmatprep.subr.bf16.mxu0 0
    %2226 = vmatpush1.bf16.msra.mxu0 %v2183
    %2227 = vmatprep.subr.bf16.mxu0 0
    %2228 = vmatpush1.bf16.msra.mxu0 %v2184
    %2229 = vmatprep.subr.bf16.mxu0 0
    %2230 = vmatpush1.bf16.msra.mxu0 %v2185
    %2231 = vmatprep.subr.bf16.mxu0 0
    %2232 = vmatpush1.bf16.msra.mxu0 %v2186
    %2233 = vmatprep.subr.bf16.mxu0 0
    %2234 = vmatpush1.bf16.msra.mxu0 %v2187
    %2235 = vmatprep.subr.bf16.mxu0 0
    %2236 = vmatpush1.bf16.msra.mxu0 %v2188
    %2237 = vmatprep.mubr.bf16.mxu0 %v2067
    %2238 = vmatmul.mubr.bf16.gmra.mrb[0].mxu0 %v2066
    %v2239 = vpop.f32.mrb[0].mxu0
    %v2240 = vadd.f32 %v2107, %v2239
    %v2241 = vpop.f32.mrb[0].mxu0
    %v2242 = vpop.f32.mrb[0].mxu0
    %v2243 = vadd.f32 %v2107, %v2242
    %v2244 = vpop.f32.mrb[0].mxu0
    %2245 = vmatprep.mubr.bf16.mxu0 %v2069
    %2246 = vmatmul.mubr.bf16.gmra.mrb[0].mxu0 %v2068
    %v2247 = vpop.f32.mrb[0].mxu0
    %v2248 = vadd.f32 %v2107, %v2247
    %v2249 = vpop.f32.mrb[0].mxu0
    %v2250 = vpop.f32.mrb[0].mxu0
    %v2251 = vadd.f32 %v2107, %v2250
    %v2252 = vpop.f32.mrb[0].mxu0
    %2253 = vdwg.mxu0
    %v2254 = vadd.f32 %v1753, %v2240
    %v2255 = vadd.f32 %v1754, %v2243
    %v2256 = vadd.f32 %v1755, %v2248
    %v2257 = vadd.f32 %v1756, %v2251
    %2258 = vst [vmem:[#allocation11] sm:$0xff] %v2254
    %2259 = vst [vmem:[#allocation11 + $0x8] sm:$0xff] %v2255
    %2260 = vst [vmem:[#allocation11 + $0x10] sm:$0xff] %v2256
    %2261 = vst [vmem:[#allocation11 + $0x18] sm:$0xff] %v2257
    // Predicated region
    $region74: #{tpu_custom_call.1} parent=1 // pred_check
      _
    $region75: #{tpu_custom_call.1} parent=1 // pred_check_branch
      %2263 = sbr.rel (0) target = $region77
    $region76: #{tpu_custom_call.1} parent=1 // pred_region
      %s2265 = ssub.s32 512, 512
      %2266 = vsyncadd [#allocation4], %s2265
      %s2267 = sshll.u32 [#allocation11], 4
      %s2268 = int_to_ptr.vmem [resolvable:$true] %s2267
      %2273 = dma.vmem_to_hbm [thread:$0]  %s2268, 512, %s13, [#allocation4], 128, 128, 8
    $region77: #{tpu_custom_call.1} parent=1 // pred_fallthru
      _
    // Predicated region
    $region78: #{tpu_custom_call.1} parent=1 // pred_check
      _
    $region79: #{tpu_custom_call.1} parent=1 // pred_check_branch
      %2275 = sbr.rel (0) target = $region81
    $region80: #{tpu_custom_call.1} parent=1 // pred_region
      %2276 = dma.done [#allocation4], 512
    $region81: #{tpu_custom_call.1} parent=1 // pred_fallthru
      _
    %2277 = vsyncpa [#allocation3], 1
    %2278 = vsyncpa [#allocation6], 1
    %2279 = vsyncpa [#allocation9], 1
    %2280 = vsyncpa [#allocation4], 1

</llo_original>
